<compile_context>
chip_gen: v6e
topology: v6e:2x2x1
jax: 0.10.0
libtpu: 0.0.40
codegen_flags: <defaults>
</compile_context>

<pallas_src>
import functools

import jax
import jax.numpy as jnp
from jax import lax
from jax.experimental import pallas as pl
from jax.experimental.pallas import tpu as pltpu

# Fits v7x's 64 MiB physical VMEM with headroom, raises v5e's 16 MiB scoped default.
VMEM_LIMIT_BYTES = 32 * 1024 * 1024


def _compiler_params(dimension_semantics=None):
    return pltpu.CompilerParams(dimension_semantics=dimension_semantics,
                                vmem_limit_bytes=VMEM_LIMIT_BYTES)


def _row_tile(n, target=512):
    """Largest row-tile <= target that divides n and is a multiple of 8 (else n)."""
    if n <= target:
        return n
    for t in range(target, 7, -8):
        if n % t == 0:
            return t
    return n


# ---------------------------------------------------------------------------
# GCN layer math (runs fully inside VMEM at the last grid step of call 1)
# ---------------------------------------------------------------------------
def _gcn_layer(H, A_in, eye, gamma, beta, w_cat, b_cat, *, theta_dim,
               clamp_min, eps, slope):
    # BatchNorm1d, training-mode batch statistics (biased variance), affine.
    mean = jnp.mean(H, axis=0, keepdims=True)
    var = jnp.mean((H - mean) ** 2, axis=0, keepdims=True)
    Hn = (H - mean) * lax.rsqrt(var + eps) * gamma + beta

    # One MXU pass through the fused [theta | out] weight, then slice (at 256,
    # a lane-aligned offset).
    HW = jnp.dot(Hn, w_cat, preferred_element_type=jnp.float32) + b_cat
    Hx = HW[:, :theta_dim]
    Hout = HW[:, theta_dim:]

    # Learned adjacency: sigmoid(Hx Hx^T) (clamped in the big branch).
    sim = jax.nn.sigmoid(lax.dot_general(Hx, Hx, (((1,), (1,)), ((), ())),
                                         preferred_element_type=jnp.float32))
    if clamp_min is not None:
        sim = jnp.maximum(sim, clamp_min)
    A = sim * A_in + eye

    # D^-1/2 A D^-1/2 @ Hout ; D is diagonal so apply it as row/column scalings.
    d = lax.rsqrt(jnp.sum(A, axis=1, keepdims=True))
    out = d * jnp.dot(A, d * Hout, preferred_element_type=jnp.float32)
    return jnp.where(out > 0, out, slope * out)          # LeakyReLU(0.01)


# ---------------------------------------------------------------------------
# 1. Fused superpixel projection + column sums + both GCN branches
# ---------------------------------------------------------------------------
def _project_branch_kernel(q_ref, qs_ref, x_ref,
                           a_ref, as_ref, eyeb_ref, eyes_ref,
                           bg0_g, bg0_b, bg0_w, bg0_wb,
                           bg1_g, bg1_b, bg1_w, bg1_wb,
                           sm0_g, sm0_b, sm0_w, sm0_wb,
                           sm1_g, sm1_b, sm1_w, sm1_wb,
                           h1_ref, h2_ref,
                           acc1, acc2, cs1, cs2, *, eps, slope):
    i = pl.program_id(0)

    @pl.when(i == 0)
    def _init():
        acc1[...] = jnp.zeros_like(acc1)
        acc2[...] = jnp.zeros_like(acc2)
        cs1[...] = jnp.zeros_like(cs1)
        cs2[...] = jnp.zeros_like(cs2)

    # Contract over the pixel (N) axis of both operands: Q_tile^T @ x_tile.
    tn_dims = (((0,), (0,)), ((), ()))
    q = q_ref[...]
    qs = qs_ref[...]
    x_bf = x_ref[...].astype(jnp.bfloat16)
    acc1[...] += lax.dot_general(q.astype(jnp.bfloat16), x_bf, tn_dims,
                                 preferred_element_type=jnp.float32)
    acc2[...] += lax.dot_general(qs.astype(jnp.bfloat16), x_bf, tn_dims,
                                 preferred_element_type=jnp.float32)

    # Column sums of Q / Qsmall (f32, matches the torch normalization precision),
    # folded into the same pass over Q so the wrapper never re-reads Q from HBM.
    ones = jnp.ones((q.shape[0], 8), jnp.float32)
    cs1[...] += lax.dot_general(q, ones, tn_dims, preferred_element_type=jnp.float32)
    cs2[...] += lax.dot_general(qs, ones, tn_dims, preferred_element_type=jnp.float32)

    @pl.when(i == pl.num_programs(0) - 1)
    def _branches():
        # (Q / colsum)^T @ x  ==  (Q^T @ x) row-scaled by 1/colsum.
        H1 = acc1[...] / cs1[...][:, 0:1]
        H2 = acc2[...] / cs2[...][:, 0:1]

        A_big, eye_big = a_ref[...], eyeb_ref[...]
        H1 = _gcn_layer(H1, A_big, eye_big, bg0_g[...], bg0_b[...], bg0_w[...],
                        bg0_wb[...], theta_dim=256, clamp_min=0.03, eps=eps,
                        slope=slope)
        H1 = _gcn_layer(H1, A_big, eye_big, bg1_g[...], bg1_b[...], bg1_w[...],
                        bg1_wb[...], theta_dim=256, clamp_min=0.03, eps=eps,
                        slope=slope)
        h1_ref[...] = H1.astype(h1_ref.dtype)

        A_small, eye_small = as_ref[...], eyes_ref[...]
        H2 = _gcn_layer(H2, A_small, eye_small, sm0_g[...], sm0_b[...], sm0_w[...],
                        sm0_wb[...], theta_dim=256, clamp_min=None, eps=eps,
                        slope=slope)
        H2 = _gcn_layer(H2, A_small, eye_small, sm1_g[...], sm1_b[...], sm1_w[...],
                        sm1_wb[...], theta_dim=256, clamp_min=None, eps=eps,
                        slope=slope)
        h2_ref[...] = H2.astype(h2_ref.dtype)


def project_and_gcn(x_flat, Q, Qs, A, As, eye_big, eye_small,
                    big0, big1, small0, small1):
    n, c = x_flat.shape
    s_big, s_small = Q.shape[1], Qs.shape[1]
    d_out = big1["w_cat"].shape[1] - 256
    tm = _row_tile(n)
    tiled = lambda i: (i, 0)
    full = lambda i: (0, 0)
    fs = lambda arr: pl.BlockSpec(arr.shape, full)     # whole-array VMEM-resident block

    kern = functools.partial(_project_branch_kernel, eps=1e-5, slope=0.01)
    return pl.pallas_call(
        kern,
        out_shape=(jax.ShapeDtypeStruct((s_big, d_out), jnp.bfloat16),
                   jax.ShapeDtypeStruct((s_small, d_out), jnp.bfloat16)),
        grid=(n // tm,),
        in_specs=[pl.BlockSpec((tm, s_big), tiled),
                  pl.BlockSpec((tm, s_small), tiled),
                  pl.BlockSpec((tm, c), tiled),
                  fs(A), fs(As), fs(eye_big), fs(eye_small),
                  fs(big0["gamma"]), fs(big0["beta"]), fs(big0["w_cat"]), fs(big0["b_cat"]),
                  fs(big1["gamma"]), fs(big1["beta"]), fs(big1["w_cat"]), fs(big1["b_cat"]),
                  fs(small0["gamma"]), fs(small0["beta"]), fs(small0["w_cat"]), fs(small0["b_cat"]),
                  fs(small1["gamma"]), fs(small1["beta"]), fs(small1["w_cat"]), fs(small1["b_cat"])],
        out_specs=(pl.BlockSpec((s_big, d_out), full),
                   pl.BlockSpec((s_small, d_out), full)),
        scratch_shapes=[pltpu.VMEM((s_big, c), jnp.float32),
                        pltpu.VMEM((s_small, c), jnp.float32),
                        pltpu.VMEM((s_big, 8), jnp.float32),
                        pltpu.VMEM((s_small, 8), jnp.float32)],
        compiler_params=_compiler_params(("arbitrary",)),
    )(Q, Qs, x_flat, A, As, eye_big, eye_small,
      big0["gamma"], big0["beta"], big0["w_cat"], big0["b_cat"],
      big1["gamma"], big1["beta"], big1["w_cat"], big1["b_cat"],
      small0["gamma"], small0["beta"], small0["w_cat"], small0["b_cat"],
      small1["gamma"], small1["beta"], small1["w_cat"], small1["b_cat"])


# ---------------------------------------------------------------------------
# 2. Fused upsample + merge head (N-tiled, megacore-parallel, lane-dense outputs)
# ---------------------------------------------------------------------------
def _head_kernel(q_ref, qs_ref, y_ref, h1_ref, h2_ref, sig_ref,
                 wsm_ref, bsm_ref, wsl_ref,
                 y_out_ref, loss_ref):
    # Per-pixel upsampling of both branches (bf16 MXU inputs, f32 accumulation).
    gb = jnp.dot(q_ref[...].astype(jnp.bfloat16), h1_ref[...],
                 preferred_element_type=jnp.float32)
    gs = jnp.dot(qs_ref[...].astype(jnp.bfloat16), h2_ref[...],
                 preferred_element_type=jnp.float32)
    yy = y_ref[...]
    s2 = sig_ref[...]                                   # (1, 1), broadcasts

    # sigma2*cat([gb, y]) + (1-sigma2)*cat([gs, y]) == cat([mix, y])
    mix = s2 * gb + (1.0 - s2) * gs
    wsm = wsm_ref[...]                                  # (128, P)
    d_half = gb.shape[1]
    logits = (jnp.dot(mix, wsm[:d_half, :], preferred_element_type=jnp.float32)
              + jnp.dot(yy, wsm[d_half:, :], preferred_element_type=jnp.float32)
              + bsm_ref[...])
    m = jnp.max(logits, axis=-1, keepdims=True)
    e = jnp.exp(logits - m)                             # padded cols: bias -1e30 -> exp == 0
    y_out_ref[...] = e * pl.reciprocal(jnp.sum(e, axis=-1, keepdims=True), approx=True)

    # Softmaxlinear(gb) - Softmaxlinear(gs) == (gb - gs) @ W  (bias cancels exactly).
    diff = jnp.dot(gb - gs, wsl_ref[...], preferred_element_type=jnp.float32)
    loss_ref[...] = diff * diff


def merge_head(Q, Qs, y, H1, H2, sigma2, wsm_p, bsm_p, wsl_p):
    n, s_big = Q.shape
    s_small = Qs.shape[1]
    d_y = y.shape[1]
    p = wsm_p.shape[1]
    tm = _row_tile(n)
    tiled = lambda i: (i, 0)
    full = lambda i: (0, 0)
    return pl.pallas_call(
        _head_kernel,
        out_shape=(jax.ShapeDtypeStruct((n, p), jnp.float32),
                   jax.ShapeDtypeStruct((n, p), jnp.float32)),
        grid=(n // tm,),
        in_specs=[pl.BlockSpec((tm, s_big), tiled),
                  pl.BlockSpec((tm, s_small), tiled),
                  pl.BlockSpec((tm, d_y), tiled),
                  pl.BlockSpec(H1.shape, full),
                  pl.BlockSpec(H2.shape, full),
                  pl.BlockSpec((1, 1), full),
                  pl.BlockSpec(wsm_p.shape, full),
                  pl.BlockSpec((1, p), full),
                  pl.BlockSpec(wsl_p.shape, full)],
        out_specs=(pl.BlockSpec((tm, p), tiled),
                   pl.BlockSpec((tm, p), tiled)),
        compiler_params=_compiler_params(("parallel",)),
    )(Q, Qs, y, H1, H2, sigma2, wsm_p, bsm_p, wsl_p)


# ---------------------------------------------------------------------------
# Full DSR_GCN forward (merge=True; merge=False leaves Y/loss undefined in torch)
# ---------------------------------------------------------------------------
def dsr_gcn_forward(x, y, params):
    h, w, c = x.shape
    n = h * w
    xf = x.reshape(n, c)

    Q, A = params["Q"], params["A"]
    Qs, As = params["Qsmall"], params["Asmall"]
    n_cls = params["wsm"].shape[1]

    eye_big = jnp.eye(A.shape[0], dtype=jnp.float32)
    eye_small = jnp.eye(As.shape[0], dtype=jnp.float32)

    # 1. projection + colsums + both fused GCN branches in ONE N-tiled pass over x/Q
    H1, H2 = project_and_gcn(xf, Q, Qs, A, As, eye_big, eye_small,
                             params["big0"], params["big1"],
                             params["small0"], params["small1"])

    # 2. fused upsample + merge head with lane-dense (128-wide) padded outputs
    p = max(128, ((n_cls + 127) // 128) * 128)
    wsm_p = jnp.zeros((params["wsm"].shape[0], p), jnp.float32).at[:, :n_cls].set(params["wsm"])
    bsm_p = jnp.full((1, p), -1e30, jnp.float32).at[:, :n_cls].set(params["bsm"])
    wsl_p = jnp.zeros((params["wsl"].shape[0], p), jnp.float32).at[:, :n_cls].set(params["wsl"])
    # params["bsl"] is not needed: it cancels in Softmaxlinear(big) - Softmaxlinear(small).

    Y_pad, loss_pad = merge_head(Q, Qs, y, H1, H2, params["sigma2"],
                                 wsm_p, bsm_p, wsl_p)
    return Y_pad[:, :n_cls], loss_pad[:, :n_cls]


# ---------------------------------------------------------------------------
# Deterministic parameter construction
# ---------------------------------------------------------------------------
def _linear(key, fan_in, fan_out):
    kw, kb = jax.random.split(key)
    bound = 1.0 / jnp.sqrt(float(fan_in))
    w = jax.random.uniform(kw, (fan_in, fan_out), jnp.float32, -bound, bound)
    b = jax.random.uniform(kb, (1, fan_out), jnp.float32, -bound, bound)
    return w, b


def _gcn_params(key, d_in, d_out):
    k1, k2 = jax.random.split(key)
    wt, bt = _linear(k1, d_in, 256)      # GCN_liner_theta_1
    wo, bo = _linear(k2, d_in, d_out)    # GCN_liner_out_1
    # fused [theta | out] weight so Hn goes through the MXU once per layer
    return dict(gamma=jnp.ones((1, d_in), jnp.float32),
                beta=jnp.zeros((1, d_in), jnp.float32),
                w_cat=jnp.concatenate([wt, wo], axis=1),
                b_cat=jnp.concatenate([bt, bo], axis=1))


def build_params(key, channel, n, s_big, s_small, n_cls):
    keys = jax.random.split(key, 10)
    Q = jax.random.uniform(keys[0], (n, s_big), jnp.float32, 0.05, 1.0)
    Qs = jax.random.uniform(keys[1], (n, s_small), jnp.float32, 0.05, 1.0)
    A0 = jax.random.uniform(keys[2], (s_big, s_big), jnp.float32, 0.0, 1.0)
    As0 = jax.random.uniform(keys[3], (s_small, s_small), jnp.float32, 0.0, 1.0)
    A = 0.5 * (A0 + A0.T)
    As = 0.5 * (As0 + As0.T)

    wsm, bsm = _linear(keys[8], 128, n_cls)     # Softmax_linear
    wsl, bsl = _linear(keys[9], 64, n_cls)      # Softmaxlinear

    return dict(
        Q=Q, A=A, Qsmall=Qs, Asmall=As,
        big0=_gcn_params(keys[4], channel, 128),
        big1=_gcn_params(keys[5], 128, 64),
        small0=_gcn_params(keys[6], channel, 128),
        small1=_gcn_params(keys[7], 128, 64),
        sigma2=jnp.full((1, 1), 0.5, jnp.float32),
        wsm=wsm, bsm=bsm, wsl=wsl, bsl=bsl,
    )


if __name__ == "__main__":
    key = jax.random.PRNGKey(0)
    h, w, c = 8, 8, 8
    n = h * w
    s_big, s_small, n_cls = 32, 16, 4

    k_x, k_y, k_p = jax.random.split(key, 3)
    x = jax.random.normal(k_x, (h, w, c), jnp.float32)        # H*W*C input
    y = jax.random.normal(k_y, (n, 64), jnp.float32)          # merge features (N, 64)
    params = build_params(k_p, c, n, s_big, s_small, n_cls)

    Y, loss = jax.jit(dsr_gcn_forward)(x, y, params)
    jax.block_until_ready((Y, loss))
    assert Y.shape == (n, n_cls) and loss.shape == (n, n_cls)
    print("KERNEL_OK")
</pallas_src>

<mosaic_0001>
module attributes {stable_mosaic.version = 11 : i64} {
  func.func @_project_branch_kernel(%arg0: i32, %arg1: memref<64x32xf32, #tpu.memory_space<vmem>>, %arg2: memref<64x16xf32, #tpu.memory_space<vmem>>, %arg3: memref<64x8xf32, #tpu.memory_space<vmem>>, %arg4: memref<32x32xf32, #tpu.memory_space<vmem>>, %arg5: memref<16x16xf32, #tpu.memory_space<vmem>>, %arg6: memref<32x32xf32, #tpu.memory_space<vmem>>, %arg7: memref<16x16xf32, #tpu.memory_space<vmem>>, %arg8: memref<1x8xf32, #tpu.memory_space<vmem>>, %arg9: memref<1x8xf32, #tpu.memory_space<vmem>>, %arg10: memref<8x384xf32, #tpu.memory_space<vmem>>, %arg11: memref<1x384xf32, #tpu.memory_space<vmem>>, %arg12: memref<1x128xf32, #tpu.memory_space<vmem>>, %arg13: memref<1x128xf32, #tpu.memory_space<vmem>>, %arg14: memref<128x320xf32, #tpu.memory_space<vmem>>, %arg15: memref<1x320xf32, #tpu.memory_space<vmem>>, %arg16: memref<1x8xf32, #tpu.memory_space<vmem>>, %arg17: memref<1x8xf32, #tpu.memory_space<vmem>>, %arg18: memref<8x384xf32, #tpu.memory_space<vmem>>, %arg19: memref<1x384xf32, #tpu.memory_space<vmem>>, %arg20: memref<1x128xf32, #tpu.memory_space<vmem>>, %arg21: memref<1x128xf32, #tpu.memory_space<vmem>>, %arg22: memref<128x320xf32, #tpu.memory_space<vmem>>, %arg23: memref<1x320xf32, #tpu.memory_space<vmem>>, %arg24: memref<32x64xbf16, #tpu.memory_space<vmem>>, %arg25: memref<16x64xbf16, #tpu.memory_space<vmem>>, %arg26: memref<32x8xf32, #tpu.memory_space<vmem>>, %arg27: memref<16x8xf32, #tpu.memory_space<vmem>>, %arg28: memref<32x8xf32, #tpu.memory_space<vmem>>, %arg29: memref<16x8xf32, #tpu.memory_space<vmem>>) attributes {dimension_semantics = [#tpu.dimension_semantics<arbitrary>], iteration_bounds = array<i64: 1>, scalar_prefetch = 0 : i64, scratch_operands = 4 : i64, tpu.core_type = #tpu.core_type<tc>, window_params = [{transform_indices = @transform_0, window_bounds = array<i64: 64, 32>}, {transform_indices = @transform_1, window_bounds = array<i64: 64, 16>}, {transform_indices = @transform_2, window_bounds = array<i64: 64, 8>}, {pipeline_mode = #tpu.pipeline_mode<synchronous>, transform_indices = @transform_3, window_bounds = array<i64: 32, 32>}, {pipeline_mode = #tpu.pipeline_mode<synchronous>, transform_indices = @transform_4, window_bounds = array<i64: 16, 16>}, {pipeline_mode = #tpu.pipeline_mode<synchronous>, transform_indices = @transform_5, window_bounds = array<i64: 32, 32>}, {pipeline_mode = #tpu.pipeline_mode<synchronous>, transform_indices = @transform_6, window_bounds = array<i64: 16, 16>}, {pipeline_mode = #tpu.pipeline_mode<synchronous>, transform_indices = @transform_7, window_bounds = array<i64: 1, 8>}, {pipeline_mode = #tpu.pipeline_mode<synchronous>, transform_indices = @transform_8, window_bounds = array<i64: 1, 8>}, {pipeline_mode = #tpu.pipeline_mode<synchronous>, transform_indices = @transform_9, window_bounds = array<i64: 8, 384>}, {pipeline_mode = #tpu.pipeline_mode<synchronous>, transform_indices = @transform_10, window_bounds = array<i64: 1, 384>}, {pipeline_mode = #tpu.pipeline_mode<synchronous>, transform_indices = @transform_11, window_bounds = array<i64: 1, 128>}, {pipeline_mode = #tpu.pipeline_mode<synchronous>, transform_indices = @transform_12, window_bounds = array<i64: 1, 128>}, {pipeline_mode = #tpu.pipeline_mode<synchronous>, transform_indices = @transform_13, window_bounds = array<i64: 128, 320>}, {pipeline_mode = #tpu.pipeline_mode<synchronous>, transform_indices = @transform_14, window_bounds = array<i64: 1, 320>}, {pipeline_mode = #tpu.pipeline_mode<synchronous>, transform_indices = @transform_15, window_bounds = array<i64: 1, 8>}, {pipeline_mode = #tpu.pipeline_mode<synchronous>, transform_indices = @transform_16, window_bounds = array<i64: 1, 8>}, {pipeline_mode = #tpu.pipeline_mode<synchronous>, transform_indices = @transform_17, window_bounds = array<i64: 8, 384>}, {pipeline_mode = #tpu.pipeline_mode<synchronous>, transform_indices = @transform_18, window_bounds = array<i64: 1, 384>}, {pipeline_mode = #tpu.pipeline_mode<synchronous>, transform_indices = @transform_19, window_bounds = array<i64: 1, 128>}, {pipeline_mode = #tpu.pipeline_mode<synchronous>, transform_indices = @transform_20, window_bounds = array<i64: 1, 128>}, {pipeline_mode = #tpu.pipeline_mode<synchronous>, transform_indices = @transform_21, window_bounds = array<i64: 128, 320>}, {pipeline_mode = #tpu.pipeline_mode<synchronous>, transform_indices = @transform_22, window_bounds = array<i64: 1, 320>}, {pipeline_mode = #tpu.pipeline_mode<synchronous>, transform_indices = @transform_23, window_bounds = array<i64: 32, 64>}, {pipeline_mode = #tpu.pipeline_mode<synchronous>, transform_indices = @transform_24, window_bounds = array<i64: 16, 64>}]} {
    %c0_i32 = arith.constant 0 : i32
    %0 = arith.cmpi eq, %arg0, %c0_i32 : i32
    %1 = arith.extui %0 : i1 to i32
    %c0_i32_0 = arith.constant 0 : i32
    %2 = arith.cmpi ne, %1, %c0_i32_0 : i32
    scf.if %2 {
      %cst_28 = arith.constant 0.000000e+00 : f32
      %29 = vector.broadcast %cst_28 : f32 to vector<32x8xf32>
      %c0_29 = arith.constant 0 : index
      %c0_30 = arith.constant 0 : index
      %30 = vector.load %arg26[%c0_29, %c0_30] : memref<32x8xf32, #tpu.memory_space<vmem>>, vector<32x8xf32>
      tpu.vector_store %arg26[%c0_29, %c0_30], %29 {strides = array<i32>} : memref<32x8xf32, #tpu.memory_space<vmem>>, vector<32x8xf32>,
      %cst_31 = arith.constant 0.000000e+00 : f32
      %31 = vector.broadcast %cst_31 : f32 to vector<16x8xf32>
      %c0_32 = arith.constant 0 : index
      %c0_33 = arith.constant 0 : index
      %32 = vector.load %arg27[%c0_32, %c0_33] : memref<16x8xf32, #tpu.memory_space<vmem>>, vector<16x8xf32>
      tpu.vector_store %arg27[%c0_32, %c0_33], %31 {strides = array<i32>} : memref<16x8xf32, #tpu.memory_space<vmem>>, vector<16x8xf32>,
      %cst_34 = arith.constant 0.000000e+00 : f32
      %33 = vector.broadcast %cst_34 : f32 to vector<32x8xf32>
      %c0_35 = arith.constant 0 : index
      %c0_36 = arith.constant 0 : index
      %34 = vector.load %arg28[%c0_35, %c0_36] : memref<32x8xf32, #tpu.memory_space<vmem>>, vector<32x8xf32>
      tpu.vector_store %arg28[%c0_35, %c0_36], %33 {strides = array<i32>} : memref<32x8xf32, #tpu.memory_space<vmem>>, vector<32x8xf32>,
      %cst_37 = arith.constant 0.000000e+00 : f32
      %35 = vector.broadcast %cst_37 : f32 to vector<16x8xf32>
      %c0_38 = arith.constant 0 : index
      %c0_39 = arith.constant 0 : index
      %36 = vector.load %arg29[%c0_38, %c0_39] : memref<16x8xf32, #tpu.memory_space<vmem>>, vector<16x8xf32>
      tpu.vector_store %arg29[%c0_38, %c0_39], %35 {strides = array<i32>} : memref<16x8xf32, #tpu.memory_space<vmem>>, vector<16x8xf32>,
    } else {
    }
    %c0 = arith.constant 0 : index
    %c0_1 = arith.constant 0 : index
    %3 = vector.load %arg1[%c0, %c0_1] : memref<64x32xf32, #tpu.memory_space<vmem>>, vector<64x32xf32>
    %c0_2 = arith.constant 0 : index
    %c0_3 = arith.constant 0 : index
    %4 = vector.load %arg2[%c0_2, %c0_3] : memref<64x16xf32, #tpu.memory_space<vmem>>, vector<64x16xf32>
    %c0_4 = arith.constant 0 : index
    %c0_5 = arith.constant 0 : index
    %5 = vector.load %arg3[%c0_4, %c0_5] : memref<64x8xf32, #tpu.memory_space<vmem>>, vector<64x8xf32>
    %6 = arith.truncf %5 : vector<64x8xf32> to vector<64x8xbf16>
    %c0_6 = arith.constant 0 : index
    %c0_7 = arith.constant 0 : index
    %7 = vector.load %arg26[%c0_6, %c0_7] : memref<32x8xf32, #tpu.memory_space<vmem>>, vector<32x8xf32>
    %8 = arith.truncf %3 : vector<64x32xf32> to vector<64x32xbf16>
    %cst = arith.constant dense<0.000000e+00> : vector<32x8xf32>
    %9 = tpu.matmul %8, %6, %cst {dimension_numbers = #tpu.dot_dimension_numbers<[0], [0], [1], [1], [0, 1, 1, 1], [], []>} : vector<64x32xbf16>, vector<64x8xbf16>, vector<32x8xf32> -> vector<32x8xf32>
    %10 = arith.addf %7, %9 : vector<32x8xf32>
    %c0_8 = arith.constant 0 : index
    %c0_9 = arith.constant 0 : index
    %11 = vector.load %arg26[%c0_8, %c0_9] : memref<32x8xf32, #tpu.memory_space<vmem>>, vector<32x8xf32>
    tpu.vector_store %arg26[%c0_8, %c0_9], %10 {strides = array<i32>} : memref<32x8xf32, #tpu.memory_space<vmem>>, vector<32x8xf32>,
    %c0_10 = arith.constant 0 : index
    %c0_11 = arith.constant 0 : index
    %12 = vector.load %arg27[%c0_10, %c0_11] : memref<16x8xf32, #tpu.memory_space<vmem>>, vector<16x8xf32>
    %13 = arith.truncf %4 : vector<64x16xf32> to vector<64x16xbf16>
    %cst_12 = arith.constant dense<0.000000e+00> : vector<16x8xf32>
    %14 = tpu.matmul %13, %6, %cst_12 {dimension_numbers = #tpu.dot_dimension_numbers<[0], [0], [1], [1], [0, 1, 1, 1], [], []>} : vector<64x16xbf16>, vector<64x8xbf16>, vector<16x8xf32> -> vector<16x8xf32>
    %15 = arith.addf %12, %14 : vector<16x8xf32>
    %c0_13 = arith.constant 0 : index
    %c0_14 = arith.constant 0 : index
    %16 = vector.load %arg27[%c0_13, %c0_14] : memref<16x8xf32, #tpu.memory_space<vmem>>, vector<16x8xf32>
    tpu.vector_store %arg27[%c0_13, %c0_14], %15 {strides = array<i32>} : memref<16x8xf32, #tpu.memory_space<vmem>>, vector<16x8xf32>,
    %cst_15 = arith.constant 1.000000e+00 : f32
    %17 = vector.broadcast %cst_15 : f32 to vector<64x8xf32>
    %c0_16 = arith.constant 0 : index
    %c0_17 = arith.constant 0 : index
    %18 = vector.load %arg28[%c0_16, %c0_17] : memref<32x8xf32, #tpu.memory_space<vmem>>, vector<32x8xf32>
    %cst_18 = arith.constant dense<0.000000e+00> : vector<32x8xf32>
    %19 = tpu.matmul %3, %17, %cst_18 {dimension_numbers = #tpu.dot_dimension_numbers<[0], [0], [1], [1], [0, 1, 1, 1], [], []>} : vector<64x32xf32>, vector<64x8xf32>, vector<32x8xf32> -> vector<32x8xf32>
    %20 = arith.addf %18, %19 : vector<32x8xf32>
    %c0_19 = arith.constant 0 : index
    %c0_20 = arith.constant 0 : index
    %21 = vector.load %arg28[%c0_19, %c0_20] : memref<32x8xf32, #tpu.memory_space<vmem>>, vector<32x8xf32>
    tpu.vector_store %arg28[%c0_19, %c0_20], %20 {strides = array<i32>} : memref<32x8xf32, #tpu.memory_space<vmem>>, vector<32x8xf32>,
    %c0_21 = arith.constant 0 : index
    %c0_22 = arith.constant 0 : index
    %22 = vector.load %arg29[%c0_21, %c0_22] : memref<16x8xf32, #tpu.memory_space<vmem>>, vector<16x8xf32>
    %cst_23 = arith.constant dense<0.000000e+00> : vector<16x8xf32>
    %23 = tpu.matmul %4, %17, %cst_23 {dimension_numbers = #tpu.dot_dimension_numbers<[0], [0], [1], [1], [0, 1, 1, 1], [], []>} : vector<64x16xf32>, vector<64x8xf32>, vector<16x8xf32> -> vector<16x8xf32>
    %24 = arith.addf %22, %23 : vector<16x8xf32>
    %c0_24 = arith.constant 0 : index
    %c0_25 = arith.constant 0 : index
    %25 = vector.load %arg29[%c0_24, %c0_25] : memref<16x8xf32, #tpu.memory_space<vmem>>, vector<16x8xf32>
    tpu.vector_store %arg29[%c0_24, %c0_25], %24 {strides = array<i32>} : memref<16x8xf32, #tpu.memory_space<vmem>>, vector<16x8xf32>,
    %c0_i32_26 = arith.constant 0 : i32
    %26 = arith.cmpi eq, %arg0, %c0_i32_26 : i32
    %27 = arith.extui %26 : i1 to i32
    %c0_i32_27 = arith.constant 0 : i32
    %28 = arith.cmpi ne, %27, %c0_i32_27 : i32
    scf.if %28 {
      %c0_28 = arith.constant 0 : index
      %c0_29 = arith.constant 0 : index
      %29 = vector.load %arg26[%c0_28, %c0_29] : memref<32x8xf32, #tpu.memory_space<vmem>>, vector<32x8xf32>
      %c0_30 = arith.constant 0 : index
      %c0_31 = arith.constant 0 : index
      %30 = vector.load %arg28[%c0_30, %c0_31] : memref<32x8xf32, #tpu.memory_space<vmem>>, vector<32x8xf32>
      %31 = vector.extract_strided_slice %30 {offsets = [0, 0], sizes = [32, 1], strides = [1, 1]} : vector<32x8xf32> to vector<32x1xf32>
      %32 = vector.broadcast %31 : vector<32x1xf32> to vector<32x8xf32>
      %33 = arith.divf %29, %32 : vector<32x8xf32>
      %c0_32 = arith.constant 0 : index
      %c0_33 = arith.constant 0 : index
      %34 = vector.load %arg27[%c0_32, %c0_33] : memref<16x8xf32, #tpu.memory_space<vmem>>, vector<16x8xf32>
      %c0_34 = arith.constant 0 : index
      %c0_35 = arith.constant 0 : index
      %35 = vector.load %arg29[%c0_34, %c0_35] : memref<16x8xf32, #tpu.memory_space<vmem>>, vector<16x8xf32>
      %36 = vector.extract_strided_slice %35 {offsets = [0, 0], sizes = [16, 1], strides = [1, 1]} : vector<16x8xf32> to vector<16x1xf32>
      %37 = vector.broadcast %36 : vector<16x1xf32> to vector<16x8xf32>
      %38 = arith.divf %34, %37 : vector<16x8xf32>
      %c0_36 = arith.constant 0 : index
      %c0_37 = arith.constant 0 : index
      %39 = vector.load %arg4[%c0_36, %c0_37] : memref<32x32xf32, #tpu.memory_space<vmem>>, vector<32x32xf32>
      %c0_38 = arith.constant 0 : index
      %c0_39 = arith.constant 0 : index
      %40 = vector.load %arg6[%c0_38, %c0_39] : memref<32x32xf32, #tpu.memory_space<vmem>>, vector<32x32xf32>
      %c0_40 = arith.constant 0 : index
      %c0_41 = arith.constant 0 : index
      %41 = vector.load %arg8[%c0_40, %c0_41] : memref<1x8xf32, #tpu.memory_space<vmem>>, vector<1x8xf32>
      %c0_42 = arith.constant 0 : index
      %c0_43 = arith.constant 0 : index
      %42 = vector.load %arg9[%c0_42, %c0_43] : memref<1x8xf32, #tpu.memory_space<vmem>>, vector<1x8xf32>
      %c0_44 = arith.constant 0 : index
      %c0_45 = arith.constant 0 : index
      %43 = vector.load %arg10[%c0_44, %c0_45] : memref<8x384xf32, #tpu.memory_space<vmem>>, vector<8x384xf32>
      %c0_46 = arith.constant 0 : index
      %c0_47 = arith.constant 0 : index
      %44 = vector.load %arg11[%c0_46, %c0_47] : memref<1x384xf32, #tpu.memory_space<vmem>>, vector<1x384xf32>
      %cst_48 = arith.constant dense<0.000000e+00> : vector<8xf32>
      %45 = vector.multi_reduction <add>, %33, %cst_48 [0] : vector<32x8xf32> to vector<8xf32>
      %46 = vector.shape_cast %45 : vector<8xf32> to vector<1x8xf32>
      %cst_49 = arith.constant 3.200000e+01 : f32
      %47 = vector.broadcast %cst_49 : f32 to vector<1x8xf32>
      %48 = arith.divf %46, %47 : vector<1x8xf32>
      %49 = vector.broadcast %48 : vector<1x8xf32> to vector<32x8xf32>
      %50 = arith.subf %33, %49 : vector<32x8xf32>
      %51 = arith.mulf %50, %50 : vector<32x8xf32>
      %cst_50 = arith.constant dense<0.000000e+00> : vector<8xf32>
      %52 = vector.multi_reduction <add>, %51, %cst_50 [0] : vector<32x8xf32> to vector<8xf32>
      %53 = vector.shape_cast %52 : vector<8xf32> to vector<1x8xf32>
      %cst_51 = arith.constant 3.200000e+01 : f32
      %54 = vector.broadcast %cst_51 : f32 to vector<1x8xf32>
      %55 = arith.divf %53, %54 : vector<1x8xf32>
      %56 = vector.broadcast %48 : vector<1x8xf32> to vector<32x8xf32>
      %57 = arith.subf %33, %56 : vector<32x8xf32>
      %cst_52 = arith.constant 9.99999974E-6 : f32
      %58 = vector.broadcast %cst_52 : f32 to vector<1x8xf32>
      %59 = arith.addf %55, %58 : vector<1x8xf32>
      %60 = math.rsqrt %59 : vector<1x8xf32>
      %61 = vector.broadcast %60 : vector<1x8xf32> to vector<32x8xf32>
      %62 = arith.mulf %57, %61 : vector<32x8xf32>
      %63 = vector.broadcast %41 : vector<1x8xf32> to vector<32x8xf32>
      %64 = arith.mulf %62, %63 : vector<32x8xf32>
      %65 = vector.broadcast %42 : vector<1x8xf32> to vector<32x8xf32>
      %66 = arith.addf %64, %65 : vector<32x8xf32>
      %cst_53 = arith.constant dense<0.000000e+00> : vector<32x384xf32>
      %67 = tpu.matmul %66, %43, %cst_53 {dimension_numbers = #tpu.dot_dimension_numbers<[1], [0], [0], [1], [0, 0, 1, 1], [], []>} : vector<32x8xf32>, vector<8x384xf32>, vector<32x384xf32> -> vector<32x384xf32>
      %68 = vector.broadcast %44 : vector<1x384xf32> to vector<32x384xf32>
      %69 = arith.addf %67, %68 : vector<32x384xf32>
      %70 = vector.extract_strided_slice %69 {offsets = [0, 0], sizes = [32, 256], strides = [1, 1]} : vector<32x384xf32> to vector<32x256xf32>
      %71 = vector.extract_strided_slice %69 {offsets = [0, 256], sizes = [32, 128], strides = [1, 1]} : vector<32x384xf32> to vector<32x128xf32>
      %cst_54 = arith.constant dense<0.000000e+00> : vector<32x32xf32>
      %72 = tpu.matmul %70, %70, %cst_54 {dimension_numbers = #tpu.dot_dimension_numbers<[1], [1], [0], [0], [0, 0, 1, 0], [], []>} : vector<32x256xf32>, vector<32x256xf32>, vector<32x32xf32> -> vector<32x32xf32>
      %73 = arith.negf %72 : vector<32x32xf32>
      %74 = math.exp %73 : vector<32x32xf32>
      %cst_55 = arith.constant 1.000000e+00 : f32
      %75 = vector.broadcast %cst_55 : f32 to vector<32x32xf32>
      %76 = arith.addf %75, %74 : vector<32x32xf32>
      %77 = arith.divf %75, %76 : vector<32x32xf32>
      %cst_56 = arith.constant 3.000000e-02 : f32
      %78 = vector.broadcast %cst_56 : f32 to vector<32x32xf32>
      %79 = arith.maximumf %77, %78 : vector<32x32xf32>
      %80 = arith.mulf %79, %39 : vector<32x32xf32>
      %81 = arith.addf %80, %40 : vector<32x32xf32>
      %cst_57 = arith.constant dense<0.000000e+00> : vector<32xf32>
      %82 = vector.multi_reduction <add>, %81, %cst_57 [1] : vector<32x32xf32> to vector<32xf32>
      %83 = vector.shape_cast %82 : vector<32xf32> to vector<32x1xf32>
      %84 = math.rsqrt %83 : vector<32x1xf32>
      %85 = vector.broadcast %84 : vector<32x1xf32> to vector<32x128xf32>
      %86 = arith.mulf %85, %71 : vector<32x128xf32>
      %cst_58 = arith.constant dense<0.000000e+00> : vector<32x128xf32>
      %87 = tpu.matmul %81, %86, %cst_58 {dimension_numbers = #tpu.dot_dimension_numbers<[1], [0], [0], [1], [0, 0, 1, 1], [], []>} : vector<32x32xf32>, vector<32x128xf32>, vector<32x128xf32> -> vector<32x128xf32>
      %88 = vector.broadcast %84 : vector<32x1xf32> to vector<32x128xf32>
      %89 = arith.mulf %88, %87 : vector<32x128xf32>
      %cst_59 = arith.constant 0.000000e+00 : f32
      %90 = vector.broadcast %cst_59 : f32 to vector<32x128xf32>
      %91 = arith.cmpf ogt, %89, %90 : vector<32x128xf32>
      %cst_60 = arith.constant 0.00999999977 : f32
      %92 = vector.broadcast %cst_60 : f32 to vector<32x128xf32>
      %93 = arith.mulf %92, %89 : vector<32x128xf32>
      %94 = arith.select %91, %89, %93 : vector<32x128xi1>, vector<32x128xf32>
      %c0_61 = arith.constant 0 : index
      %c0_62 = arith.constant 0 : index
      %95 = vector.load %arg12[%c0_61, %c0_62] : memref<1x128xf32, #tpu.memory_space<vmem>>, vector<1x128xf32>
      %c0_63 = arith.constant 0 : index
      %c0_64 = arith.constant 0 : index
      %96 = vector.load %arg13[%c0_63, %c0_64] : memref<1x128xf32, #tpu.memory_space<vmem>>, vector<1x128xf32>
      %c0_65 = arith.constant 0 : index
      %c0_66 = arith.constant 0 : index
      %97 = vector.load %arg14[%c0_65, %c0_66] : memref<128x320xf32, #tpu.memory_space<vmem>>, vector<128x320xf32>
      %c0_67 = arith.constant 0 : index
      %c0_68 = arith.constant 0 : index
      %98 = vector.load %arg15[%c0_67, %c0_68] : memref<1x320xf32, #tpu.memory_space<vmem>>, vector<1x320xf32>
      %cst_69 = arith.constant dense<0.000000e+00> : vector<128xf32>
      %99 = vector.multi_reduction <add>, %94, %cst_69 [0] : vector<32x128xf32> to vector<128xf32>
      %100 = vector.shape_cast %99 : vector<128xf32> to vector<1x128xf32>
      %cst_70 = arith.constant 3.200000e+01 : f32
      %101 = vector.broadcast %cst_70 : f32 to vector<1x128xf32>
      %102 = arith.divf %100, %101 : vector<1x128xf32>
      %103 = vector.broadcast %102 : vector<1x128xf32> to vector<32x128xf32>
      %104 = arith.subf %94, %103 : vector<32x128xf32>
      %105 = arith.mulf %104, %104 : vector<32x128xf32>
      %cst_71 = arith.constant dense<0.000000e+00> : vector<128xf32>
      %106 = vector.multi_reduction <add>, %105, %cst_71 [0] : vector<32x128xf32> to vector<128xf32>
      %107 = vector.shape_cast %106 : vector<128xf32> to vector<1x128xf32>
      %cst_72 = arith.constant 3.200000e+01 : f32
      %108 = vector.broadcast %cst_72 : f32 to vector<1x128xf32>
      %109 = arith.divf %107, %108 : vector<1x128xf32>
      %110 = vector.broadcast %102 : vector<1x128xf32> to vector<32x128xf32>
      %111 = arith.subf %94, %110 : vector<32x128xf32>
      %cst_73 = arith.constant 9.99999974E-6 : f32
      %112 = vector.broadcast %cst_73 : f32 to vector<1x128xf32>
      %113 = arith.addf %109, %112 : vector<1x128xf32>
      %114 = math.rsqrt %113 : vector<1x128xf32>
      %115 = vector.broadcast %114 : vector<1x128xf32> to vector<32x128xf32>
      %116 = arith.mulf %111, %115 : vector<32x128xf32>
      %117 = vector.broadcast %95 : vector<1x128xf32> to vector<32x128xf32>
      %118 = arith.mulf %116, %117 : vector<32x128xf32>
      %119 = vector.broadcast %96 : vector<1x128xf32> to vector<32x128xf32>
      %120 = arith.addf %118, %119 : vector<32x128xf32>
      %cst_74 = arith.constant dense<0.000000e+00> : vector<32x320xf32>
      %121 = tpu.matmul %120, %97, %cst_74 {dimension_numbers = #tpu.dot_dimension_numbers<[1], [0], [0], [1], [0, 0, 1, 1], [], []>} : vector<32x128xf32>, vector<128x320xf32>, vector<32x320xf32> -> vector<32x320xf32>
      %122 = vector.broadcast %98 : vector<1x320xf32> to vector<32x320xf32>
      %123 = arith.addf %121, %122 : vector<32x320xf32>
      %124 = vector.extract_strided_slice %123 {offsets = [0, 0], sizes = [32, 256], strides = [1, 1]} : vector<32x320xf32> to vector<32x256xf32>
      %125 = vector.extract_strided_slice %123 {offsets = [0, 256], sizes = [32, 64], strides = [1, 1]} : vector<32x320xf32> to vector<32x64xf32>
      %cst_75 = arith.constant dense<0.000000e+00> : vector<32x32xf32>
      %126 = tpu.matmul %124, %124, %cst_75 {dimension_numbers = #tpu.dot_dimension_numbers<[1], [1], [0], [0], [0, 0, 1, 0], [], []>} : vector<32x256xf32>, vector<32x256xf32>, vector<32x32xf32> -> vector<32x32xf32>
      %127 = arith.negf %126 : vector<32x32xf32>
      %128 = math.exp %127 : vector<32x32xf32>
      %cst_76 = arith.constant 1.000000e+00 : f32
      %129 = vector.broadcast %cst_76 : f32 to vector<32x32xf32>
      %130 = arith.addf %129, %128 : vector<32x32xf32>
      %131 = arith.divf %129, %130 : vector<32x32xf32>
      %cst_77 = arith.constant 3.000000e-02 : f32
      %132 = vector.broadcast %cst_77 : f32 to vector<32x32xf32>
      %133 = arith.maximumf %131, %132 : vector<32x32xf32>
      %134 = arith.mulf %133, %39 : vector<32x32xf32>
      %135 = arith.addf %134, %40 : vector<32x32xf32>
      %cst_78 = arith.constant dense<0.000000e+00> : vector<32xf32>
      %136 = vector.multi_reduction <add>, %135, %cst_78 [1] : vector<32x32xf32> to vector<32xf32>
      %137 = vector.shape_cast %136 : vector<32xf32> to vector<32x1xf32>
      %138 = math.rsqrt %137 : vector<32x1xf32>
      %139 = vector.broadcast %138 : vector<32x1xf32> to vector<32x64xf32>
      %140 = arith.mulf %139, %125 : vector<32x64xf32>
      %cst_79 = arith.constant dense<0.000000e+00> : vector<32x64xf32>
      %141 = tpu.matmul %135, %140, %cst_79 {dimension_numbers = #tpu.dot_dimension_numbers<[1], [0], [0], [1], [0, 0, 1, 1], [], []>} : vector<32x32xf32>, vector<32x64xf32>, vector<32x64xf32> -> vector<32x64xf32>
      %142 = vector.broadcast %138 : vector<32x1xf32> to vector<32x64xf32>
      %143 = arith.mulf %142, %141 : vector<32x64xf32>
      %cst_80 = arith.constant 0.000000e+00 : f32
      %144 = vector.broadcast %cst_80 : f32 to vector<32x64xf32>
      %145 = arith.cmpf ogt, %143, %144 : vector<32x64xf32>
      %cst_81 = arith.constant 0.00999999977 : f32
      %146 = vector.broadcast %cst_81 : f32 to vector<32x64xf32>
      %147 = arith.mulf %146, %143 : vector<32x64xf32>
      %148 = arith.select %145, %143, %147 : vector<32x64xi1>, vector<32x64xf32>
      %149 = arith.truncf %148 : vector<32x64xf32> to vector<32x64xbf16>
      %c0_82 = arith.constant 0 : index
      %c0_83 = arith.constant 0 : index
      %150 = vector.load %arg24[%c0_82, %c0_83] : memref<32x64xbf16, #tpu.memory_space<vmem>>, vector<32x64xbf16>
      tpu.vector_store %arg24[%c0_82, %c0_83], %149 {strides = array<i32>} : memref<32x64xbf16, #tpu.memory_space<vmem>>, vector<32x64xbf16>,
      %c0_84 = arith.constant 0 : index
      %c0_85 = arith.constant 0 : index
      %151 = vector.load %arg5[%c0_84, %c0_85] : memref<16x16xf32, #tpu.memory_space<vmem>>, vector<16x16xf32>
      %c0_86 = arith.constant 0 : index
      %c0_87 = arith.constant 0 : index
      %152 = vector.load %arg7[%c0_86, %c0_87] : memref<16x16xf32, #tpu.memory_space<vmem>>, vector<16x16xf32>
      %c0_88 = arith.constant 0 : index
      %c0_89 = arith.constant 0 : index
      %153 = vector.load %arg16[%c0_88, %c0_89] : memref<1x8xf32, #tpu.memory_space<vmem>>, vector<1x8xf32>
      %c0_90 = arith.constant 0 : index
      %c0_91 = arith.constant 0 : index
      %154 = vector.load %arg17[%c0_90, %c0_91] : memref<1x8xf32, #tpu.memory_space<vmem>>, vector<1x8xf32>
      %c0_92 = arith.constant 0 : index
      %c0_93 = arith.constant 0 : index
      %155 = vector.load %arg18[%c0_92, %c0_93] : memref<8x384xf32, #tpu.memory_space<vmem>>, vector<8x384xf32>
      %c0_94 = arith.constant 0 : index
      %c0_95 = arith.constant 0 : index
      %156 = vector.load %arg19[%c0_94, %c0_95] : memref<1x384xf32, #tpu.memory_space<vmem>>, vector<1x384xf32>
      %cst_96 = arith.constant dense<0.000000e+00> : vector<8xf32>
      %157 = vector.multi_reduction <add>, %38, %cst_96 [0] : vector<16x8xf32> to vector<8xf32>
      %158 = vector.shape_cast %157 : vector<8xf32> to vector<1x8xf32>
      %cst_97 = arith.constant 1.600000e+01 : f32
      %159 = vector.broadcast %cst_97 : f32 to vector<1x8xf32>
      %160 = arith.divf %158, %159 : vector<1x8xf32>
      %161 = vector.broadcast %160 : vector<1x8xf32> to vector<16x8xf32>
      %162 = arith.subf %38, %161 : vector<16x8xf32>
      %163 = arith.mulf %162, %162 : vector<16x8xf32>
      %cst_98 = arith.constant dense<0.000000e+00> : vector<8xf32>
      %164 = vector.multi_reduction <add>, %163, %cst_98 [0] : vector<16x8xf32> to vector<8xf32>
      %165 = vector.shape_cast %164 : vector<8xf32> to vector<1x8xf32>
      %cst_99 = arith.constant 1.600000e+01 : f32
      %166 = vector.broadcast %cst_99 : f32 to vector<1x8xf32>
      %167 = arith.divf %165, %166 : vector<1x8xf32>
      %168 = vector.broadcast %160 : vector<1x8xf32> to vector<16x8xf32>
      %169 = arith.subf %38, %168 : vector<16x8xf32>
      %cst_100 = arith.constant 9.99999974E-6 : f32
      %170 = vector.broadcast %cst_100 : f32 to vector<1x8xf32>
      %171 = arith.addf %167, %170 : vector<1x8xf32>
      %172 = math.rsqrt %171 : vector<1x8xf32>
      %173 = vector.broadcast %172 : vector<1x8xf32> to vector<16x8xf32>
      %174 = arith.mulf %169, %173 : vector<16x8xf32>
      %175 = vector.broadcast %153 : vector<1x8xf32> to vector<16x8xf32>
      %176 = arith.mulf %174, %175 : vector<16x8xf32>
      %177 = vector.broadcast %154 : vector<1x8xf32> to vector<16x8xf32>
      %178 = arith.addf %176, %177 : vector<16x8xf32>
      %cst_101 = arith.constant dense<0.000000e+00> : vector<16x384xf32>
      %179 = tpu.matmul %178, %155, %cst_101 {dimension_numbers = #tpu.dot_dimension_numbers<[1], [0], [0], [1], [0, 0, 1, 1], [], []>} : vector<16x8xf32>, vector<8x384xf32>, vector<16x384xf32> -> vector<16x384xf32>
      %180 = vector.broadcast %156 : vector<1x384xf32> to vector<16x384xf32>
      %181 = arith.addf %179, %180 : vector<16x384xf32>
      %182 = vector.extract_strided_slice %181 {offsets = [0, 0], sizes = [16, 256], strides = [1, 1]} : vector<16x384xf32> to vector<16x256xf32>
      %183 = vector.extract_strided_slice %181 {offsets = [0, 256], sizes = [16, 128], strides = [1, 1]} : vector<16x384xf32> to vector<16x128xf32>
      %cst_102 = arith.constant dense<0.000000e+00> : vector<16x16xf32>
      %184 = tpu.matmul %182, %182, %cst_102 {dimension_numbers = #tpu.dot_dimension_numbers<[1], [1], [0], [0], [0, 0, 1, 0], [], []>} : vector<16x256xf32>, vector<16x256xf32>, vector<16x16xf32> -> vector<16x16xf32>
      %185 = arith.negf %184 : vector<16x16xf32>
      %186 = math.exp %185 : vector<16x16xf32>
      %cst_103 = arith.constant 1.000000e+00 : f32
      %187 = vector.broadcast %cst_103 : f32 to vector<16x16xf32>
      %188 = arith.addf %187, %186 : vector<16x16xf32>
      %189 = arith.divf %187, %188 : vector<16x16xf32>
      %190 = arith.mulf %189, %151 : vector<16x16xf32>
      %191 = arith.addf %190, %152 : vector<16x16xf32>
      %cst_104 = arith.constant dense<0.000000e+00> : vector<16xf32>
      %192 = vector.multi_reduction <add>, %191, %cst_104 [1] : vector<16x16xf32> to vector<16xf32>
      %193 = vector.shape_cast %192 : vector<16xf32> to vector<16x1xf32>
      %194 = math.rsqrt %193 : vector<16x1xf32>
      %195 = vector.broadcast %194 : vector<16x1xf32> to vector<16x128xf32>
      %196 = arith.mulf %195, %183 : vector<16x128xf32>
      %cst_105 = arith.constant dense<0.000000e+00> : vector<16x128xf32>
      %197 = tpu.matmul %191, %196, %cst_105 {dimension_numbers = #tpu.dot_dimension_numbers<[1], [0], [0], [1], [0, 0, 1, 1], [], []>} : vector<16x16xf32>, vector<16x128xf32>, vector<16x128xf32> -> vector<16x128xf32>
      %198 = vector.broadcast %194 : vector<16x1xf32> to vector<16x128xf32>
      %199 = arith.mulf %198, %197 : vector<16x128xf32>
      %cst_106 = arith.constant 0.000000e+00 : f32
      %200 = vector.broadcast %cst_106 : f32 to vector<16x128xf32>
      %201 = arith.cmpf ogt, %199, %200 : vector<16x128xf32>
      %cst_107 = arith.constant 0.00999999977 : f32
      %202 = vector.broadcast %cst_107 : f32 to vector<16x128xf32>
      %203 = arith.mulf %202, %199 : vector<16x128xf32>
      %204 = arith.select %201, %199, %203 : vector<16x128xi1>, vector<16x128xf32>
      %c0_108 = arith.constant 0 : index
      %c0_109 = arith.constant 0 : index
      %205 = vector.load %arg20[%c0_108, %c0_109] : memref<1x128xf32, #tpu.memory_space<vmem>>, vector<1x128xf32>
      %c0_110 = arith.constant 0 : index
      %c0_111 = arith.constant 0 : index
      %206 = vector.load %arg21[%c0_110, %c0_111] : memref<1x128xf32, #tpu.memory_space<vmem>>, vector<1x128xf32>
      %c0_112 = arith.constant 0 : index
      %c0_113 = arith.constant 0 : index
      %207 = vector.load %arg22[%c0_112, %c0_113] : memref<128x320xf32, #tpu.memory_space<vmem>>, vector<128x320xf32>
      %c0_114 = arith.constant 0 : index
      %c0_115 = arith.constant 0 : index
      %208 = vector.load %arg23[%c0_114, %c0_115] : memref<1x320xf32, #tpu.memory_space<vmem>>, vector<1x320xf32>
      %cst_116 = arith.constant dense<0.000000e+00> : vector<128xf32>
      %209 = vector.multi_reduction <add>, %204, %cst_116 [0] : vector<16x128xf32> to vector<128xf32>
      %210 = vector.shape_cast %209 : vector<128xf32> to vector<1x128xf32>
      %cst_117 = arith.constant 1.600000e+01 : f32
      %211 = vector.broadcast %cst_117 : f32 to vector<1x128xf32>
      %212 = arith.divf %210, %211 : vector<1x128xf32>
      %213 = vector.broadcast %212 : vector<1x128xf32> to vector<16x128xf32>
      %214 = arith.subf %204, %213 : vector<16x128xf32>
      %215 = arith.mulf %214, %214 : vector<16x128xf32>
      %cst_118 = arith.constant dense<0.000000e+00> : vector<128xf32>
      %216 = vector.multi_reduction <add>, %215, %cst_118 [0] : vector<16x128xf32> to vector<128xf32>
      %217 = vector.shape_cast %216 : vector<128xf32> to vector<1x128xf32>
      %cst_119 = arith.constant 1.600000e+01 : f32
      %218 = vector.broadcast %cst_119 : f32 to vector<1x128xf32>
      %219 = arith.divf %217, %218 : vector<1x128xf32>
      %220 = vector.broadcast %212 : vector<1x128xf32> to vector<16x128xf32>
      %221 = arith.subf %204, %220 : vector<16x128xf32>
      %cst_120 = arith.constant 9.99999974E-6 : f32
      %222 = vector.broadcast %cst_120 : f32 to vector<1x128xf32>
      %223 = arith.addf %219, %222 : vector<1x128xf32>
      %224 = math.rsqrt %223 : vector<1x128xf32>
      %225 = vector.broadcast %224 : vector<1x128xf32> to vector<16x128xf32>
      %226 = arith.mulf %221, %225 : vector<16x128xf32>
      %227 = vector.broadcast %205 : vector<1x128xf32> to vector<16x128xf32>
      %228 = arith.mulf %226, %227 : vector<16x128xf32>
      %229 = vector.broadcast %206 : vector<1x128xf32> to vector<16x128xf32>
      %230 = arith.addf %228, %229 : vector<16x128xf32>
      %cst_121 = arith.constant dense<0.000000e+00> : vector<16x320xf32>
      %231 = tpu.matmul %230, %207, %cst_121 {dimension_numbers = #tpu.dot_dimension_numbers<[1], [0], [0], [1], [0, 0, 1, 1], [], []>} : vector<16x128xf32>, vector<128x320xf32>, vector<16x320xf32> -> vector<16x320xf32>
      %232 = vector.broadcast %208 : vector<1x320xf32> to vector<16x320xf32>
      %233 = arith.addf %231, %232 : vector<16x320xf32>
      %234 = vector.extract_strided_slice %233 {offsets = [0, 0], sizes = [16, 256], strides = [1, 1]} : vector<16x320xf32> to vector<16x256xf32>
      %235 = vector.extract_strided_slice %233 {offsets = [0, 256], sizes = [16, 64], strides = [1, 1]} : vector<16x320xf32> to vector<16x64xf32>
      %cst_122 = arith.constant dense<0.000000e+00> : vector<16x16xf32>
      %236 = tpu.matmul %234, %234, %cst_122 {dimension_numbers = #tpu.dot_dimension_numbers<[1], [1], [0], [0], [0, 0, 1, 0], [], []>} : vector<16x256xf32>, vector<16x256xf32>, vector<16x16xf32> -> vector<16x16xf32>
      %237 = arith.negf %236 : vector<16x16xf32>
      %238 = math.exp %237 : vector<16x16xf32>
      %cst_123 = arith.constant 1.000000e+00 : f32
      %239 = vector.broadcast %cst_123 : f32 to vector<16x16xf32>
      %240 = arith.addf %239, %238 : vector<16x16xf32>
      %241 = arith.divf %239, %240 : vector<16x16xf32>
      %242 = arith.mulf %241, %151 : vector<16x16xf32>
      %243 = arith.addf %242, %152 : vector<16x16xf32>
      %cst_124 = arith.constant dense<0.000000e+00> : vector<16xf32>
      %244 = vector.multi_reduction <add>, %243, %cst_124 [1] : vector<16x16xf32> to vector<16xf32>
      %245 = vector.shape_cast %244 : vector<16xf32> to vector<16x1xf32>
      %246 = math.rsqrt %245 : vector<16x1xf32>
      %247 = vector.broadcast %246 : vector<16x1xf32> to vector<16x64xf32>
      %248 = arith.mulf %247, %235 : vector<16x64xf32>
      %cst_125 = arith.constant dense<0.000000e+00> : vector<16x64xf32>
      %249 = tpu.matmul %243, %248, %cst_125 {dimension_numbers = #tpu.dot_dimension_numbers<[1], [0], [0], [1], [0, 0, 1, 1], [], []>} : vector<16x16xf32>, vector<16x64xf32>, vector<16x64xf32> -> vector<16x64xf32>
      %250 = vector.broadcast %246 : vector<16x1xf32> to vector<16x64xf32>
      %251 = arith.mulf %250, %249 : vector<16x64xf32>
      %cst_126 = arith.constant 0.000000e+00 : f32
      %252 = vector.broadcast %cst_126 : f32 to vector<16x64xf32>
      %253 = arith.cmpf ogt, %251, %252 : vector<16x64xf32>
      %cst_127 = arith.constant 0.00999999977 : f32
      %254 = vector.broadcast %cst_127 : f32 to vector<16x64xf32>
      %255 = arith.mulf %254, %251 : vector<16x64xf32>
      %256 = arith.select %253, %251, %255 : vector<16x64xi1>, vector<16x64xf32>
      %257 = arith.truncf %256 : vector<16x64xf32> to vector<16x64xbf16>
      %c0_128 = arith.constant 0 : index
      %c0_129 = arith.constant 0 : index
      %258 = vector.load %arg25[%c0_128, %c0_129] : memref<16x64xbf16, #tpu.memory_space<vmem>>, vector<16x64xbf16>
      tpu.vector_store %arg25[%c0_128, %c0_129], %257 {strides = array<i32>} : memref<16x64xbf16, #tpu.memory_space<vmem>>, vector<16x64xbf16>,
    } else {
    }
    return
  }
  func.func @transform_0(%arg0: i32) -> (i32, i32) {
    %c0_i32 = arith.constant 0 : i32
    %c0_i32_0 = arith.constant 0 : i32
    return %arg0, %c0_i32 : i32, i32
  }
  func.func @transform_1(%arg0: i32) -> (i32, i32) {
    %c0_i32 = arith.constant 0 : i32
    %c0_i32_0 = arith.constant 0 : i32
    return %arg0, %c0_i32 : i32, i32
  }
  func.func @transform_2(%arg0: i32) -> (i32, i32) {
    %c0_i32 = arith.constant 0 : i32
    %c0_i32_0 = arith.constant 0 : i32
    return %arg0, %c0_i32 : i32, i32
  }
  func.func @transform_3(%arg0: i32) -> (i32, i32) {
    %c0_i32 = arith.constant 0 : i32
    %c0_i32_0 = arith.constant 0 : i32
    %c0_i32_1 = arith.constant 0 : i32
    return %c0_i32, %c0_i32_0 : i32, i32
  }
  func.func @transform_4(%arg0: i32) -> (i32, i32) {
    %c0_i32 = arith.constant 0 : i32
    %c0_i32_0 = arith.constant 0 : i32
    %c0_i32_1 = arith.constant 0 : i32
    return %c0_i32, %c0_i32_0 : i32, i32
  }
  func.func @transform_5(%arg0: i32) -> (i32, i32) {
    %c0_i32 = arith.constant 0 : i32
    %c0_i32_0 = arith.constant 0 : i32
    %c0_i32_1 = arith.constant 0 : i32
    return %c0_i32, %c0_i32_0 : i32, i32
  }
  func.func @transform_6(%arg0: i32) -> (i32, i32) {
    %c0_i32 = arith.constant 0 : i32
    %c0_i32_0 = arith.constant 0 : i32
    %c0_i32_1 = arith.constant 0 : i32
    return %c0_i32, %c0_i32_0 : i32, i32
  }
  func.func @transform_7(%arg0: i32) -> (i32, i32) {
    %c0_i32 = arith.constant 0 : i32
    %c0_i32_0 = arith.constant 0 : i32
    %c0_i32_1 = arith.constant 0 : i32
    return %c0_i32, %c0_i32_0 : i32, i32
  }
  func.func @transform_8(%arg0: i32) -> (i32, i32) {
    %c0_i32 = arith.constant 0 : i32
    %c0_i32_0 = arith.constant 0 : i32
    %c0_i32_1 = arith.constant 0 : i32
    return %c0_i32, %c0_i32_0 : i32, i32
  }
  func.func @transform_9(%arg0: i32) -> (i32, i32) {
    %c0_i32 = arith.constant 0 : i32
    %c0_i32_0 = arith.constant 0 : i32
    %c0_i32_1 = arith.constant 0 : i32
    return %c0_i32, %c0_i32_0 : i32, i32
  }
  func.func @transform_10(%arg0: i32) -> (i32, i32) {
    %c0_i32 = arith.constant 0 : i32
    %c0_i32_0 = arith.constant 0 : i32
    %c0_i32_1 = arith.constant 0 : i32
    return %c0_i32, %c0_i32_0 : i32, i32
  }
  func.func @transform_11(%arg0: i32) -> (i32, i32) {
    %c0_i32 = arith.constant 0 : i32
    %c0_i32_0 = arith.constant 0 : i32
    %c0_i32_1 = arith.constant 0 : i32
    return %c0_i32, %c0_i32_0 : i32, i32
  }
  func.func @transform_12(%arg0: i32) -> (i32, i32) {
    %c0_i32 = arith.constant 0 : i32
    %c0_i32_0 = arith.constant 0 : i32
    %c0_i32_1 = arith.constant 0 : i32
    return %c0_i32, %c0_i32_0 : i32, i32
  }
  func.func @transform_13(%arg0: i32) -> (i32, i32) {
    %c0_i32 = arith.constant 0 : i32
    %c0_i32_0 = arith.constant 0 : i32
    %c0_i32_1 = arith.constant 0 : i32
    return %c0_i32, %c0_i32_0 : i32, i32
  }
  func.func @transform_14(%arg0: i32) -> (i32, i32) {
    %c0_i32 = arith.constant 0 : i32
    %c0_i32_0 = arith.constant 0 : i32
    %c0_i32_1 = arith.constant 0 : i32
    return %c0_i32, %c0_i32_0 : i32, i32
  }
  func.func @transform_15(%arg0: i32) -> (i32, i32) {
    %c0_i32 = arith.constant 0 : i32
    %c0_i32_0 = arith.constant 0 : i32
    %c0_i32_1 = arith.constant 0 : i32
    return %c0_i32, %c0_i32_0 : i32, i32
  }
  func.func @transform_16(%arg0: i32) -> (i32, i32) {
    %c0_i32 = arith.constant 0 : i32
    %c0_i32_0 = arith.constant 0 : i32
    %c0_i32_1 = arith.constant 0 : i32
    return %c0_i32, %c0_i32_0 : i32, i32
  }
  func.func @transform_17(%arg0: i32) -> (i32, i32) {
    %c0_i32 = arith.constant 0 : i32
    %c0_i32_0 = arith.constant 0 : i32
    %c0_i32_1 = arith.constant 0 : i32
    return %c0_i32, %c0_i32_0 : i32, i32
  }
  func.func @transform_18(%arg0: i32) -> (i32, i32) {
    %c0_i32 = arith.constant 0 : i32
    %c0_i32_0 = arith.constant 0 : i32
    %c0_i32_1 = arith.constant 0 : i32
    return %c0_i32, %c0_i32_0 : i32, i32
  }
  func.func @transform_19(%arg0: i32) -> (i32, i32) {
    %c0_i32 = arith.constant 0 : i32
    %c0_i32_0 = arith.constant 0 : i32
    %c0_i32_1 = arith.constant 0 : i32
    return %c0_i32, %c0_i32_0 : i32, i32
  }
  func.func @transform_20(%arg0: i32) -> (i32, i32) {
    %c0_i32 = arith.constant 0 : i32
    %c0_i32_0 = arith.constant 0 : i32
    %c0_i32_1 = arith.constant 0 : i32
    return %c0_i32, %c0_i32_0 : i32, i32
  }
  func.func @transform_21(%arg0: i32) -> (i32, i32) {
    %c0_i32 = arith.constant 0 : i32
    %c0_i32_0 = arith.constant 0 : i32
    %c0_i32_1 = arith.constant 0 : i32
    return %c0_i32, %c0_i32_0 : i32, i32
  }
  func.func @transform_22(%arg0: i32) -> (i32, i32) {
    %c0_i32 = arith.constant 0 : i32
    %c0_i32_0 = arith.constant 0 : i32
    %c0_i32_1 = arith.constant 0 : i32
    return %c0_i32, %c0_i32_0 : i32, i32
  }
  func.func @transform_23(%arg0: i32) -> (i32, i32) {
    %c0_i32 = arith.constant 0 : i32
    %c0_i32_0 = arith.constant 0 : i32
    %c0_i32_1 = arith.constant 0 : i32
    return %c0_i32, %c0_i32_0 : i32, i32
  }
  func.func @transform_24(%arg0: i32) -> (i32, i32) {
    %c0_i32 = arith.constant 0 : i32
    %c0_i32_0 = arith.constant 0 : i32
    %c0_i32_1 = arith.constant 0 : i32
    return %c0_i32, %c0_i32_0 : i32, i32
  }
}

module attributes {stable_mosaic.version = 11 : i64} {
  func.func @_head_kernel(%arg0: i32, %arg1: memref<64x32xf32, #tpu.memory_space<vmem>>, %arg2: memref<64x16xf32, #tpu.memory_space<vmem>>, %arg3: memref<64x64xf32, #tpu.memory_space<vmem>>, %arg4: memref<32x64xbf16, #tpu.memory_space<vmem>>, %arg5: memref<16x64xbf16, #tpu.memory_space<vmem>>, %arg6: memref<1x1xf32, #tpu.memory_space<vmem>>, %arg7: memref<128x128xf32, #tpu.memory_space<vmem>>, %arg8: memref<1x128xf32, #tpu.memory_space<vmem>>, %arg9: memref<64x128xf32, #tpu.memory_space<vmem>>, %arg10: memref<64x128xf32, #tpu.memory_space<vmem>>, %arg11: memref<64x128xf32, #tpu.memory_space<vmem>>) attributes {dimension_semantics = [#tpu.dimension_semantics<parallel>], iteration_bounds = array<i64: 1>, scalar_prefetch = 0 : i64, scratch_operands = 0 : i64, tpu.core_type = #tpu.core_type<tc>, window_params = [{transform_indices = @transform_0, window_bounds = array<i64: 64, 32>}, {transform_indices = @transform_1, window_bounds = array<i64: 64, 16>}, {transform_indices = @transform_2, window_bounds = array<i64: 64, 64>}, {pipeline_mode = #tpu.pipeline_mode<synchronous>, transform_indices = @transform_3, window_bounds = array<i64: 32, 64>}, {pipeline_mode = #tpu.pipeline_mode<synchronous>, transform_indices = @transform_4, window_bounds = array<i64: 16, 64>}, {pipeline_mode = #tpu.pipeline_mode<synchronous>, transform_indices = @transform_5, window_bounds = array<i64: 1, 1>}, {pipeline_mode = #tpu.pipeline_mode<synchronous>, transform_indices = @transform_6, window_bounds = array<i64: 128, 128>}, {pipeline_mode = #tpu.pipeline_mode<synchronous>, transform_indices = @transform_7, window_bounds = array<i64: 1, 128>}, {pipeline_mode = #tpu.pipeline_mode<synchronous>, transform_indices = @transform_8, window_bounds = array<i64: 64, 128>}, {transform_indices = @transform_9, window_bounds = array<i64: 64, 128>}, {transform_indices = @transform_10, window_bounds = array<i64: 64, 128>}]} {
    %c0 = arith.constant 0 : index
    %c0_0 = arith.constant 0 : index
    %0 = vector.load %arg1[%c0, %c0_0] : memref<64x32xf32, #tpu.memory_space<vmem>>, vector<64x32xf32>
    %1 = arith.truncf %0 : vector<64x32xf32> to vector<64x32xbf16>
    %c0_1 = arith.constant 0 : index
    %c0_2 = arith.constant 0 : index
    %2 = vector.load %arg4[%c0_1, %c0_2] : memref<32x64xbf16, #tpu.memory_space<vmem>>, vector<32x64xbf16>
    %cst = arith.constant dense<0.000000e+00> : vector<64x64xf32>
    %3 = tpu.matmul %1, %2, %cst {dimension_numbers = #tpu.dot_dimension_numbers<[1], [0], [0], [1], [0, 0, 1, 1], [], []>} : vector<64x32xbf16>, vector<32x64xbf16>, vector<64x64xf32> -> vector<64x64xf32>
    %c0_3 = arith.constant 0 : index
    %c0_4 = arith.constant 0 : index
    %4 = vector.load %arg2[%c0_3, %c0_4] : memref<64x16xf32, #tpu.memory_space<vmem>>, vector<64x16xf32>
    %5 = arith.truncf %4 : vector<64x16xf32> to vector<64x16xbf16>
    %c0_5 = arith.constant 0 : index
    %c0_6 = arith.constant 0 : index
    %6 = vector.load %arg5[%c0_5, %c0_6] : memref<16x64xbf16, #tpu.memory_space<vmem>>, vector<16x64xbf16>
    %cst_7 = arith.constant dense<0.000000e+00> : vector<64x64xf32>
    %7 = tpu.matmul %5, %6, %cst_7 {dimension_numbers = #tpu.dot_dimension_numbers<[1], [0], [0], [1], [0, 0, 1, 1], [], []>} : vector<64x16xbf16>, vector<16x64xbf16>, vector<64x64xf32> -> vector<64x64xf32>
    %c0_8 = arith.constant 0 : index
    %c0_9 = arith.constant 0 : index
    %8 = vector.load %arg3[%c0_8, %c0_9] : memref<64x64xf32, #tpu.memory_space<vmem>>, vector<64x64xf32>
    %c0_10 = arith.constant 0 : index
    %c0_11 = arith.constant 0 : index
    %9 = vector.load %arg6[%c0_10, %c0_11] : memref<1x1xf32, #tpu.memory_space<vmem>>, vector<1x1xf32>
    %10 = vector.broadcast %9 : vector<1x1xf32> to vector<64x64xf32>
    %11 = arith.mulf %10, %3 : vector<64x64xf32>
    %cst_12 = arith.constant 1.000000e+00 : f32
    %12 = vector.broadcast %cst_12 : f32 to vector<1x1xf32>
    %13 = arith.subf %12, %9 : vector<1x1xf32>
    %14 = vector.broadcast %13 : vector<1x1xf32> to vector<64x64xf32>
    %15 = arith.mulf %14, %7 : vector<64x64xf32>
    %16 = arith.addf %11, %15 : vector<64x64xf32>
    %c0_13 = arith.constant 0 : index
    %c0_14 = arith.constant 0 : index
    %17 = vector.load %arg7[%c0_13, %c0_14] : memref<128x128xf32, #tpu.memory_space<vmem>>, vector<128x128xf32>
    %18 = vector.extract_strided_slice %17 {offsets = [0, 0], sizes = [64, 128], strides = [1, 1]} : vector<128x128xf32> to vector<64x128xf32>
    %cst_15 = arith.constant dense<0.000000e+00> : vector<64x128xf32>
    %19 = tpu.matmul %16, %18, %cst_15 {dimension_numbers = #tpu.dot_dimension_numbers<[1], [0], [0], [1], [0, 0, 1, 1], [], []>} : vector<64x64xf32>, vector<64x128xf32>, vector<64x128xf32> -> vector<64x128xf32>
    %20 = vector.extract_strided_slice %17 {offsets = [64, 0], sizes = [64, 128], strides = [1, 1]} : vector<128x128xf32> to vector<64x128xf32>
    %cst_16 = arith.constant dense<0.000000e+00> : vector<64x128xf32>
    %21 = tpu.matmul %8, %20, %cst_16 {dimension_numbers = #tpu.dot_dimension_numbers<[1], [0], [0], [1], [0, 0, 1, 1], [], []>} : vector<64x64xf32>, vector<64x128xf32>, vector<64x128xf32> -> vector<64x128xf32>
    %22 = arith.addf %19, %21 : vector<64x128xf32>
    %c0_17 = arith.constant 0 : index
    %c0_18 = arith.constant 0 : index
    %23 = vector.load %arg8[%c0_17, %c0_18] : memref<1x128xf32, #tpu.memory_space<vmem>>, vector<1x128xf32>
    %24 = vector.broadcast %23 : vector<1x128xf32> to vector<64x128xf32>
    %25 = arith.addf %22, %24 : vector<64x128xf32>
    %cst_19 = arith.constant dense<0xFF800000> : vector<64xf32>
    %26 = vector.multi_reduction <maximumf>, %25, %cst_19 [1] : vector<64x128xf32> to vector<64xf32>
    %27 = vector.shape_cast %26 : vector<64xf32> to vector<64x1xf32>
    %28 = vector.broadcast %27 : vector<64x1xf32> to vector<64x128xf32>
    %29 = arith.subf %25, %28 : vector<64x128xf32>
    %30 = math.exp %29 : vector<64x128xf32>
    %cst_20 = arith.constant dense<0.000000e+00> : vector<64xf32>
    %31 = vector.multi_reduction <add>, %30, %cst_20 [1] : vector<64x128xf32> to vector<64xf32>
    %32 = vector.shape_cast %31 : vector<64xf32> to vector<64x1xf32>
    %33 = tpu.reciprocal %32 {approx = true} : vector<64x1xf32> -> vector<64x1xf32>
    %34 = vector.broadcast %33 : vector<64x1xf32> to vector<64x128xf32>
    %35 = arith.mulf %30, %34 : vector<64x128xf32>
    %c0_21 = arith.constant 0 : index
    %c0_22 = arith.constant 0 : index
    %36 = vector.load %arg10[%c0_21, %c0_22] : memref<64x128xf32, #tpu.memory_space<vmem>>, vector<64x128xf32>
    tpu.vector_store %arg10[%c0_21, %c0_22], %35 {strides = array<i32>} : memref<64x128xf32, #tpu.memory_space<vmem>>, vector<64x128xf32>,
    %37 = arith.subf %3, %7 : vector<64x64xf32>
    %c0_23 = arith.constant 0 : index
    %c0_24 = arith.constant 0 : index
    %38 = vector.load %arg9[%c0_23, %c0_24] : memref<64x128xf32, #tpu.memory_space<vmem>>, vector<64x128xf32>
    %cst_25 = arith.constant dense<0.000000e+00> : vector<64x128xf32>
    %39 = tpu.matmul %37, %38, %cst_25 {dimension_numbers = #tpu.dot_dimension_numbers<[1], [0], [0], [1], [0, 0, 1, 1], [], []>} : vector<64x64xf32>, vector<64x128xf32>, vector<64x128xf32> -> vector<64x128xf32>
    %40 = arith.mulf %39, %39 : vector<64x128xf32>
    %c0_26 = arith.constant 0 : index
    %c0_27 = arith.constant 0 : index
    %41 = vector.load %arg11[%c0_26, %c0_27] : memref<64x128xf32, #tpu.memory_space<vmem>>, vector<64x128xf32>
    tpu.vector_store %arg11[%c0_26, %c0_27], %40 {strides = array<i32>} : memref<64x128xf32, #tpu.memory_space<vmem>>, vector<64x128xf32>,
    return
  }
  func.func @transform_0(%arg0: i32) -> (i32, i32) {
    %c0_i32 = arith.constant 0 : i32
    %c0_i32_0 = arith.constant 0 : i32
    return %arg0, %c0_i32 : i32, i32
  }
  func.func @transform_1(%arg0: i32) -> (i32, i32) {
    %c0_i32 = arith.constant 0 : i32
    %c0_i32_0 = arith.constant 0 : i32
    return %arg0, %c0_i32 : i32, i32
  }
  func.func @transform_2(%arg0: i32) -> (i32, i32) {
    %c0_i32 = arith.constant 0 : i32
    %c0_i32_0 = arith.constant 0 : i32
    return %arg0, %c0_i32 : i32, i32
  }
  func.func @transform_3(%arg0: i32) -> (i32, i32) {
    %c0_i32 = arith.constant 0 : i32
    %c0_i32_0 = arith.constant 0 : i32
    %c0_i32_1 = arith.constant 0 : i32
    return %c0_i32, %c0_i32_0 : i32, i32
  }
  func.func @transform_4(%arg0: i32) -> (i32, i32) {
    %c0_i32 = arith.constant 0 : i32
    %c0_i32_0 = arith.constant 0 : i32
    %c0_i32_1 = arith.constant 0 : i32
    return %c0_i32, %c0_i32_0 : i32, i32
  }
  func.func @transform_5(%arg0: i32) -> (i32, i32) {
    %c0_i32 = arith.constant 0 : i32
    %c0_i32_0 = arith.constant 0 : i32
    %c0_i32_1 = arith.constant 0 : i32
    return %c0_i32, %c0_i32_0 : i32, i32
  }
  func.func @transform_6(%arg0: i32) -> (i32, i32) {
    %c0_i32 = arith.constant 0 : i32
    %c0_i32_0 = arith.constant 0 : i32
    %c0_i32_1 = arith.constant 0 : i32
    return %c0_i32, %c0_i32_0 : i32, i32
  }
  func.func @transform_7(%arg0: i32) -> (i32, i32) {
    %c0_i32 = arith.constant 0 : i32
    %c0_i32_0 = arith.constant 0 : i32
    %c0_i32_1 = arith.constant 0 : i32
    return %c0_i32, %c0_i32_0 : i32, i32
  }
  func.func @transform_8(%arg0: i32) -> (i32, i32) {
    %c0_i32 = arith.constant 0 : i32
    %c0_i32_0 = arith.constant 0 : i32
    %c0_i32_1 = arith.constant 0 : i32
    return %c0_i32, %c0_i32_0 : i32, i32
  }
  func.func @transform_9(%arg0: i32) -> (i32, i32) {
    %c0_i32 = arith.constant 0 : i32
    %c0_i32_0 = arith.constant 0 : i32
    return %arg0, %c0_i32 : i32, i32
  }
  func.func @transform_10(%arg0: i32) -> (i32, i32) {
    %c0_i32 = arith.constant 0 : i32
    %c0_i32_0 = arith.constant 0 : i32
    return %arg0, %c0_i32 : i32, i32
  }
}

</mosaic_0001>

<llo_original>
// kernel: dsr_gcn_forward.3
$region0: #{dsr_gcn_forward.3}
  #allocation0 [shape = 'u32[]', space=smem, size = 0x4, offset = 0x4, fixed_abs, tag = 'smem constant byte address 0x4 - core index']
  #allocation1 [shape = 'u32[144,128]{1,0:T(1,128)}', space=vmem, size = 0x12000, scoped, tag = 'internal scratch']
  #allocation2 [shape = 'f32[1,1]{1,0:T(1,128)S(1)}', space=vmem, size = 0x200, scoped, tag = 'scoped memory for dsr_gcn_forward.3']
  %s0 = inlined_call_operand.vmem [shape: f32[64,32], index: 0, kind: input, shape index: {}]
  %s1 = inlined_call_operand.vmem [shape: f32[64,16], index: 1, kind: input, shape index: {}]
  %s2 = inlined_call_operand.vmem [shape: f32[64,64], index: 2, kind: input, shape index: {}]
  %s3 = inlined_call_operand.vmem [shape: bf16[32,64], index: 3, kind: input, shape index: {}]
  %s4 = inlined_call_operand.vmem [shape: bf16[16,64], index: 4, kind: input, shape index: {}]
  %s5 = inlined_call_operand.<no memory space> [shape: f32[1,1], index: 5, kind: input, shape index: {}]
  %s6 = inlined_call_operand.vmem [shape: f32[128,128], index: 6, kind: input, shape index: {}]
  %s7 = inlined_call_operand.vmem [shape: f32[1,128], index: 7, kind: input, shape index: {}]
  %s8 = inlined_call_operand.vmem [shape: f32[64,128], index: 8, kind: input, shape index: {}]
  %s9 = inlined_call_operand.vmem [shape: f32[64,128], index: 9, kind: output, shape index: {0}]
  %s10 = inlined_call_operand.vmem [shape: f32[64,128], index: 10, kind: output, shape index: {1}]
  %11 = xla_tuple %s9, %s10
  %s12 = sld [smem:[#allocation0]]
  $region54: #{dsr_gcn_forward.3} parent=0
    _
  %s14 = ssub.s32 1, %s12
  %s15 = scalar_select 0, %s14, %s12
  %v16 = vstv %s5
  %17 = vst [vmem:[#allocation2] sm:$0x1] %v16
  // Predicated region
  $region2: #{dsr_gcn_forward.3} parent=0 // pred_check
    _
  $region3: #{dsr_gcn_forward.3} parent=0 // pred_check_branch
    %19 = sbr.rel (0) target = $region5
  $region4: #{dsr_gcn_forward.3} parent=0 // pred_region
    _
  $region5: #{dsr_gcn_forward.3} parent=0 // pred_fallthru
    _
  // Predicated region
  $region6: #{dsr_gcn_forward.3} parent=0 // pred_check
    _
  $region7: #{dsr_gcn_forward.3} parent=0 // pred_check_branch
    %21 = sbr.rel (0) target = $region9
  $region8: #{dsr_gcn_forward.3} parent=0 // pred_region
    _
  $region9: #{dsr_gcn_forward.3} parent=0 // pred_fallthru
    _
  // Predicated region
  $region10: #{dsr_gcn_forward.3} parent=0 // pred_check
    _
  $region11: #{dsr_gcn_forward.3} parent=0 // pred_check_branch
    %23 = sbr.rel (0) target = $region13
  $region12: #{dsr_gcn_forward.3} parent=0 // pred_region
    _
  $region13: #{dsr_gcn_forward.3} parent=0 // pred_fallthru
    _
  // Predicated region
  $region14: #{dsr_gcn_forward.3} parent=0 // pred_check
    _
  $region15: #{dsr_gcn_forward.3} parent=0 // pred_check_branch
    %25 = sbr.rel (0) target = $region17
  $region16: #{dsr_gcn_forward.3} parent=0 // pred_region
    _
  $region17: #{dsr_gcn_forward.3} parent=0 // pred_fallthru
    _
  // Predicated region
  $region18: #{dsr_gcn_forward.3} parent=0 // pred_check
    _
  $region19: #{dsr_gcn_forward.3} parent=0 // pred_check_branch
    %27 = sbr.rel (0) target = $region21
  $region20: #{dsr_gcn_forward.3} parent=0 // pred_region
    _
  $region21: #{dsr_gcn_forward.3} parent=0 // pred_fallthru
    _
  // Predicated region
  $region22: #{dsr_gcn_forward.3} parent=0 // pred_check
    _
  $region23: #{dsr_gcn_forward.3} parent=0 // pred_check_branch
    %29 = sbr.rel (0) target = $region25
  $region24: #{dsr_gcn_forward.3} parent=0 // pred_region
    _
  $region25: #{dsr_gcn_forward.3} parent=0 // pred_fallthru
    _
  // Predicated region
  $region26: #{dsr_gcn_forward.3} parent=0 // pred_check
    _
  $region27: #{dsr_gcn_forward.3} parent=0 // pred_check_branch
    %31 = sbr.rel (0) target = $region29
  $region28: #{dsr_gcn_forward.3} parent=0 // pred_region
    _
  $region29: #{dsr_gcn_forward.3} parent=0 // pred_fallthru
    _
  // Predicated region
  $region30: #{dsr_gcn_forward.3} parent=0 // pred_check
    _
  $region31: #{dsr_gcn_forward.3} parent=0 // pred_check_branch
    %33 = sbr.rel (0) target = $region33
  $region32: #{dsr_gcn_forward.3} parent=0 // pred_region
    _
  $region33: #{dsr_gcn_forward.3} parent=0 // pred_fallthru
    _
  // Predicated region
  $region34: #{dsr_gcn_forward.3} parent=0 // pred_check
    _
  $region35: #{dsr_gcn_forward.3} parent=0 // pred_check_branch
    %35 = sbr.rel (0) target = $region37
  $region36: #{dsr_gcn_forward.3} parent=0 // pred_region
    _
  $region37: #{dsr_gcn_forward.3} parent=0 // pred_fallthru
    _
  %v37 = vld [vmem:[%s0] sm:$0xff]
  %v38 = vld [vmem:[%s0 + $0x8] sm:$0xff]
  %v39 = vld [vmem:[%s0 + $0x10] sm:$0xff]
  %v40 = vld [vmem:[%s0 + $0x18] sm:$0xff]
  %v41 = vld [vmem:[%s0 + $0x20] sm:$0xff]
  %v42 = vld [vmem:[%s0 + $0x28] sm:$0xff]
  %v43 = vld [vmem:[%s0 + $0x30] sm:$0xff]
  %v44 = vld [vmem:[%s0 + $0x38] sm:$0xff]
  %v45 = vpack.c.bf16 %v38, %v37
  %v46 = vpack.c.bf16 %v40, %v39
  %v47 = vpack.c.bf16 %v42, %v41
  %v48 = vpack.c.bf16 %v44, %v43
  %v49 = vld [vmem:[%s3] sm:$0xf]
  %v50 = vld [vmem:[%s3 + $0x4] sm:$0xf]
  %v51 = vld [vmem:[%s3 + $0x8] sm:$0xf]
  %v52 = vld [vmem:[%s3 + $0xc] sm:$0xf]
  %v57 = vunpack.c.l.b16 %v49
  %v58 = vunpack.c.l.b16 %v50
  %v59 = vunpack.c.l.b16 %v51
  %v60 = vunpack.c.l.b16 %v52
  %v61 = vpack.c.b16 %v58, %v57
  %v62 = vpack.c.b16 %v60, %v59
  %vm65 = vcmask 261120
  %v67 = vsel %vm65, %v45, 0
  %v70 = vsel %vm65, %v46, 0
  %v73 = vsel %vm65, %v47, 0
  %v76 = vsel %vm65, %v48, 0
  %78 = vmatprep.subr.bf16.mxu0 0
  %79 = vmatpush1.bf16.msra.mxu0 0
  %80 = vmatprep.subr.bf16.mxu0 0
  %81 = vmatpush1.bf16.msra.mxu0 0
  %82 = vmatprep.subr.bf16.mxu0 0
  %83 = vmatpush1.bf16.msra.mxu0 0
  %84 = vmatprep.subr.bf16.mxu0 0
  %85 = vmatpush1.bf16.msra.mxu0 0
  %86 = vmatprep.subr.bf16.mxu0 0
  %87 = vmatpush1.bf16.msra.mxu0 0
  %88 = vmatprep.subr.bf16.mxu0 0
  %89 = vmatpush1.bf16.msra.mxu0 0
  %90 = vmatprep.subr.bf16.mxu0 0
  %91 = vmatpush1.bf16.msra.mxu0 %v62
  %92 = vmatprep.subr.bf16.mxu0 0
  %93 = vmatpush1.bf16.msra.mxu0 %v61
  %94 = vmatprep.subr.bf16.mxu0 0
  %95 = vmatpush2.bf16.msra.mxu0 0
  %96 = vmatprep.subr.bf16.mxu0 0
  %97 = vmatpush2.bf16.msra.mxu0 0
  %98 = vmatprep.subr.bf16.mxu0 0
  %99 = vmatpush2.bf16.msra.mxu0 0
  %100 = vmatprep.subr.bf16.mxu0 0
  %101 = vmatpush2.bf16.msra.mxu0 0
  %102 = vmatprep.subr.bf16.mxu0 0
  %103 = vmatpush2.bf16.msra.mxu0 0
  %104 = vmatprep.subr.bf16.mxu0 0
  %105 = vmatpush2.bf16.msra.mxu0 0
  %106 = vmatprep.subr.bf16.mxu0 0
  %107 = vmatpush2.bf16.msra.mxu0 0
  %108 = vmatprep.subr.bf16.mxu0 0
  %109 = vmatpush2.bf16.msra.mxu0 0
  %110 = vmatprep.mubr.bf16.mxu0 0
  %111 = vmatmul.mubr.bf16.gmra.mxu0 %v67
  %v112 = vpop.f32.mrf.mxu0
  %v113 = vadd.f32 0.0, %v112
  %v114 = vpop.f32.mrf.mxu0
  %v115 = vpop.f32.mrf.mxu0
  %v116 = vadd.f32 0.0, %v115
  %v117 = vpop.f32.mrf.mxu0
  %118 = vmatprep.mubr.bf16.mxu0 0
  %119 = vmatmul.mubr.bf16.gmra.mxu0 %v70
  %v120 = vpop.f32.mrf.mxu0
  %v121 = vadd.f32 0.0, %v120
  %v122 = vpop.f32.mrf.mxu0
  %v123 = vpop.f32.mrf.mxu0
  %v124 = vadd.f32 0.0, %v123
  %v125 = vpop.f32.mrf.mxu0
  %126 = vmatprep.mubr.bf16.mxu0 0
  %127 = vmatmul.mubr.bf16.gmra.mxu0 %v73
  %v128 = vpop.f32.mrf.mxu0
  %v129 = vadd.f32 0.0, %v128
  %v130 = vpop.f32.mrf.mxu0
  %v131 = vpop.f32.mrf.mxu0
  %v132 = vadd.f32 0.0, %v131
  %v133 = vpop.f32.mrf.mxu0
  %134 = vmatprep.mubr.bf16.mxu0 0
  %135 = vmatmul.mubr.bf16.gmra.mxu0 %v76
  %v136 = vpop.f32.mrf.mxu0
  %v137 = vadd.f32 0.0, %v136
  %v138 = vpop.f32.mrf.mxu0
  %v139 = vpop.f32.mrf.mxu0
  %v140 = vadd.f32 0.0, %v139
  %v141 = vpop.f32.mrf.mxu0
  %142 = vdwg.mxu0
  %v143 = vld [vmem:[%s1] sm:$0xff]
  %v144 = vld [vmem:[%s1 + $0x8] sm:$0xff]
  %v145 = vld [vmem:[%s1 + $0x10] sm:$0xff]
  %v146 = vld [vmem:[%s1 + $0x18] sm:$0xff]
  %v147 = vld [vmem:[%s1 + $0x20] sm:$0xff]
  %v148 = vld [vmem:[%s1 + $0x28] sm:$0xff]
  %v149 = vld [vmem:[%s1 + $0x30] sm:$0xff]
  %v150 = vld [vmem:[%s1 + $0x38] sm:$0xff]
  %v151 = vpack.c.bf16 %v144, %v143
  %v152 = vpack.c.bf16 %v146, %v145
  %v153 = vpack.c.bf16 %v148, %v147
  %v154 = vpack.c.bf16 %v150, %v149
  %v155 = vld [vmem:[%s4] sm:$0xf]
  %v156 = vld [vmem:[%s4 + $0x4] sm:$0xf]
  %v159 = vunpack.c.l.b16 %v155
  %v160 = vunpack.c.l.b16 %v156
  %v161 = vpack.c.b16 %v160, %v159
  %vm163 = vcmask 130048
  %v165 = vsel %vm163, %v151, 0
  %v168 = vsel %vm163, %v152, 0
  %v171 = vsel %vm163, %v153, 0
  %v174 = vsel %vm163, %v154, 0
  %176 = vmatprep.subr.bf16.mxu0 0
  %177 = vmatpush1.bf16.msra.mxu0 0
  %178 = vmatprep.subr.bf16.mxu0 0
  %179 = vmatpush1.bf16.msra.mxu0 0
  %180 = vmatprep.subr.bf16.mxu0 0
  %181 = vmatpush1.bf16.msra.mxu0 0
  %182 = vmatprep.subr.bf16.mxu0 0
  %183 = vmatpush1.bf16.msra.mxu0 0
  %184 = vmatprep.subr.bf16.mxu0 0
  %185 = vmatpush1.bf16.msra.mxu0 0
  %186 = vmatprep.subr.bf16.mxu0 0
  %187 = vmatpush1.bf16.msra.mxu0 0
  %188 = vmatprep.subr.bf16.mxu0 0
  %189 = vmatpush1.bf16.msra.mxu0 0
  %190 = vmatprep.subr.bf16.mxu0 0
  %191 = vmatpush1.bf16.msra.mxu0 %v161
  %192 = vmatprep.subr.bf16.mxu0 0
  %193 = vmatpush2.bf16.msra.mxu0 0
  %194 = vmatprep.subr.bf16.mxu0 0
  %195 = vmatpush2.bf16.msra.mxu0 0
  %196 = vmatprep.subr.bf16.mxu0 0
  %197 = vmatpush2.bf16.msra.mxu0 0
  %198 = vmatprep.subr.bf16.mxu0 0
  %199 = vmatpush2.bf16.msra.mxu0 0
  %200 = vmatprep.subr.bf16.mxu0 0
  %201 = vmatpush2.bf16.msra.mxu0 0
  %202 = vmatprep.subr.bf16.mxu0 0
  %203 = vmatpush2.bf16.msra.mxu0 0
  %204 = vmatprep.subr.bf16.mxu0 0
  %205 = vmatpush2.bf16.msra.mxu0 0
  %206 = vmatprep.subr.bf16.mxu0 0
  %207 = vmatpush2.bf16.msra.mxu0 0
  %208 = vmatprep.mubr.bf16.mxu0 0
  %209 = vmatmul.mubr.bf16.gmra.mxu0 %v165
  %v210 = vpop.f32.mrf.mxu0
  %v211 = vadd.f32 0.0, %v210
  %v212 = vpop.f32.mrf.mxu0
  %v213 = vpop.f32.mrf.mxu0
  %v214 = vadd.f32 0.0, %v213
  %v215 = vpop.f32.mrf.mxu0
  %216 = vmatprep.mubr.bf16.mxu0 0
  %217 = vmatmul.mubr.bf16.gmra.mxu0 %v168
  %v218 = vpop.f32.mrf.mxu0
  %v219 = vadd.f32 0.0, %v218
  %v220 = vpop.f32.mrf.mxu0
  %v221 = vpop.f32.mrf.mxu0
  %v222 = vadd.f32 0.0, %v221
  %v223 = vpop.f32.mrf.mxu0
  %224 = vmatprep.mubr.bf16.mxu0 0
  %225 = vmatmul.mubr.bf16.gmra.mxu0 %v171
  %v226 = vpop.f32.mrf.mxu0
  %v227 = vadd.f32 0.0, %v226
  %v228 = vpop.f32.mrf.mxu0
  %v229 = vpop.f32.mrf.mxu0
  %v230 = vadd.f32 0.0, %v229
  %v231 = vpop.f32.mrf.mxu0
  %232 = vmatprep.mubr.bf16.mxu0 0
  %233 = vmatmul.mubr.bf16.gmra.mxu0 %v174
  %v234 = vpop.f32.mrf.mxu0
  %v235 = vadd.f32 0.0, %v234
  %v236 = vpop.f32.mrf.mxu0
  %v237 = vpop.f32.mrf.mxu0
  %v238 = vadd.f32 0.0, %v237
  %v239 = vpop.f32.mrf.mxu0
  %240 = vdwg.mxu0
  %v241 = vld [vmem:[%s2] sm:$0xff]
  %v242 = vld [vmem:[%s2 + $0x8] sm:$0xff]
  %v243 = vld [vmem:[%s2 + $0x10] sm:$0xff]
  %v244 = vld [vmem:[%s2 + $0x18] sm:$0xff]
  %v245 = vld [vmem:[%s2 + $0x20] sm:$0xff]
  %v246 = vld [vmem:[%s2 + $0x28] sm:$0xff]
  %v247 = vld [vmem:[%s2 + $0x30] sm:$0xff]
  %v248 = vld [vmem:[%s2 + $0x38] sm:$0xff]
  %v249 = vld [vmem:[#allocation2] sm:$0x1]
  %v251 = vlaneseq
  %v252 = vshrl.u32 %v251, 7
  %v253 = vsub.s32 0, %v252
  %v254 = vrot.slane %v249, %v253
  %255 = vset.pattern.permute.xlu0 0
  %256 = vperm.xlu0 %255, %v254
  %v257 = vpop.permute.xlu0 %256
  %v259 = vmul.f32 %v257, %v113
  %v260 = vmul.f32 %v257, %v116
  %v261 = vmul.f32 %v257, %v121
  %v262 = vmul.f32 %v257, %v124
  %v263 = vmul.f32 %v257, %v129
  %v264 = vmul.f32 %v257, %v132
  %v265 = vmul.f32 %v257, %v137
  %v266 = vmul.f32 %v257, %v140
  %v267 = vsub.f32 1.0, %v249
  %v269 = vlaneseq
  %v270 = vshrl.u32 %v269, 7
  %v271 = vsub.s32 0, %v270
  %v272 = vrot.slane %v267, %v271
  %273 = vset.pattern.permute.xlu0 0
  %274 = vperm.xlu0 %273, %v272
  %v275 = vpop.permute.xlu0 %274
  %v277 = vmul.f32 %v275, %v211
  %v278 = vmul.f32 %v275, %v214
  %v279 = vmul.f32 %v275, %v219
  %v280 = vmul.f32 %v275, %v222
  %v281 = vmul.f32 %v275, %v227
  %v282 = vmul.f32 %v275, %v230
  %v283 = vmul.f32 %v275, %v235
  %v284 = vmul.f32 %v275, %v238
  %v285 = vadd.f32 %v259, %v277
  %v286 = vadd.f32 %v260, %v278
  %v287 = vadd.f32 %v261, %v279
  %v288 = vadd.f32 %v262, %v280
  %v289 = vadd.f32 %v263, %v281
  %v290 = vadd.f32 %v264, %v282
  %v291 = vadd.f32 %v265, %v283
  %v292 = vadd.f32 %v266, %v284
  %v293 = vld [vmem:[%s6] sm:$0xff]
  %v294 = vld [vmem:[%s6 + $0x8] sm:$0xff]
  %v295 = vld [vmem:[%s6 + $0x10] sm:$0xff]
  %v296 = vld [vmem:[%s6 + $0x18] sm:$0xff]
  %v297 = vld [vmem:[%s6 + $0x20] sm:$0xff]
  %v298 = vld [vmem:[%s6 + $0x28] sm:$0xff]
  %v299 = vld [vmem:[%s6 + $0x30] sm:$0xff]
  %v300 = vld [vmem:[%s6 + $0x38] sm:$0xff]
  %v301 = vld [vmem:[%s6 + $0x40] sm:$0xff]
  %v302 = vld [vmem:[%s6 + $0x48] sm:$0xff]
  %v303 = vld [vmem:[%s6 + $0x50] sm:$0xff]
  %v304 = vld [vmem:[%s6 + $0x58] sm:$0xff]
  %v305 = vld [vmem:[%s6 + $0x60] sm:$0xff]
  %v306 = vld [vmem:[%s6 + $0x68] sm:$0xff]
  %v307 = vld [vmem:[%s6 + $0x70] sm:$0xff]
  %v308 = vld [vmem:[%s6 + $0x78] sm:$0xff]
  %vm309 = vcmask 523264
  %v311 = vsel %vm309, %v241, 0
  %v314 = vsel %vm309, %v242, 0
  %v317 = vsel %vm309, %v243, 0
  %v320 = vsel %vm309, %v244, 0
  %v323 = vsel %vm309, %v245, 0
  %v326 = vsel %vm309, %v246, 0
  %v329 = vsel %vm309, %v247, 0
  %v332 = vsel %vm309, %v248, 0
  %334 = vmatprep.subr.mxu0 0.0
  %335 = vmatpush1.msra.mxu0 0.0
  %336 = vmatprep.subr.mxu0 0.0
  %337 = vmatpush1.msra.mxu0 0.0
  %338 = vmatprep.subr.mxu0 0.0
  %339 = vmatpush1.msra.mxu0 0.0
  %340 = vmatprep.subr.mxu0 0.0
  %341 = vmatpush1.msra.mxu0 0.0
  %342 = vmatprep.subr.mxu0 0.0
  %343 = vmatpush1.msra.mxu0 0.0
  %344 = vmatprep.subr.mxu0 0.0
  %345 = vmatpush1.msra.mxu0 0.0
  %346 = vmatprep.subr.mxu0 0.0
  %347 = vmatpush1.msra.mxu0 0.0
  %348 = vmatprep.subr.mxu0 0.0
  %349 = vmatpush1.msra.mxu0 0.0
  %350 = vmatprep.subr.mxu0 0.0
  %351 = vmatpush1.msra.mxu0 %v308
  %352 = vmatprep.subr.mxu0 0.0
  %353 = vmatpush1.msra.mxu0 %v307
  %354 = vmatprep.subr.mxu0 0.0
  %355 = vmatpush1.msra.mxu0 %v306
  %356 = vmatprep.subr.mxu0 0.0
  %357 = vmatpush1.msra.mxu0 %v305
  %358 = vmatprep.subr.mxu0 0.0
  %359 = vmatpush1.msra.mxu0 %v304
  %360 = vmatprep.subr.mxu0 0.0
  %361 = vmatpush1.msra.mxu0 %v303
  %362 = vmatprep.subr.mxu0 0.0
  %363 = vmatpush1.msra.mxu0 %v302
  %364 = vmatprep.subr.mxu0 0.0
  %365 = vmatpush1.msra.mxu0 %v301
  %366 = vmatprep.subr.mxu0 0.0
  %367 = vmatpush2.msra.mxu0 0.0
  %368 = vmatprep.subr.mxu0 0.0
  %369 = vmatpush2.msra.mxu0 0.0
  %370 = vmatprep.subr.mxu0 0.0
  %371 = vmatpush2.msra.mxu0 0.0
  %372 = vmatprep.subr.mxu0 0.0
  %373 = vmatpush2.msra.mxu0 0.0
  %374 = vmatprep.subr.mxu0 0.0
  %375 = vmatpush2.msra.mxu0 0.0
  %376 = vmatprep.subr.mxu0 0.0
  %377 = vmatpush2.msra.mxu0 0.0
  %378 = vmatprep.subr.mxu0 0.0
  %379 = vmatpush2.msra.mxu0 0.0
  %380 = vmatprep.subr.mxu0 0.0
  %381 = vmatpush2.msra.mxu0 0.0
  %382 = vmatprep.subr.mxu0 0.0
  %383 = vmatpush2.msra.mxu0 0.0
  %384 = vmatprep.subr.mxu0 0.0
  %385 = vmatpush2.msra.mxu0 0.0
  %386 = vmatprep.subr.mxu0 0.0
  %387 = vmatpush2.msra.mxu0 0.0
  %388 = vmatprep.subr.mxu0 0.0
  %389 = vmatpush2.msra.mxu0 0.0
  %390 = vmatprep.subr.mxu0 0.0
  %391 = vmatpush2.msra.mxu0 0.0
  %392 = vmatprep.subr.mxu0 0.0
  %393 = vmatpush2.msra.mxu0 0.0
  %394 = vmatprep.subr.mxu0 0.0
  %395 = vmatpush2.msra.mxu0 0.0
  %396 = vmatprep.subr.mxu0 0.0
  %397 = vmatpush2.msra.mxu0 0.0
  %398 = vmatprep.mubr.f32.mxu0 0.0
  %399 = vmatmul.mubr.f32.gmra.mxu0 %v311
  %v400 = vpop.f32.mrf.mxu0
  %v401 = vadd.f32 0.0, %v400
  %v402 = vpop.f32.mrf.mxu0
  %403 = vmatprep.mubr.f32.mxu0 0.0
  %404 = vmatmul.mubr.f32.gmra.mxu0 %v314
  %v405 = vpop.f32.mrf.mxu0
  %v406 = vadd.f32 0.0, %v405
  %v407 = vpop.f32.mrf.mxu0
  %408 = vmatprep.mubr.f32.mxu0 0.0
  %409 = vmatmul.mubr.f32.gmra.mxu0 %v317
  %v410 = vpop.f32.mrf.mxu0
  %v411 = vadd.f32 0.0, %v410
  %v412 = vpop.f32.mrf.mxu0
  %413 = vmatprep.mubr.f32.mxu0 0.0
  %414 = vmatmul.mubr.f32.gmra.mxu0 %v320
  %v415 = vpop.f32.mrf.mxu0
  %v416 = vadd.f32 0.0, %v415
  %v417 = vpop.f32.mrf.mxu0
  %418 = vmatprep.mubr.f32.mxu0 0.0
  %419 = vmatmul.mubr.f32.gmra.mxu0 %v323
  %v420 = vpop.f32.mrf.mxu0
  %v421 = vadd.f32 0.0, %v420
  %v422 = vpop.f32.mrf.mxu0
  %423 = vmatprep.mubr.f32.mxu0 0.0
  %424 = vmatmul.mubr.f32.gmra.mxu0 %v326
  %v425 = vpop.f32.mrf.mxu0
  %v426 = vadd.f32 0.0, %v425
  %v427 = vpop.f32.mrf.mxu0
  %428 = vmatprep.mubr.f32.mxu0 0.0
  %429 = vmatmul.mubr.f32.gmra.mxu0 %v329
  %v430 = vpop.f32.mrf.mxu0
  %v431 = vadd.f32 0.0, %v430
  %v432 = vpop.f32.mrf.mxu0
  %433 = vmatprep.mubr.f32.mxu0 0.0
  %434 = vmatmul.mubr.f32.gmra.mxu0 %v332
  %v435 = vpop.f32.mrf.mxu0
  %v436 = vadd.f32 0.0, %v435
  %v437 = vpop.f32.mrf.mxu0
  %438 = vdwg.mxu0
  %v440 = vsel %vm309, %v285, 0
  %v443 = vsel %vm309, %v286, 0
  %v446 = vsel %vm309, %v287, 0
  %v449 = vsel %vm309, %v288, 0
  %v452 = vsel %vm309, %v289, 0
  %v455 = vsel %vm309, %v290, 0
  %v458 = vsel %vm309, %v291, 0
  %v461 = vsel %vm309, %v292, 0
  %463 = vmatprep.subr.mxu0 0.0
  %464 = vmatpush1.msra.mxu0 0.0
  %465 = vmatprep.subr.mxu0 0.0
  %466 = vmatpush1.msra.mxu0 0.0
  %467 = vmatprep.subr.mxu0 0.0
  %468 = vmatpush1.msra.mxu0 0.0
  %469 = vmatprep.subr.mxu0 0.0
  %470 = vmatpush1.msra.mxu0 0.0
  %471 = vmatprep.subr.mxu0 0.0
  %472 = vmatpush1.msra.mxu0 0.0
  %473 = vmatprep.subr.mxu0 0.0
  %474 = vmatpush1.msra.mxu0 0.0
  %475 = vmatprep.subr.mxu0 0.0
  %476 = vmatpush1.msra.mxu0 0.0
  %477 = vmatprep.subr.mxu0 0.0
  %478 = vmatpush1.msra.mxu0 0.0
  %479 = vmatprep.subr.mxu0 0.0
  %480 = vmatpush1.msra.mxu0 %v300
  %481 = vmatprep.subr.mxu0 0.0
  %482 = vmatpush1.msra.mxu0 %v299
  %483 = vmatprep.subr.mxu0 0.0
  %484 = vmatpush1.msra.mxu0 %v298
  %485 = vmatprep.subr.mxu0 0.0
  %486 = vmatpush1.msra.mxu0 %v297
  %487 = vmatprep.subr.mxu0 0.0
  %488 = vmatpush1.msra.mxu0 %v296
  %489 = vmatprep.subr.mxu0 0.0
  %490 = vmatpush1.msra.mxu0 %v295
  %491 = vmatprep.subr.mxu0 0.0
  %492 = vmatpush1.msra.mxu0 %v294
  %493 = vmatprep.subr.mxu0 0.0
  %494 = vmatpush1.msra.mxu0 %v293
  %495 = vmatprep.subr.mxu0 0.0
  %496 = vmatpush2.msra.mxu0 0.0
  %497 = vmatprep.subr.mxu0 0.0
  %498 = vmatpush2.msra.mxu0 0.0
  %499 = vmatprep.subr.mxu0 0.0
  %500 = vmatpush2.msra.mxu0 0.0
  %501 = vmatprep.subr.mxu0 0.0
  %502 = vmatpush2.msra.mxu0 0.0
  %503 = vmatprep.subr.mxu0 0.0
  %504 = vmatpush2.msra.mxu0 0.0
  %505 = vmatprep.subr.mxu0 0.0
  %506 = vmatpush2.msra.mxu0 0.0
  %507 = vmatprep.subr.mxu0 0.0
  %508 = vmatpush2.msra.mxu0 0.0
  %509 = vmatprep.subr.mxu0 0.0
  %510 = vmatpush2.msra.mxu0 0.0
  %511 = vmatprep.subr.mxu0 0.0
  %512 = vmatpush2.msra.mxu0 0.0
  %513 = vmatprep.subr.mxu0 0.0
  %514 = vmatpush2.msra.mxu0 0.0
  %515 = vmatprep.subr.mxu0 0.0
  %516 = vmatpush2.msra.mxu0 0.0
  %517 = vmatprep.subr.mxu0 0.0
  %518 = vmatpush2.msra.mxu0 0.0
  %519 = vmatprep.subr.mxu0 0.0
  %520 = vmatpush2.msra.mxu0 0.0
  %521 = vmatprep.subr.mxu0 0.0
  %522 = vmatpush2.msra.mxu0 0.0
  %523 = vmatprep.subr.mxu0 0.0
  %524 = vmatpush2.msra.mxu0 0.0
  %525 = vmatprep.subr.mxu0 0.0
  %526 = vmatpush2.msra.mxu0 0.0
  %527 = vmatprep.mubr.f32.mxu0 0.0
  %528 = vmatmul.mubr.f32.gmra.mxu0 %v440
  %v529 = vpop.f32.mrf.mxu0
  %v530 = vadd.f32 %v401, %v529
  %v531 = vpop.f32.mrf.mxu0
  %532 = vmatprep.mubr.f32.mxu0 0.0
  %533 = vmatmul.mubr.f32.gmra.mxu0 %v443
  %v534 = vpop.f32.mrf.mxu0
  %v535 = vadd.f32 %v406, %v534
  %v536 = vpop.f32.mrf.mxu0
  %537 = vmatprep.mubr.f32.mxu0 0.0
  %538 = vmatmul.mubr.f32.gmra.mxu0 %v446
  %v539 = vpop.f32.mrf.mxu0
  %v540 = vadd.f32 %v411, %v539
  %v541 = vpop.f32.mrf.mxu0
  %542 = vmatprep.mubr.f32.mxu0 0.0
  %543 = vmatmul.mubr.f32.gmra.mxu0 %v449
  %v544 = vpop.f32.mrf.mxu0
  %v545 = vadd.f32 %v416, %v544
  %v546 = vpop.f32.mrf.mxu0
  %547 = vmatprep.mubr.f32.mxu0 0.0
  %548 = vmatmul.mubr.f32.gmra.mxu0 %v452
  %v549 = vpop.f32.mrf.mxu0
  %v550 = vadd.f32 %v421, %v549
  %v551 = vpop.f32.mrf.mxu0
  %552 = vmatprep.mubr.f32.mxu0 0.0
  %553 = vmatmul.mubr.f32.gmra.mxu0 %v455
  %v554 = vpop.f32.mrf.mxu0
  %v555 = vadd.f32 %v426, %v554
  %v556 = vpop.f32.mrf.mxu0
  %557 = vmatprep.mubr.f32.mxu0 0.0
  %558 = vmatmul.mubr.f32.gmra.mxu0 %v458
  %v559 = vpop.f32.mrf.mxu0
  %v560 = vadd.f32 %v431, %v559
  %v561 = vpop.f32.mrf.mxu0
  %562 = vmatprep.mubr.f32.mxu0 0.0
  %563 = vmatmul.mubr.f32.gmra.mxu0 %v461
  %v564 = vpop.f32.mrf.mxu0
  %v565 = vadd.f32 %v436, %v564
  %v566 = vpop.f32.mrf.mxu0
  %567 = vdwg.mxu0
  %v568 = vld [vmem:[%s7] sm:$0x1]
  %v570 = vlaneseq
  %v571 = vshrl.u32 %v570, 7
  %v572 = vsub.s32 0, %v571
  %v573 = vrot.slane %v568, %v572
  %v575 = vadd.f32 %v530, %v573
  %v576 = vadd.f32 %v535, %v573
  %v577 = vadd.f32 %v540, %v573
  %v578 = vadd.f32 %v545, %v573
  %v579 = vadd.f32 %v550, %v573
  %v580 = vadd.f32 %v555, %v573
  %v581 = vadd.f32 %v560, %v573
  %v582 = vadd.f32 %v565, %v573
  %583 = vmax.xlane.f32.xlu0 %v575
  %v584 = vpop.xlane.xlu0 %583
  %585 = vmax.xlane.f32.xlu0 %v576
  %v586 = vpop.xlane.xlu0 %585
  %587 = vmax.xlane.f32.xlu0 %v577
  %v588 = vpop.xlane.xlu0 %587
  %589 = vmax.xlane.f32.xlu0 %v578
  %v590 = vpop.xlane.xlu0 %589
  %591 = vmax.xlane.f32.xlu0 %v579
  %v592 = vpop.xlane.xlu0 %591
  %593 = vmax.xlane.f32.xlu0 %v580
  %v594 = vpop.xlane.xlu0 %593
  %595 = vmax.xlane.f32.xlu0 %v581
  %v596 = vpop.xlane.xlu0 %595
  %597 = vmax.xlane.f32.xlu0 %v582
  %v598 = vpop.xlane.xlu0 %597
  %v599 = vsub.f32 %v575, %v584
  %v600 = vsub.f32 %v576, %v586
  %v601 = vsub.f32 %v577, %v588
  %v602 = vsub.f32 %v578, %v590
  %v603 = vsub.f32 %v579, %v592
  %v604 = vsub.f32 %v580, %v594
  %v605 = vsub.f32 %v581, %v596
  %v606 = vsub.f32 %v582, %v598
  %v607 = vmul.f32 %v599, 1.442695
  %v608 = vpow.pop %v607
  %v609 = vmul.f32 %v600, 1.442695
  %v610 = vpow.pop %v609
  %v611 = vmul.f32 %v601, 1.442695
  %v612 = vpow.pop %v611
  %v613 = vmul.f32 %v602, 1.442695
  %v614 = vpow.pop %v613
  %v615 = vmul.f32 %v603, 1.442695
  %v616 = vpow.pop %v615
  %v617 = vmul.f32 %v604, 1.442695
  %v618 = vpow.pop %v617
  %v619 = vmul.f32 %v605, 1.442695
  %v620 = vpow.pop %v619
  %v621 = vmul.f32 %v606, 1.442695
  %v622 = vpow.pop %v621
  %623 = vadd.xlane.f32.xlu0 %v608
  %v624 = vpop.xlane.xlu0 %623
  %625 = vadd.xlane.f32.xlu0 %v610
  %v626 = vpop.xlane.xlu0 %625
  %627 = vadd.xlane.f32.xlu0 %v612
  %v628 = vpop.xlane.xlu0 %627
  %629 = vadd.xlane.f32.xlu0 %v614
  %v630 = vpop.xlane.xlu0 %629
  %631 = vadd.xlane.f32.xlu0 %v616
  %v632 = vpop.xlane.xlu0 %631
  %633 = vadd.xlane.f32.xlu0 %v618
  %v634 = vpop.xlane.xlu0 %633
  %635 = vadd.xlane.f32.xlu0 %v620
  %v636 = vpop.xlane.xlu0 %635
  %637 = vadd.xlane.f32.xlu0 %v622
  %v638 = vpop.xlane.xlu0 %637
  %v639 = vrcp.pop %v624
  %v640 = vrcp.pop %v626
  %v641 = vrcp.pop %v628
  %v642 = vrcp.pop %v630
  %v643 = vrcp.pop %v632
  %v644 = vrcp.pop %v634
  %v645 = vrcp.pop %v636
  %v646 = vrcp.pop %v638
  %v647 = vmul.f32 %v608, %v639
  %v648 = vmul.f32 %v610, %v640
  %v649 = vmul.f32 %v612, %v641
  %v650 = vmul.f32 %v614, %v642
  %v651 = vmul.f32 %v616, %v643
  %v652 = vmul.f32 %v618, %v644
  %v653 = vmul.f32 %v620, %v645
  %v654 = vmul.f32 %v622, %v646
  %655 = vst [vmem:[%s9] sm:$0xff] %v647
  %656 = vst [vmem:[%s9 + $0x8] sm:$0xff] %v648
  %657 = vst [vmem:[%s9 + $0x10] sm:$0xff] %v649
  %658 = vst [vmem:[%s9 + $0x18] sm:$0xff] %v650
  %659 = vst [vmem:[%s9 + $0x20] sm:$0xff] %v651
  %660 = vst [vmem:[%s9 + $0x28] sm:$0xff] %v652
  %661 = vst [vmem:[%s9 + $0x30] sm:$0xff] %v653
  %662 = vst [vmem:[%s9 + $0x38] sm:$0xff] %v654
  %v663 = vsub.f32 %v113, %v211
  %v664 = vsub.f32 %v116, %v214
  %v665 = vsub.f32 %v121, %v219
  %v666 = vsub.f32 %v124, %v222
  %v667 = vsub.f32 %v129, %v227
  %v668 = vsub.f32 %v132, %v230
  %v669 = vsub.f32 %v137, %v235
  %v670 = vsub.f32 %v140, %v238
  %v671 = vld [vmem:[%s8] sm:$0xff]
  %v672 = vld [vmem:[%s8 + $0x8] sm:$0xff]
  %v673 = vld [vmem:[%s8 + $0x10] sm:$0xff]
  %v674 = vld [vmem:[%s8 + $0x18] sm:$0xff]
  %v675 = vld [vmem:[%s8 + $0x20] sm:$0xff]
  %v676 = vld [vmem:[%s8 + $0x28] sm:$0xff]
  %v677 = vld [vmem:[%s8 + $0x30] sm:$0xff]
  %v678 = vld [vmem:[%s8 + $0x38] sm:$0xff]
  %v680 = vsel %vm309, %v663, 0
  %v683 = vsel %vm309, %v664, 0
  %v686 = vsel %vm309, %v665, 0
  %v689 = vsel %vm309, %v666, 0
  %v692 = vsel %vm309, %v667, 0
  %v695 = vsel %vm309, %v668, 0
  %v698 = vsel %vm309, %v669, 0
  %v701 = vsel %vm309, %v670, 0
  %703 = vmatprep.subr.mxu0 0.0
  %704 = vmatpush1.msra.mxu0 0.0
  %705 = vmatprep.subr.mxu0 0.0
  %706 = vmatpush1.msra.mxu0 0.0
  %707 = vmatprep.subr.mxu0 0.0
  %708 = vmatpush1.msra.mxu0 0.0
  %709 = vmatprep.subr.mxu0 0.0
  %710 = vmatpush1.msra.mxu0 0.0
  %711 = vmatprep.subr.mxu0 0.0
  %712 = vmatpush1.msra.mxu0 0.0
  %713 = vmatprep.subr.mxu0 0.0
  %714 = vmatpush1.msra.mxu0 0.0
  %715 = vmatprep.subr.mxu0 0.0
  %716 = vmatpush1.msra.mxu0 0.0
  %717 = vmatprep.subr.mxu0 0.0
  %718 = vmatpush1.msra.mxu0 0.0
  %719 = vmatprep.subr.mxu0 0.0
  %720 = vmatpush1.msra.mxu0 %v678
  %721 = vmatprep.subr.mxu0 0.0
  %722 = vmatpush1.msra.mxu0 %v677
  %723 = vmatprep.subr.mxu0 0.0
  %724 = vmatpush1.msra.mxu0 %v676
  %725 = vmatprep.subr.mxu0 0.0
  %726 = vmatpush1.msra.mxu0 %v675
  %727 = vmatprep.subr.mxu0 0.0
  %728 = vmatpush1.msra.mxu0 %v674
  %729 = vmatprep.subr.mxu0 0.0
  %730 = vmatpush1.msra.mxu0 %v673
  %731 = vmatprep.subr.mxu0 0.0
  %732 = vmatpush1.msra.mxu0 %v672
  %733 = vmatprep.subr.mxu0 0.0
  %734 = vmatpush1.msra.mxu0 %v671
  %735 = vmatprep.subr.mxu0 0.0
  %736 = vmatpush2.msra.mxu0 0.0
  %737 = vmatprep.subr.mxu0 0.0
  %738 = vmatpush2.msra.mxu0 0.0
  %739 = vmatprep.subr.mxu0 0.0
  %740 = vmatpush2.msra.mxu0 0.0
  %741 = vmatprep.subr.mxu0 0.0
  %742 = vmatpush2.msra.mxu0 0.0
  %743 = vmatprep.subr.mxu0 0.0
  %744 = vmatpush2.msra.mxu0 0.0
  %745 = vmatprep.subr.mxu0 0.0
  %746 = vmatpush2.msra.mxu0 0.0
  %747 = vmatprep.subr.mxu0 0.0
  %748 = vmatpush2.msra.mxu0 0.0
  %749 = vmatprep.subr.mxu0 0.0
  %750 = vmatpush2.msra.mxu0 0.0
  %751 = vmatprep.subr.mxu0 0.0
  %752 = vmatpush2.msra.mxu0 0.0
  %753 = vmatprep.subr.mxu0 0.0
  %754 = vmatpush2.msra.mxu0 0.0
  %755 = vmatprep.subr.mxu0 0.0
  %756 = vmatpush2.msra.mxu0 0.0
  %757 = vmatprep.subr.mxu0 0.0
  %758 = vmatpush2.msra.mxu0 0.0
  %759 = vmatprep.subr.mxu0 0.0
  %760 = vmatpush2.msra.mxu0 0.0
  %761 = vmatprep.subr.mxu0 0.0
  %762 = vmatpush2.msra.mxu0 0.0
  %763 = vmatprep.subr.mxu0 0.0
  %764 = vmatpush2.msra.mxu0 0.0
  %765 = vmatprep.subr.mxu0 0.0
  %766 = vmatpush2.msra.mxu0 0.0
  %767 = vmatprep.mubr.f32.mxu0 0.0
  %768 = vmatmul.mubr.f32.gmra.mxu0 %v680
  %v769 = vpop.f32.mrf.mxu0
  %v770 = vadd.f32 0.0, %v769
  %v771 = vpop.f32.mrf.mxu0
  %772 = vmatprep.mubr.f32.mxu0 0.0
  %773 = vmatmul.mubr.f32.gmra.mxu0 %v683
  %v774 = vpop.f32.mrf.mxu0
  %v775 = vadd.f32 0.0, %v774
  %v776 = vpop.f32.mrf.mxu0
  %777 = vmatprep.mubr.f32.mxu0 0.0
  %778 = vmatmul.mubr.f32.gmra.mxu0 %v686
  %v779 = vpop.f32.mrf.mxu0
  %v780 = vadd.f32 0.0, %v779
  %v781 = vpop.f32.mrf.mxu0
  %782 = vmatprep.mubr.f32.mxu0 0.0
  %783 = vmatmul.mubr.f32.gmra.mxu0 %v689
  %v784 = vpop.f32.mrf.mxu0
  %v785 = vadd.f32 0.0, %v784
  %v786 = vpop.f32.mrf.mxu0
  %787 = vmatprep.mubr.f32.mxu0 0.0
  %788 = vmatmul.mubr.f32.gmra.mxu0 %v692
  %v789 = vpop.f32.mrf.mxu0
  %v790 = vadd.f32 0.0, %v789
  %v791 = vpop.f32.mrf.mxu0
  %792 = vmatprep.mubr.f32.mxu0 0.0
  %793 = vmatmul.mubr.f32.gmra.mxu0 %v695
  %v794 = vpop.f32.mrf.mxu0
  %v795 = vadd.f32 0.0, %v794
  %v796 = vpop.f32.mrf.mxu0
  %797 = vmatprep.mubr.f32.mxu0 0.0
  %798 = vmatmul.mubr.f32.gmra.mxu0 %v698
  %v799 = vpop.f32.mrf.mxu0
  %v800 = vadd.f32 0.0, %v799
  %v801 = vpop.f32.mrf.mxu0
  %802 = vmatprep.mubr.f32.mxu0 0.0
  %803 = vmatmul.mubr.f32.gmra.mxu0 %v701
  %v804 = vpop.f32.mrf.mxu0
  %v805 = vadd.f32 0.0, %v804
  %v806 = vpop.f32.mrf.mxu0
  %807 = vdwg.mxu0
  %v808 = vmul.f32 %v770, %v770
  %v809 = vmul.f32 %v775, %v775
  %v810 = vmul.f32 %v780, %v780
  %v811 = vmul.f32 %v785, %v785
  %v812 = vmul.f32 %v790, %v790
  %v813 = vmul.f32 %v795, %v795
  %v814 = vmul.f32 %v800, %v800
  %v815 = vmul.f32 %v805, %v805
  %816 = vst [vmem:[%s10] sm:$0xff] %v808
  %817 = vst [vmem:[%s10 + $0x8] sm:$0xff] %v809
  %818 = vst [vmem:[%s10 + $0x10] sm:$0xff] %v810
  %819 = vst [vmem:[%s10 + $0x18] sm:$0xff] %v811
  %820 = vst [vmem:[%s10 + $0x20] sm:$0xff] %v812
  %821 = vst [vmem:[%s10 + $0x28] sm:$0xff] %v813
  %822 = vst [vmem:[%s10 + $0x30] sm:$0xff] %v814
  %823 = vst [vmem:[%s10 + $0x38] sm:$0xff] %v815
  // Predicated region
  $region38: #{dsr_gcn_forward.3} parent=0 // pred_check
    _
  $region39: #{dsr_gcn_forward.3} parent=0 // pred_check_branch
    %825 = sbr.rel (0) target = $region41
  $region40: #{dsr_gcn_forward.3} parent=0 // pred_region
    _
  $region41: #{dsr_gcn_forward.3} parent=0 // pred_fallthru
    _
  // Predicated region
  $region42: #{dsr_gcn_forward.3} parent=0 // pred_check
    _
  $region43: #{dsr_gcn_forward.3} parent=0 // pred_check_branch
    %827 = sbr.rel (0) target = $region45
  $region44: #{dsr_gcn_forward.3} parent=0 // pred_region
    _
  $region45: #{dsr_gcn_forward.3} parent=0 // pred_fallthru
    _
  // Predicated region
  $region46: #{dsr_gcn_forward.3} parent=0 // pred_check
    _
  $region47: #{dsr_gcn_forward.3} parent=0 // pred_check_branch
    %829 = sbr.rel (0) target = $region49
  $region48: #{dsr_gcn_forward.3} parent=0 // pred_region
    _
  $region49: #{dsr_gcn_forward.3} parent=0 // pred_fallthru
    _
  // Predicated region
  $region50: #{dsr_gcn_forward.3} parent=0 // pred_check
    _
  $region51: #{dsr_gcn_forward.3} parent=0 // pred_check_branch
    %831 = sbr.rel (0) target = $region53
  $region52: #{dsr_gcn_forward.3} parent=0 // pred_region
    _
  $region53: #{dsr_gcn_forward.3} parent=0 // pred_fallthru
    _

// kernel: dsr_gcn_forward.2
$region0: #{dsr_gcn_forward.2}
  #allocation0 [shape = 'u32[]', space=smem, size = 0x4, offset = 0x4, fixed_abs, tag = 'smem constant byte address 0x4 - core index']
  #allocation1 [shape = 'u32[144,128]{1,0:T(1,128)}', space=vmem, size = 0x12000, scoped, tag = 'internal scratch']
  #allocation2 [shape = 'f32[32,8]{1,0:T(8,128)}', space=vmem, size = 0x4000, scoped, tag = 'scratch operand']
  #allocation3 [shape = 'f32[16,8]{1,0:T(8,128)}', space=vmem, size = 0x2000, scoped, tag = 'scratch operand']
  #allocation4 [shape = 'f32[32,8]{1,0:T(8,128)}', space=vmem, size = 0x4000, scoped, tag = 'scratch operand']
  #allocation5 [shape = 'f32[16,8]{1,0:T(8,128)}', space=vmem, size = 0x2000, scoped, tag = 'scratch operand']
  %s0 = inlined_call_operand.vmem [shape: f32[64,32], index: 0, kind: input, shape index: {}]
  %s1 = inlined_call_operand.vmem [shape: f32[64,16], index: 1, kind: input, shape index: {}]
  %s2 = inlined_call_operand.vmem [shape: f32[64,8], index: 2, kind: input, shape index: {}]
  %s3 = inlined_call_operand.vmem [shape: f32[32,32], index: 3, kind: input, shape index: {}]
  %s4 = inlined_call_operand.vmem [shape: f32[16,16], index: 4, kind: input, shape index: {}]
  %s5 = inlined_call_operand.vmem [shape: f32[32,32], index: 5, kind: input, shape index: {}]
  %s6 = inlined_call_operand.vmem [shape: f32[16,16], index: 6, kind: input, shape index: {}]
  %s7 = inlined_call_operand.vmem [shape: f32[1,8], index: 7, kind: input, shape index: {}]
  %s8 = inlined_call_operand.vmem [shape: f32[1,8], index: 8, kind: input, shape index: {}]
  %s9 = inlined_call_operand.vmem [shape: f32[8,384], index: 9, kind: input, shape index: {}]
  %s10 = inlined_call_operand.vmem [shape: f32[1,384], index: 10, kind: input, shape index: {}]
  %s11 = inlined_call_operand.vmem [shape: f32[1,128], index: 11, kind: input, shape index: {}]
  %s12 = inlined_call_operand.vmem [shape: f32[1,128], index: 12, kind: input, shape index: {}]
  %s13 = inlined_call_operand.vmem [shape: f32[128,320], index: 13, kind: input, shape index: {}]
  %s14 = inlined_call_operand.vmem [shape: f32[1,320], index: 14, kind: input, shape index: {}]
  %s15 = inlined_call_operand.vmem [shape: f32[1,8], index: 15, kind: input, shape index: {}]
  %s16 = inlined_call_operand.vmem [shape: f32[1,8], index: 16, kind: input, shape index: {}]
  %s17 = inlined_call_operand.vmem [shape: f32[8,384], index: 17, kind: input, shape index: {}]
  %s18 = inlined_call_operand.vmem [shape: f32[1,384], index: 18, kind: input, shape index: {}]
  %s19 = inlined_call_operand.vmem [shape: f32[1,128], index: 19, kind: input, shape index: {}]
  %s20 = inlined_call_operand.vmem [shape: f32[1,128], index: 20, kind: input, shape index: {}]
  %s21 = inlined_call_operand.vmem [shape: f32[128,320], index: 21, kind: input, shape index: {}]
  %s22 = inlined_call_operand.vmem [shape: f32[1,320], index: 22, kind: input, shape index: {}]
  %s23 = inlined_call_operand.vmem [shape: bf16[32,64], index: 23, kind: output, shape index: {0}]
  %s24 = inlined_call_operand.vmem [shape: bf16[16,64], index: 24, kind: output, shape index: {1}]
  %25 = xla_tuple %s23, %s24
  %s26 = sld [smem:[#allocation0]]
  $region118: #{dsr_gcn_forward.2} parent=0
    _
  %s28 = ssub.s32 1, %s26
  %s29 = scalar_select 0, %s28, %s26
  // Predicated region
  $region2: #{dsr_gcn_forward.2} parent=0 // pred_check
    _
  $region3: #{dsr_gcn_forward.2} parent=0 // pred_check_branch
    %31 = sbr.rel (0) target = $region5
  $region4: #{dsr_gcn_forward.2} parent=0 // pred_region
    _
  $region5: #{dsr_gcn_forward.2} parent=0 // pred_fallthru
    _
  // Predicated region
  $region6: #{dsr_gcn_forward.2} parent=0 // pred_check
    _
  $region7: #{dsr_gcn_forward.2} parent=0 // pred_check_branch
    %33 = sbr.rel (0) target = $region9
  $region8: #{dsr_gcn_forward.2} parent=0 // pred_region
    _
  $region9: #{dsr_gcn_forward.2} parent=0 // pred_fallthru
    _
  // Predicated region
  $region10: #{dsr_gcn_forward.2} parent=0 // pred_check
    _
  $region11: #{dsr_gcn_forward.2} parent=0 // pred_check_branch
    %35 = sbr.rel (0) target = $region13
  $region12: #{dsr_gcn_forward.2} parent=0 // pred_region
    _
  $region13: #{dsr_gcn_forward.2} parent=0 // pred_fallthru
    _
  // Predicated region
  $region14: #{dsr_gcn_forward.2} parent=0 // pred_check
    _
  $region15: #{dsr_gcn_forward.2} parent=0 // pred_check_branch
    %37 = sbr.rel (0) target = $region17
  $region16: #{dsr_gcn_forward.2} parent=0 // pred_region
    _
  $region17: #{dsr_gcn_forward.2} parent=0 // pred_fallthru
    _
  // Predicated region
  $region18: #{dsr_gcn_forward.2} parent=0 // pred_check
    _
  $region19: #{dsr_gcn_forward.2} parent=0 // pred_check_branch
    %39 = sbr.rel (0) target = $region21
  $region20: #{dsr_gcn_forward.2} parent=0 // pred_region
    _
  $region21: #{dsr_gcn_forward.2} parent=0 // pred_fallthru
    _
  // Predicated region
  $region22: #{dsr_gcn_forward.2} parent=0 // pred_check
    _
  $region23: #{dsr_gcn_forward.2} parent=0 // pred_check_branch
    %41 = sbr.rel (0) target = $region25
  $region24: #{dsr_gcn_forward.2} parent=0 // pred_region
    _
  $region25: #{dsr_gcn_forward.2} parent=0 // pred_fallthru
    _
  // Predicated region
  $region26: #{dsr_gcn_forward.2} parent=0 // pred_check
    _
  $region27: #{dsr_gcn_forward.2} parent=0 // pred_check_branch
    %43 = sbr.rel (0) target = $region29
  $region28: #{dsr_gcn_forward.2} parent=0 // pred_region
    _
  $region29: #{dsr_gcn_forward.2} parent=0 // pred_fallthru
    _
  // Predicated region
  $region30: #{dsr_gcn_forward.2} parent=0 // pred_check
    _
  $region31: #{dsr_gcn_forward.2} parent=0 // pred_check_branch
    %45 = sbr.rel (0) target = $region33
  $region32: #{dsr_gcn_forward.2} parent=0 // pred_region
    _
  $region33: #{dsr_gcn_forward.2} parent=0 // pred_fallthru
    _
  // Predicated region
  $region34: #{dsr_gcn_forward.2} parent=0 // pred_check
    _
  $region35: #{dsr_gcn_forward.2} parent=0 // pred_check_branch
    %47 = sbr.rel (0) target = $region37
  $region36: #{dsr_gcn_forward.2} parent=0 // pred_region
    _
  $region37: #{dsr_gcn_forward.2} parent=0 // pred_fallthru
    _
  // Predicated region
  $region38: #{dsr_gcn_forward.2} parent=0 // pred_check
    _
  $region39: #{dsr_gcn_forward.2} parent=0 // pred_check_branch
    %49 = sbr.rel (0) target = $region41
  $region40: #{dsr_gcn_forward.2} parent=0 // pred_region
    _
  $region41: #{dsr_gcn_forward.2} parent=0 // pred_fallthru
    _
  // Predicated region
  $region42: #{dsr_gcn_forward.2} parent=0 // pred_check
    _
  $region43: #{dsr_gcn_forward.2} parent=0 // pred_check_branch
    %51 = sbr.rel (0) target = $region45
  $region44: #{dsr_gcn_forward.2} parent=0 // pred_region
    _
  $region45: #{dsr_gcn_forward.2} parent=0 // pred_fallthru
    _
  // Predicated region
  $region46: #{dsr_gcn_forward.2} parent=0 // pred_check
    _
  $region47: #{dsr_gcn_forward.2} parent=0 // pred_check_branch
    %53 = sbr.rel (0) target = $region49
  $region48: #{dsr_gcn_forward.2} parent=0 // pred_region
    _
  $region49: #{dsr_gcn_forward.2} parent=0 // pred_fallthru
    _
  // Predicated region
  $region50: #{dsr_gcn_forward.2} parent=0 // pred_check
    _
  $region51: #{dsr_gcn_forward.2} parent=0 // pred_check_branch
    %55 = sbr.rel (0) target = $region53
  $region52: #{dsr_gcn_forward.2} parent=0 // pred_region
    _
  $region53: #{dsr_gcn_forward.2} parent=0 // pred_fallthru
    _
  // Predicated region
  $region54: #{dsr_gcn_forward.2} parent=0 // pred_check
    _
  $region55: #{dsr_gcn_forward.2} parent=0 // pred_check_branch
    %57 = sbr.rel (0) target = $region57
  $region56: #{dsr_gcn_forward.2} parent=0 // pred_region
    _
  $region57: #{dsr_gcn_forward.2} parent=0 // pred_fallthru
    _
  // Predicated region
  $region58: #{dsr_gcn_forward.2} parent=0 // pred_check
    _
  $region59: #{dsr_gcn_forward.2} parent=0 // pred_check_branch
    %59 = sbr.rel (0) target = $region61
  $region60: #{dsr_gcn_forward.2} parent=0 // pred_region
    _
  $region61: #{dsr_gcn_forward.2} parent=0 // pred_fallthru
    _
  // Predicated region
  $region62: #{dsr_gcn_forward.2} parent=0 // pred_check
    _
  $region63: #{dsr_gcn_forward.2} parent=0 // pred_check_branch
    %61 = sbr.rel (0) target = $region65
  $region64: #{dsr_gcn_forward.2} parent=0 // pred_region
    _
  $region65: #{dsr_gcn_forward.2} parent=0 // pred_fallthru
    _
  // Predicated region
  $region66: #{dsr_gcn_forward.2} parent=0 // pred_check
    _
  $region67: #{dsr_gcn_forward.2} parent=0 // pred_check_branch
    %63 = sbr.rel (0) target = $region69
  $region68: #{dsr_gcn_forward.2} parent=0 // pred_region
    _
  $region69: #{dsr_gcn_forward.2} parent=0 // pred_fallthru
    _
  // Predicated region
  $region70: #{dsr_gcn_forward.2} parent=0 // pred_check
    _
  $region71: #{dsr_gcn_forward.2} parent=0 // pred_check_branch
    %65 = sbr.rel (0) target = $region73
  $region72: #{dsr_gcn_forward.2} parent=0 // pred_region
    _
  $region73: #{dsr_gcn_forward.2} parent=0 // pred_fallthru
    _
  // Predicated region
  $region74: #{dsr_gcn_forward.2} parent=0 // pred_check
    _
  $region75: #{dsr_gcn_forward.2} parent=0 // pred_check_branch
    %67 = sbr.rel (0) target = $region77
  $region76: #{dsr_gcn_forward.2} parent=0 // pred_region
    _
  $region77: #{dsr_gcn_forward.2} parent=0 // pred_fallthru
    _
  // Predicated region
  $region78: #{dsr_gcn_forward.2} parent=0 // pred_check
    _
  $region79: #{dsr_gcn_forward.2} parent=0 // pred_check_branch
    %69 = sbr.rel (0) target = $region81
  $region80: #{dsr_gcn_forward.2} parent=0 // pred_region
    _
  $region81: #{dsr_gcn_forward.2} parent=0 // pred_fallthru
    _
  // Predicated region
  $region82: #{dsr_gcn_forward.2} parent=0 // pred_check
    _
  $region83: #{dsr_gcn_forward.2} parent=0 // pred_check_branch
    %71 = sbr.rel (0) target = $region85
  $region84: #{dsr_gcn_forward.2} parent=0 // pred_region
    _
  $region85: #{dsr_gcn_forward.2} parent=0 // pred_fallthru
    _
  // Predicated region
  $region86: #{dsr_gcn_forward.2} parent=0 // pred_check
    _
  $region87: #{dsr_gcn_forward.2} parent=0 // pred_check_branch
    %73 = sbr.rel (0) target = $region89
  $region88: #{dsr_gcn_forward.2} parent=0 // pred_region
    _
  $region89: #{dsr_gcn_forward.2} parent=0 // pred_fallthru
    _
  // Predicated region
  $region90: #{dsr_gcn_forward.2} parent=0 // pred_check
    _
  $region91: #{dsr_gcn_forward.2} parent=0 // pred_check_branch
    %75 = sbr.rel (0) target = $region93
  $region92: #{dsr_gcn_forward.2} parent=0 // pred_region
    _
  $region93: #{dsr_gcn_forward.2} parent=0 // pred_fallthru
    _
  %p77 = scmp.eq.s32.totalorder 0, 0
  // Predicated region
  $region94: #{dsr_gcn_forward.2} parent=0 // pred_check
    %p78 = pneg %p77
  $region95: #{dsr_gcn_forward.2} parent=0 // pred_check_branch
    %80 = sbr.rel (%p78) target = $region97
  $region96: #{dsr_gcn_forward.2} parent=0 // pred_region
    %vm81 = vcmask 64512
    %82 = vst.msk [vmem:[#allocation2] sm:$0xff] %vm81, 0.0
    %83 = vst.msk [vmem:[#allocation2 + $0x8] sm:$0xff] %vm81, 0.0
    %84 = vst.msk [vmem:[#allocation2 + $0x10] sm:$0xff] %vm81, 0.0
    %85 = vst.msk [vmem:[#allocation2 + $0x18] sm:$0xff] %vm81, 0.0
    %86 = vst.msk [vmem:[#allocation3] sm:$0xff] %vm81, 0.0
    %87 = vst.msk [vmem:[#allocation3 + $0x8] sm:$0xff] %vm81, 0.0
    %88 = vst.msk [vmem:[#allocation4] sm:$0xff] %vm81, 0.0
    %89 = vst.msk [vmem:[#allocation4 + $0x8] sm:$0xff] %vm81, 0.0
    %90 = vst.msk [vmem:[#allocation4 + $0x10] sm:$0xff] %vm81, 0.0
    %91 = vst.msk [vmem:[#allocation4 + $0x18] sm:$0xff] %vm81, 0.0
    %92 = vst.msk [vmem:[#allocation5] sm:$0xff] %vm81, 0.0
    %93 = vst.msk [vmem:[#allocation5 + $0x8] sm:$0xff] %vm81, 0.0
  $region97: #{dsr_gcn_forward.2} parent=0 // pred_fallthru
    _
  %v94 = vld [vmem:[%s0] sm:$0xff]
  %v95 = vld [vmem:[%s0 + $0x8] sm:$0xff]
  %v96 = vld [vmem:[%s0 + $0x10] sm:$0xff]
  %v97 = vld [vmem:[%s0 + $0x18] sm:$0xff]
  %v98 = vld [vmem:[%s0 + $0x20] sm:$0xff]
  %v99 = vld [vmem:[%s0 + $0x28] sm:$0xff]
  %v100 = vld [vmem:[%s0 + $0x30] sm:$0xff]
  %v101 = vld [vmem:[%s0 + $0x38] sm:$0xff]
  %v102 = vld [vmem:[%s1] sm:$0xff]
  %v103 = vld [vmem:[%s1 + $0x8] sm:$0xff]
  %v104 = vld [vmem:[%s1 + $0x10] sm:$0xff]
  %v105 = vld [vmem:[%s1 + $0x18] sm:$0xff]
  %v106 = vld [vmem:[%s1 + $0x20] sm:$0xff]
  %v107 = vld [vmem:[%s1 + $0x28] sm:$0xff]
  %v108 = vld [vmem:[%s1 + $0x30] sm:$0xff]
  %v109 = vld [vmem:[%s1 + $0x38] sm:$0xff]
  %v110 = vld [vmem:[%s2] sm:$0xff]
  %v111 = vld [vmem:[%s2 + $0x8] sm:$0xff]
  %v112 = vld [vmem:[%s2 + $0x10] sm:$0xff]
  %v113 = vld [vmem:[%s2 + $0x18] sm:$0xff]
  %v114 = vld [vmem:[%s2 + $0x20] sm:$0xff]
  %v115 = vld [vmem:[%s2 + $0x28] sm:$0xff]
  %v116 = vld [vmem:[%s2 + $0x30] sm:$0xff]
  %v117 = vld [vmem:[%s2 + $0x38] sm:$0xff]
  %v118 = vpack.c.bf16 %v111, %v110
  %v119 = vpack.c.bf16 %v113, %v112
  %v120 = vpack.c.bf16 %v115, %v114
  %v121 = vpack.c.bf16 %v117, %v116
  %v122 = vld [vmem:[#allocation2] sm:$0xff]
  %v123 = vld [vmem:[#allocation2 + $0x8] sm:$0xff]
  %v124 = vld [vmem:[#allocation2 + $0x10] sm:$0xff]
  %v125 = vld [vmem:[#allocation2 + $0x18] sm:$0xff]
  %v126 = vpack.c.bf16 %v95, %v94
  %v127 = vpack.c.bf16 %v97, %v96
  %v128 = vpack.c.bf16 %v99, %v98
  %v129 = vpack.c.bf16 %v101, %v100
  %130 = vxpose.xlu0.c.b16.start [1/8] %v126, 128
  %131 = vxpose.xlu0.c.b16.cont [2/8] %v127, 128
  %132 = vxpose.xlu0.c.b16.cont [3/8] %v128, 128
  %133 = vxpose.xlu0.c.b16.cont [4/8] %v129, 128
  %134 = vxpose.xlu0.c.b16.cont [5/8] 0, 128
  %135 = vxpose.xlu0.c.b16.cont [6/8] 0, 128
  %136 = vxpose.xlu0.c.b16.cont [7/8] 0, 128
  %137 = vxpose.xlu0.c.b16.end [8/8] 0, 128
  %v138 = vpop.trf.xlu0
  %v139 = vpop.trf.xlu0
  %v140 = vpop.trf.xlu0
  %v141 = vpop.trf.xlu0
  %v142 = vpop.trf.xlu0
  %v143 = vpop.trf.xlu0
  %v144 = vpop.trf.xlu0
  %v145 = vpop.trf.xlu0
  %vm146 = vcmask 523264
  %v148 = vsel %vm146, %v138, 0
  %v151 = vsel %vm146, %v139, 0
  %153 = vmatprep.subr.bf16.mxu0 0
  %154 = vmatpush1.bf16.msra.mxu0 0
  %155 = vmatprep.subr.bf16.mxu0 0
  %156 = vmatpush1.bf16.msra.mxu0 0
  %157 = vmatprep.subr.bf16.mxu0 0
  %158 = vmatpush1.bf16.msra.mxu0 0
  %159 = vmatprep.subr.bf16.mxu0 0
  %160 = vmatpush1.bf16.msra.mxu0 0
  %161 = vmatprep.subr.bf16.mxu0 0
  %162 = vmatpush1.bf16.msra.mxu0 %v121
  %163 = vmatprep.subr.bf16.mxu0 0
  %164 = vmatpush1.bf16.msra.mxu0 %v120
  %165 = vmatprep.subr.bf16.mxu0 0
  %166 = vmatpush1.bf16.msra.mxu0 %v119
  %167 = vmatprep.subr.bf16.mxu0 0
  %168 = vmatpush1.bf16.msra.mxu0 %v118
  %169 = vmatprep.subr.bf16.mxu0 0
  %170 = vmatpush2.bf16.msra.mxu0 0
  %171 = vmatprep.subr.bf16.mxu0 0
  %172 = vmatpush2.bf16.msra.mxu0 0
  %173 = vmatprep.subr.bf16.mxu0 0
  %174 = vmatpush2.bf16.msra.mxu0 0
  %175 = vmatprep.subr.bf16.mxu0 0
  %176 = vmatpush2.bf16.msra.mxu0 0
  %177 = vmatprep.subr.bf16.mxu0 0
  %178 = vmatpush2.bf16.msra.mxu0 0
  %179 = vmatprep.subr.bf16.mxu0 0
  %180 = vmatpush2.bf16.msra.mxu0 0
  %181 = vmatprep.subr.bf16.mxu0 0
  %182 = vmatpush2.bf16.msra.mxu0 0
  %183 = vmatprep.subr.bf16.mxu0 0
  %184 = vmatpush2.bf16.msra.mxu0 0
  %185 = vmatprep.mubr.bf16.mxu0 0
  %186 = vmatmul.mubr.bf16.gmra.mxu0 %v148
  %v187 = vpop.f32.mrf.mxu0
  %v188 = vadd.f32 0.0, %v187
  %v189 = vpop.f32.mrf.mxu0
  %v190 = vpop.f32.mrf.mxu0
  %v191 = vadd.f32 0.0, %v190
  %v192 = vpop.f32.mrf.mxu0
  %193 = vmatprep.mubr.bf16.mxu0 0
  %194 = vmatmul.mubr.bf16.gmra.mxu0 %v151
  %v195 = vpop.f32.mrf.mxu0
  %v196 = vadd.f32 0.0, %v195
  %v197 = vpop.f32.mrf.mxu0
  %v198 = vpop.f32.mrf.mxu0
  %v199 = vadd.f32 0.0, %v198
  %v200 = vpop.f32.mrf.mxu0
  %201 = vdwg.mxu0
  %v202 = vadd.f32 %v122, %v188
  %v203 = vadd.f32 %v123, %v191
  %v204 = vadd.f32 %v124, %v196
  %v205 = vadd.f32 %v125, %v199
  %vm206 = vcmask 64512
  %207 = vst.msk [vmem:[#allocation2] sm:$0xff] %vm206, %v202
  %208 = vst.msk [vmem:[#allocation2 + $0x8] sm:$0xff] %vm206, %v203
  %209 = vst.msk [vmem:[#allocation2 + $0x10] sm:$0xff] %vm206, %v204
  %210 = vst.msk [vmem:[#allocation2 + $0x18] sm:$0xff] %vm206, %v205
  %v211 = vld [vmem:[#allocation3] sm:$0xff]
  %v212 = vld [vmem:[#allocation3 + $0x8] sm:$0xff]
  %v213 = vpack.c.bf16 %v103, %v102
  %v214 = vpack.c.bf16 %v105, %v104
  %v215 = vpack.c.bf16 %v107, %v106
  %v216 = vpack.c.bf16 %v109, %v108
  %217 = vxpose.xlu0.c.b16.start [1/8] %v213, 128
  %218 = vxpose.xlu0.c.b16.cont [2/8] %v214, 128
  %219 = vxpose.xlu0.c.b16.cont [3/8] %v215, 128
  %220 = vxpose.xlu0.c.b16.cont [4/8] %v216, 128
  %221 = vxpose.xlu0.c.b16.cont [5/8] 0, 128
  %222 = vxpose.xlu0.c.b16.cont [6/8] 0, 128
  %223 = vxpose.xlu0.c.b16.cont [7/8] 0, 128
  %224 = vxpose.xlu0.c.b16.end [8/8] 0, 128
  %v225 = vpop.trf.xlu0
  %v226 = vpop.trf.xlu0
  %v227 = vpop.trf.xlu0
  %v228 = vpop.trf.xlu0
  %v229 = vpop.trf.xlu0
  %v230 = vpop.trf.xlu0
  %v231 = vpop.trf.xlu0
  %v232 = vpop.trf.xlu0
  %v234 = vsel %vm146, %v225, 0
  %236 = vmatprep.subr.bf16.mxu0 0
  %237 = vmatpush1.bf16.msra.mxu0 0
  %238 = vmatprep.subr.bf16.mxu0 0
  %239 = vmatpush1.bf16.msra.mxu0 0
  %240 = vmatprep.subr.bf16.mxu0 0
  %241 = vmatpush1.bf16.msra.mxu0 0
  %242 = vmatprep.subr.bf16.mxu0 0
  %243 = vmatpush1.bf16.msra.mxu0 0
  %244 = vmatprep.subr.bf16.mxu0 0
  %245 = vmatpush1.bf16.msra.mxu0 %v121
  %246 = vmatprep.subr.bf16.mxu0 0
  %247 = vmatpush1.bf16.msra.mxu0 %v120
  %248 = vmatprep.subr.bf16.mxu0 0
  %249 = vmatpush1.bf16.msra.mxu0 %v119
  %250 = vmatprep.subr.bf16.mxu0 0
  %251 = vmatpush1.bf16.msra.mxu0 %v118
  %252 = vmatprep.subr.bf16.mxu0 0
  %253 = vmatpush2.bf16.msra.mxu0 0
  %254 = vmatprep.subr.bf16.mxu0 0
  %255 = vmatpush2.bf16.msra.mxu0 0
  %256 = vmatprep.subr.bf16.mxu0 0
  %257 = vmatpush2.bf16.msra.mxu0 0
  %258 = vmatprep.subr.bf16.mxu0 0
  %259 = vmatpush2.bf16.msra.mxu0 0
  %260 = vmatprep.subr.bf16.mxu0 0
  %261 = vmatpush2.bf16.msra.mxu0 0
  %262 = vmatprep.subr.bf16.mxu0 0
  %263 = vmatpush2.bf16.msra.mxu0 0
  %264 = vmatprep.subr.bf16.mxu0 0
  %265 = vmatpush2.bf16.msra.mxu0 0
  %266 = vmatprep.subr.bf16.mxu0 0
  %267 = vmatpush2.bf16.msra.mxu0 0
  %268 = vmatprep.mubr.bf16.mxu0 0
  %269 = vmatmul.mubr.bf16.gmra.mxu0 %v234
  %v270 = vpop.f32.mrf.mxu0
  %v271 = vadd.f32 0.0, %v270
  %v272 = vpop.f32.mrf.mxu0
  %v273 = vpop.f32.mrf.mxu0
  %v274 = vadd.f32 0.0, %v273
  %v275 = vpop.f32.mrf.mxu0
  %276 = vdwg.mxu0
  %v277 = vadd.f32 %v211, %v271
  %v278 = vadd.f32 %v212, %v274
  %279 = vst.msk [vmem:[#allocation3] sm:$0xff] %vm206, %v277
  %280 = vst.msk [vmem:[#allocation3 + $0x8] sm:$0xff] %vm206, %v278
  %v281 = vld [vmem:[#allocation4] sm:$0xff]
  %v282 = vld [vmem:[#allocation4 + $0x8] sm:$0xff]
  %v283 = vld [vmem:[#allocation4 + $0x10] sm:$0xff]
  %v284 = vld [vmem:[#allocation4 + $0x18] sm:$0xff]
  %285 = vxpose.xlu0.b32.start [1/16] %v94, 128
  %286 = vxpose.xlu0.b32.cont [2/16] %v95, 128
  %287 = vxpose.xlu0.b32.cont [3/16] %v96, 128
  %288 = vxpose.xlu0.b32.cont [4/16] %v97, 128
  %289 = vxpose.xlu0.b32.cont [5/16] %v98, 128
  %290 = vxpose.xlu0.b32.cont [6/16] %v99, 128
  %291 = vxpose.xlu0.b32.cont [7/16] %v100, 128
  %292 = vxpose.xlu0.b32.cont [8/16] %v101, 128
  %293 = vxpose.xlu0.b32.cont [9/16] 0.0, 128
  %294 = vxpose.xlu0.b32.cont [10/16] 0.0, 128
  %295 = vxpose.xlu0.b32.cont [11/16] 0.0, 128
  %296 = vxpose.xlu0.b32.cont [12/16] 0.0, 128
  %297 = vxpose.xlu0.b32.cont [13/16] 0.0, 128
  %298 = vxpose.xlu0.b32.cont [14/16] 0.0, 128
  %299 = vxpose.xlu0.b32.cont [15/16] 0.0, 128
  %300 = vxpose.xlu0.b32.end [16/16] 0.0, 128
  %v301 = vpop.trf.xlu0
  %v302 = vpop.trf.xlu0
  %v303 = vpop.trf.xlu0
  %v304 = vpop.trf.xlu0
  %v305 = vpop.trf.xlu0
  %v306 = vpop.trf.xlu0
  %v307 = vpop.trf.xlu0
  %v308 = vpop.trf.xlu0
  %v309 = vpop.trf.xlu0
  %v310 = vpop.trf.xlu0
  %v311 = vpop.trf.xlu0
  %v312 = vpop.trf.xlu0
  %v313 = vpop.trf.xlu0
  %v314 = vpop.trf.xlu0
  %v315 = vpop.trf.xlu0
  %v316 = vpop.trf.xlu0
  %v318 = vsel %vm146, %v301, 0
  %v321 = vsel %vm146, %v302, 0
  %v324 = vsel %vm146, %v303, 0
  %v327 = vsel %vm146, %v304, 0
  %329 = vmatprep.subr.mxu0 0.0
  %330 = vmatpush1.msra.mxu0 0.0
  %331 = vmatprep.subr.mxu0 0.0
  %332 = vmatpush1.msra.mxu0 0.0
  %333 = vmatprep.subr.mxu0 0.0
  %334 = vmatpush1.msra.mxu0 0.0
  %335 = vmatprep.subr.mxu0 0.0
  %336 = vmatpush1.msra.mxu0 0.0
  %337 = vmatprep.subr.mxu0 0.0
  %338 = vmatpush1.msra.mxu0 0.0
  %339 = vmatprep.subr.mxu0 0.0
  %340 = vmatpush1.msra.mxu0 0.0
  %341 = vmatprep.subr.mxu0 0.0
  %342 = vmatpush1.msra.mxu0 0.0
  %343 = vmatprep.subr.mxu0 0.0
  %344 = vmatpush1.msra.mxu0 0.0
  %345 = vmatprep.subr.mxu0 0.0
  %346 = vmatpush1.msra.mxu0 1.0
  %347 = vmatprep.subr.mxu0 0.0
  %348 = vmatpush1.msra.mxu0 1.0
  %349 = vmatprep.subr.mxu0 0.0
  %350 = vmatpush1.msra.mxu0 1.0
  %351 = vmatprep.subr.mxu0 0.0
  %352 = vmatpush1.msra.mxu0 1.0
  %353 = vmatprep.subr.mxu0 0.0
  %354 = vmatpush1.msra.mxu0 1.0
  %355 = vmatprep.subr.mxu0 0.0
  %356 = vmatpush1.msra.mxu0 1.0
  %357 = vmatprep.subr.mxu0 0.0
  %358 = vmatpush1.msra.mxu0 1.0
  %359 = vmatprep.subr.mxu0 0.0
  %360 = vmatpush1.msra.mxu0 1.0
  %361 = vmatprep.subr.mxu0 0.0
  %362 = vmatpush2.msra.mxu0 0.0
  %363 = vmatprep.subr.mxu0 0.0
  %364 = vmatpush2.msra.mxu0 0.0
  %365 = vmatprep.subr.mxu0 0.0
  %366 = vmatpush2.msra.mxu0 0.0
  %367 = vmatprep.subr.mxu0 0.0
  %368 = vmatpush2.msra.mxu0 0.0
  %369 = vmatprep.subr.mxu0 0.0
  %370 = vmatpush2.msra.mxu0 0.0
  %371 = vmatprep.subr.mxu0 0.0
  %372 = vmatpush2.msra.mxu0 0.0
  %373 = vmatprep.subr.mxu0 0.0
  %374 = vmatpush2.msra.mxu0 0.0
  %375 = vmatprep.subr.mxu0 0.0
  %376 = vmatpush2.msra.mxu0 0.0
  %377 = vmatprep.subr.mxu0 0.0
  %378 = vmatpush2.msra.mxu0 0.0
  %379 = vmatprep.subr.mxu0 0.0
  %380 = vmatpush2.msra.mxu0 0.0
  %381 = vmatprep.subr.mxu0 0.0
  %382 = vmatpush2.msra.mxu0 0.0
  %383 = vmatprep.subr.mxu0 0.0
  %384 = vmatpush2.msra.mxu0 0.0
  %385 = vmatprep.subr.mxu0 0.0
  %386 = vmatpush2.msra.mxu0 0.0
  %387 = vmatprep.subr.mxu0 0.0
  %388 = vmatpush2.msra.mxu0 0.0
  %389 = vmatprep.subr.mxu0 0.0
  %390 = vmatpush2.msra.mxu0 0.0
  %391 = vmatprep.subr.mxu0 0.0
  %392 = vmatpush2.msra.mxu0 0.0
  %393 = vmatprep.mubr.f32.mxu0 0.0
  %394 = vmatmul.mubr.f32.gmra.mxu0 %v318
  %v395 = vpop.f32.mrf.mxu0
  %v396 = vadd.f32 0.0, %v395
  %v397 = vpop.f32.mrf.mxu0
  %398 = vmatprep.mubr.f32.mxu0 0.0
  %399 = vmatmul.mubr.f32.gmra.mxu0 %v321
  %v400 = vpop.f32.mrf.mxu0
  %v401 = vadd.f32 0.0, %v400
  %v402 = vpop.f32.mrf.mxu0
  %403 = vmatprep.mubr.f32.mxu0 0.0
  %404 = vmatmul.mubr.f32.gmra.mxu0 %v324
  %v405 = vpop.f32.mrf.mxu0
  %v406 = vadd.f32 0.0, %v405
  %v407 = vpop.f32.mrf.mxu0
  %408 = vmatprep.mubr.f32.mxu0 0.0
  %409 = vmatmul.mubr.f32.gmra.mxu0 %v327
  %v410 = vpop.f32.mrf.mxu0
  %v411 = vadd.f32 0.0, %v410
  %v412 = vpop.f32.mrf.mxu0
  %413 = vdwg.mxu0
  %v414 = vadd.f32 %v281, %v396
  %v415 = vadd.f32 %v282, %v401
  %v416 = vadd.f32 %v283, %v406
  %v417 = vadd.f32 %v284, %v411
  %418 = vst.msk [vmem:[#allocation4] sm:$0xff] %vm206, %v414
  %419 = vst.msk [vmem:[#allocation4 + $0x8] sm:$0xff] %vm206, %v415
  %420 = vst.msk [vmem:[#allocation4 + $0x10] sm:$0xff] %vm206, %v416
  %421 = vst.msk [vmem:[#allocation4 + $0x18] sm:$0xff] %vm206, %v417
  %v422 = vld [vmem:[#allocation5] sm:$0xff]
  %v423 = vld [vmem:[#allocation5 + $0x8] sm:$0xff]
  %424 = vxpose.xlu0.b32.start [1/16] %v102, 128
  %425 = vxpose.xlu0.b32.cont [2/16] %v103, 128
  %426 = vxpose.xlu0.b32.cont [3/16] %v104, 128
  %427 = vxpose.xlu0.b32.cont [4/16] %v105, 128
  %428 = vxpose.xlu0.b32.cont [5/16] %v106, 128
  %429 = vxpose.xlu0.b32.cont [6/16] %v107, 128
  %430 = vxpose.xlu0.b32.cont [7/16] %v108, 128
  %431 = vxpose.xlu0.b32.cont [8/16] %v109, 128
  %432 = vxpose.xlu0.b32.cont [9/16] 0.0, 128
  %433 = vxpose.xlu0.b32.cont [10/16] 0.0, 128
  %434 = vxpose.xlu0.b32.cont [11/16] 0.0, 128
  %435 = vxpose.xlu0.b32.cont [12/16] 0.0, 128
  %436 = vxpose.xlu0.b32.cont [13/16] 0.0, 128
  %437 = vxpose.xlu0.b32.cont [14/16] 0.0, 128
  %438 = vxpose.xlu0.b32.cont [15/16] 0.0, 128
  %439 = vxpose.xlu0.b32.end [16/16] 0.0, 128
  %v440 = vpop.trf.xlu0
  %v441 = vpop.trf.xlu0
  %v442 = vpop.trf.xlu0
  %v443 = vpop.trf.xlu0
  %v444 = vpop.trf.xlu0
  %v445 = vpop.trf.xlu0
  %v446 = vpop.trf.xlu0
  %v447 = vpop.trf.xlu0
  %v448 = vpop.trf.xlu0
  %v449 = vpop.trf.xlu0
  %v450 = vpop.trf.xlu0
  %v451 = vpop.trf.xlu0
  %v452 = vpop.trf.xlu0
  %v453 = vpop.trf.xlu0
  %v454 = vpop.trf.xlu0
  %v455 = vpop.trf.xlu0
  %v457 = vsel %vm146, %v440, 0
  %v460 = vsel %vm146, %v441, 0
  %462 = vmatprep.subr.mxu0 0.0
  %463 = vmatpush1.msra.mxu0 0.0
  %464 = vmatprep.subr.mxu0 0.0
  %465 = vmatpush1.msra.mxu0 0.0
  %466 = vmatprep.subr.mxu0 0.0
  %467 = vmatpush1.msra.mxu0 0.0
  %468 = vmatprep.subr.mxu0 0.0
  %469 = vmatpush1.msra.mxu0 0.0
  %470 = vmatprep.subr.mxu0 0.0
  %471 = vmatpush1.msra.mxu0 0.0
  %472 = vmatprep.subr.mxu0 0.0
  %473 = vmatpush1.msra.mxu0 0.0
  %474 = vmatprep.subr.mxu0 0.0
  %475 = vmatpush1.msra.mxu0 0.0
  %476 = vmatprep.subr.mxu0 0.0
  %477 = vmatpush1.msra.mxu0 0.0
  %478 = vmatprep.subr.mxu0 0.0
  %479 = vmatpush1.msra.mxu0 1.0
  %480 = vmatprep.subr.mxu0 0.0
  %481 = vmatpush1.msra.mxu0 1.0
  %482 = vmatprep.subr.mxu0 0.0
  %483 = vmatpush1.msra.mxu0 1.0
  %484 = vmatprep.subr.mxu0 0.0
  %485 = vmatpush1.msra.mxu0 1.0
  %486 = vmatprep.subr.mxu0 0.0
  %487 = vmatpush1.msra.mxu0 1.0
  %488 = vmatprep.subr.mxu0 0.0
  %489 = vmatpush1.msra.mxu0 1.0
  %490 = vmatprep.subr.mxu0 0.0
  %491 = vmatpush1.msra.mxu0 1.0
  %492 = vmatprep.subr.mxu0 0.0
  %493 = vmatpush1.msra.mxu0 1.0
  %494 = vmatprep.subr.mxu0 0.0
  %495 = vmatpush2.msra.mxu0 0.0
  %496 = vmatprep.subr.mxu0 0.0
  %497 = vmatpush2.msra.mxu0 0.0
  %498 = vmatprep.subr.mxu0 0.0
  %499 = vmatpush2.msra.mxu0 0.0
  %500 = vmatprep.subr.mxu0 0.0
  %501 = vmatpush2.msra.mxu0 0.0
  %502 = vmatprep.subr.mxu0 0.0
  %503 = vmatpush2.msra.mxu0 0.0
  %504 = vmatprep.subr.mxu0 0.0
  %505 = vmatpush2.msra.mxu0 0.0
  %506 = vmatprep.subr.mxu0 0.0
  %507 = vmatpush2.msra.mxu0 0.0
  %508 = vmatprep.subr.mxu0 0.0
  %509 = vmatpush2.msra.mxu0 0.0
  %510 = vmatprep.subr.mxu0 0.0
  %511 = vmatpush2.msra.mxu0 0.0
  %512 = vmatprep.subr.mxu0 0.0
  %513 = vmatpush2.msra.mxu0 0.0
  %514 = vmatprep.subr.mxu0 0.0
  %515 = vmatpush2.msra.mxu0 0.0
  %516 = vmatprep.subr.mxu0 0.0
  %517 = vmatpush2.msra.mxu0 0.0
  %518 = vmatprep.subr.mxu0 0.0
  %519 = vmatpush2.msra.mxu0 0.0
  %520 = vmatprep.subr.mxu0 0.0
  %521 = vmatpush2.msra.mxu0 0.0
  %522 = vmatprep.subr.mxu0 0.0
  %523 = vmatpush2.msra.mxu0 0.0
  %524 = vmatprep.subr.mxu0 0.0
  %525 = vmatpush2.msra.mxu0 0.0
  %526 = vmatprep.mubr.f32.mxu0 0.0
  %527 = vmatmul.mubr.f32.gmra.mxu0 %v457
  %v528 = vpop.f32.mrf.mxu0
  %v529 = vadd.f32 0.0, %v528
  %v530 = vpop.f32.mrf.mxu0
  %531 = vmatprep.mubr.f32.mxu0 0.0
  %532 = vmatmul.mubr.f32.gmra.mxu0 %v460
  %v533 = vpop.f32.mrf.mxu0
  %v534 = vadd.f32 0.0, %v533
  %v535 = vpop.f32.mrf.mxu0
  %536 = vdwg.mxu0
  %v537 = vadd.f32 %v422, %v529
  %v538 = vadd.f32 %v423, %v534
  %539 = vst.msk [vmem:[#allocation5] sm:$0xff] %vm206, %v537
  %540 = vst.msk [vmem:[#allocation5 + $0x8] sm:$0xff] %vm206, %v538
  // Predicated region
  $region98: #{dsr_gcn_forward.2} parent=0 // pred_check
    %p541 = pneg %p77
  $region99: #{dsr_gcn_forward.2} parent=0 // pred_check_branch
    %543 = sbr.rel (%p541) target = $region101
  $region100: #{dsr_gcn_forward.2} parent=0 // pred_region
    %v544 = vld [vmem:[#allocation2] sm:$0xff]
    %v545 = vld [vmem:[#allocation2 + $0x8] sm:$0xff]
    %v546 = vld [vmem:[#allocation2 + $0x10] sm:$0xff]
    %v547 = vld [vmem:[#allocation2 + $0x18] sm:$0xff]
    %v548 = vld [vmem:[#allocation4] sm:$0xff]
    %v549 = vld [vmem:[#allocation4 + $0x8] sm:$0xff]
    %v550 = vld [vmem:[#allocation4 + $0x10] sm:$0xff]
    %v551 = vld [vmem:[#allocation4 + $0x18] sm:$0xff]
    %553 = vset.pattern.permute.xlu0 0
    %554 = vperm.xlu0 %553, %v548
    %v555 = vpop.permute.xlu0 %554
    %558 = vset.pattern.permute.xlu0 0
    %559 = vperm.xlu0 %558, %v549
    %v560 = vpop.permute.xlu0 %559
    %563 = vset.pattern.permute.xlu0 0
    %564 = vperm.xlu0 %563, %v550
    %v565 = vpop.permute.xlu0 %564
    %568 = vset.pattern.permute.xlu0 0
    %569 = vperm.xlu0 %568, %v551
    %v570 = vpop.permute.xlu0 %569
    %v572 = vrcp.pop %v555
    %v573 = vmul.f32 %v544, %v572
    %v574 = vrcp.pop %v560
    %v575 = vmul.f32 %v545, %v574
    %v576 = vrcp.pop %v565
    %v577 = vmul.f32 %v546, %v576
    %v578 = vrcp.pop %v570
    %v579 = vmul.f32 %v547, %v578
    %v580 = vld [vmem:[#allocation3] sm:$0xff]
    %v581 = vld [vmem:[#allocation3 + $0x8] sm:$0xff]
    %v582 = vld [vmem:[#allocation5] sm:$0xff]
    %v583 = vld [vmem:[#allocation5 + $0x8] sm:$0xff]
    %585 = vset.pattern.permute.xlu0 0
    %586 = vperm.xlu0 %585, %v582
    %v587 = vpop.permute.xlu0 %586
    %590 = vset.pattern.permute.xlu0 0
    %591 = vperm.xlu0 %590, %v583
    %v592 = vpop.permute.xlu0 %591
    %v594 = vrcp.pop %v587
    %v595 = vmul.f32 %v580, %v594
    %v596 = vrcp.pop %v592
    %v597 = vmul.f32 %v581, %v596
    %v598 = vld [vmem:[%s3] sm:$0xff]
    %v599 = vld [vmem:[%s3 + $0x8] sm:$0xff]
    %v600 = vld [vmem:[%s3 + $0x10] sm:$0xff]
    %v601 = vld [vmem:[%s3 + $0x18] sm:$0xff]
    %v602 = vld [vmem:[%s5] sm:$0xff]
    %v603 = vld [vmem:[%s5 + $0x8] sm:$0xff]
    %v604 = vld [vmem:[%s5 + $0x10] sm:$0xff]
    %v605 = vld [vmem:[%s5 + $0x18] sm:$0xff]
    %v606 = vld [vmem:[%s7] sm:$0x1]
    %v607 = vld [vmem:[%s8] sm:$0x1]
    %v608 = vld [vmem:[%s9] sm:$0xff]
    %v609 = vld [vmem:[%s9 + $0x8] sm:$0xff]
    %v610 = vld [vmem:[%s9 + $0x10] sm:$0xff]
    %v611 = vld [vmem:[%s10] sm:$0x7]
    %v612 = vsel %vm206, %v573, 0.0
    %v613 = vsel %vm206, %v575, 0.0
    %v614 = vadd.f32 %v612, %v613
    %v615 = vsel %vm206, %v577, 0.0
    %v616 = vadd.f32 %v614, %v615
    %v617 = vsel %vm206, %v579, 0.0
    %v618 = vadd.f32 %v616, %v617
    %v619 = vrot.slane %v618, 4
    %v620 = vadd.f32 %v618, %v619
    %v621 = vrot.slane %v620, 2
    %v622 = vadd.f32 %v620, %v621
    %v623 = vrot.slane %v622, 1
    %v624 = vadd.f32 %v622, %v623
    %v625 = vrcp.pop 32.0
    %v626 = vmul.f32 %v624, %v625
    %v627 = vsub.f32 %v573, %v626
    %v628 = vsub.f32 %v575, %v626
    %v629 = vsub.f32 %v577, %v626
    %v630 = vsub.f32 %v579, %v626
    %v631 = vmul.f32 %v627, %v627
    %v632 = vmul.f32 %v628, %v628
    %v633 = vmul.f32 %v629, %v629
    %v634 = vmul.f32 %v630, %v630
    %v635 = vsel %vm206, %v631, 0.0
    %v636 = vsel %vm206, %v632, 0.0
    %v637 = vadd.f32 %v635, %v636
    %v638 = vsel %vm206, %v633, 0.0
    %v639 = vadd.f32 %v637, %v638
    %v640 = vsel %vm206, %v634, 0.0
    %v641 = vadd.f32 %v639, %v640
    %v642 = vrot.slane %v641, 4
    %v643 = vadd.f32 %v641, %v642
    %v644 = vrot.slane %v643, 2
    %v645 = vadd.f32 %v643, %v644
    %v646 = vrot.slane %v645, 1
    %v647 = vadd.f32 %v645, %v646
    %v648 = vmul.f32 %v647, %v625
    %v649 = vadd.f32 %v648, 1e-05
    %v650 = vrsqrt.pop %v649
    %v651 = vmul.f32 %v627, %v650
    %v652 = vmul.f32 %v628, %v650
    %v653 = vmul.f32 %v629, %v650
    %v654 = vmul.f32 %v630, %v650
    %v656 = vlaneseq
    %v657 = vshrl.u32 %v656, 7
    %v658 = vsub.s32 0, %v657
    %v659 = vrot.slane %v606, %v658
    %v661 = vmul.f32 %v651, %v659
    %v662 = vmul.f32 %v652, %v659
    %v663 = vmul.f32 %v653, %v659
    %v664 = vmul.f32 %v654, %v659
    %v666 = vlaneseq
    %v667 = vshrl.u32 %v666, 7
    %v668 = vsub.s32 0, %v667
    %v669 = vrot.slane %v607, %v668
    %v671 = vadd.f32 %v661, %v669
    %v672 = vadd.f32 %v662, %v669
    %v673 = vadd.f32 %v663, %v669
    %v674 = vadd.f32 %v664, %v669
    %v676 = vlaneseq
    %v677 = vshrl.u32 %v676, 7
    %v678 = vsub.s32 0, %v677
    %v679 = vrot.slane %v611, %v678
    %v680 = vlaneseq
    %v681 = vshrl.u32 %v680, 7
    %v682 = vsub.s32 1, %v681
    %v683 = vrot.slane %v611, %v682
    %v684 = vlaneseq
    %v685 = vshrl.u32 %v684, 7
    %v686 = vsub.s32 2, %v685
    %v687 = vrot.slane %v611, %v686
    %v692 = vsel %vm206, %v671, 0
    %v695 = vsel %vm206, %v672, 0
    %v698 = vsel %vm206, %v673, 0
    %v701 = vsel %vm206, %v674, 0
    %703 = vmatprep.subr.mxu0 0.0
    %704 = vmatpush1.msra.mxu0 0.0
    %705 = vmatprep.subr.mxu0 0.0
    %706 = vmatpush1.msra.mxu0 0.0
    %707 = vmatprep.subr.mxu0 0.0
    %708 = vmatpush1.msra.mxu0 0.0
    %709 = vmatprep.subr.mxu0 0.0
    %710 = vmatpush1.msra.mxu0 0.0
    %711 = vmatprep.subr.mxu0 0.0
    %712 = vmatpush1.msra.mxu0 0.0
    %713 = vmatprep.subr.mxu0 0.0
    %714 = vmatpush1.msra.mxu0 0.0
    %715 = vmatprep.subr.mxu0 0.0
    %716 = vmatpush1.msra.mxu0 0.0
    %717 = vmatprep.subr.mxu0 0.0
    %718 = vmatpush1.msra.mxu0 0.0
    %719 = vmatprep.subr.mxu0 0.0
    %720 = vmatpush1.msra.mxu0 0.0
    %721 = vmatprep.subr.mxu0 0.0
    %722 = vmatpush1.msra.mxu0 0.0
    %723 = vmatprep.subr.mxu0 0.0
    %724 = vmatpush1.msra.mxu0 0.0
    %725 = vmatprep.subr.mxu0 0.0
    %726 = vmatpush1.msra.mxu0 0.0
    %727 = vmatprep.subr.mxu0 0.0
    %728 = vmatpush1.msra.mxu0 0.0
    %729 = vmatprep.subr.mxu0 0.0
    %730 = vmatpush1.msra.mxu0 0.0
    %731 = vmatprep.subr.mxu0 0.0
    %732 = vmatpush1.msra.mxu0 0.0
    %733 = vmatprep.subr.mxu0 %v609
    %734 = vmatpush1.msra.mxu0 %v608
    %735 = vmatprep.subr.mxu0 0.0
    %736 = vmatpush2.msra.mxu0 0.0
    %737 = vmatprep.subr.mxu0 0.0
    %738 = vmatpush2.msra.mxu0 0.0
    %739 = vmatprep.subr.mxu0 0.0
    %740 = vmatpush2.msra.mxu0 0.0
    %741 = vmatprep.subr.mxu0 0.0
    %742 = vmatpush2.msra.mxu0 0.0
    %743 = vmatprep.subr.mxu0 0.0
    %744 = vmatpush2.msra.mxu0 0.0
    %745 = vmatprep.subr.mxu0 0.0
    %746 = vmatpush2.msra.mxu0 0.0
    %747 = vmatprep.subr.mxu0 0.0
    %748 = vmatpush2.msra.mxu0 0.0
    %749 = vmatprep.subr.mxu0 0.0
    %750 = vmatpush2.msra.mxu0 0.0
    %751 = vmatprep.subr.mxu0 0.0
    %752 = vmatpush2.msra.mxu0 0.0
    %753 = vmatprep.subr.mxu0 0.0
    %754 = vmatpush2.msra.mxu0 0.0
    %755 = vmatprep.subr.mxu0 0.0
    %756 = vmatpush2.msra.mxu0 0.0
    %757 = vmatprep.subr.mxu0 0.0
    %758 = vmatpush2.msra.mxu0 0.0
    %759 = vmatprep.subr.mxu0 0.0
    %760 = vmatpush2.msra.mxu0 0.0
    %761 = vmatprep.subr.mxu0 0.0
    %762 = vmatpush2.msra.mxu0 0.0
    %763 = vmatprep.subr.mxu0 0.0
    %764 = vmatpush2.msra.mxu0 0.0
    %765 = vmatprep.subr.mxu0 0.0
    %766 = vmatpush2.msra.mxu0 0.0
    %767 = vmatprep.mubr.f32.mxu0 0.0
    %768 = vmatmul.mubr.f32.gmra.mxu0 %v692
    %v769 = vpop.f32.mrf.mxu0
    %v770 = vadd.f32 %v679, %v769
    %v771 = vpop.f32.mrf.mxu0
    %v772 = vadd.f32 %v683, %v771
    %773 = vmatprep.mubr.f32.mxu0 0.0
    %774 = vmatmul.mubr.f32.gmra.mxu0 %v695
    %v775 = vpop.f32.mrf.mxu0
    %v776 = vadd.f32 %v679, %v775
    %v777 = vpop.f32.mrf.mxu0
    %v778 = vadd.f32 %v683, %v777
    %779 = vmatprep.mubr.f32.mxu0 0.0
    %780 = vmatmul.mubr.f32.gmra.mxu0 %v698
    %v781 = vpop.f32.mrf.mxu0
    %v782 = vadd.f32 %v679, %v781
    %v783 = vpop.f32.mrf.mxu0
    %v784 = vadd.f32 %v683, %v783
    %785 = vmatprep.mubr.f32.mxu0 0.0
    %786 = vmatmul.mubr.f32.gmra.mxu0 %v701
    %v787 = vpop.f32.mrf.mxu0
    %v788 = vadd.f32 %v679, %v787
    %v789 = vpop.f32.mrf.mxu0
    %v790 = vadd.f32 %v683, %v789
    %791 = vdwg.mxu0
    %792 = vmatprep.subr.mxu0 0.0
    %793 = vmatpush1.msra.mxu0 0.0
    %794 = vmatprep.subr.mxu0 0.0
    %795 = vmatpush1.msra.mxu0 0.0
    %796 = vmatprep.subr.mxu0 0.0
    %797 = vmatpush1.msra.mxu0 0.0
    %798 = vmatprep.subr.mxu0 0.0
    %799 = vmatpush1.msra.mxu0 0.0
    %800 = vmatprep.subr.mxu0 0.0
    %801 = vmatpush1.msra.mxu0 0.0
    %802 = vmatprep.subr.mxu0 0.0
    %803 = vmatpush1.msra.mxu0 0.0
    %804 = vmatprep.subr.mxu0 0.0
    %805 = vmatpush1.msra.mxu0 0.0
    %806 = vmatprep.subr.mxu0 0.0
    %807 = vmatpush1.msra.mxu0 0.0
    %808 = vmatprep.subr.mxu0 0.0
    %809 = vmatpush1.msra.mxu0 0.0
    %810 = vmatprep.subr.mxu0 0.0
    %811 = vmatpush1.msra.mxu0 0.0
    %812 = vmatprep.subr.mxu0 0.0
    %813 = vmatpush1.msra.mxu0 0.0
    %814 = vmatprep.subr.mxu0 0.0
    %815 = vmatpush1.msra.mxu0 0.0
    %816 = vmatprep.subr.mxu0 0.0
    %817 = vmatpush1.msra.mxu0 0.0
    %818 = vmatprep.subr.mxu0 0.0
    %819 = vmatpush1.msra.mxu0 0.0
    %820 = vmatprep.subr.mxu0 0.0
    %821 = vmatpush1.msra.mxu0 0.0
    %822 = vmatprep.subr.mxu0 0.0
    %823 = vmatpush1.msra.mxu0 %v610
    %824 = vmatprep.subr.mxu0 0.0
    %825 = vmatpush2.msra.mxu0 0.0
    %826 = vmatprep.subr.mxu0 0.0
    %827 = vmatpush2.msra.mxu0 0.0
    %828 = vmatprep.subr.mxu0 0.0
    %829 = vmatpush2.msra.mxu0 0.0
    %830 = vmatprep.subr.mxu0 0.0
    %831 = vmatpush2.msra.mxu0 0.0
    %832 = vmatprep.subr.mxu0 0.0
    %833 = vmatpush2.msra.mxu0 0.0
    %834 = vmatprep.subr.mxu0 0.0
    %835 = vmatpush2.msra.mxu0 0.0
    %836 = vmatprep.subr.mxu0 0.0
    %837 = vmatpush2.msra.mxu0 0.0
    %838 = vmatprep.subr.mxu0 0.0
    %839 = vmatpush2.msra.mxu0 0.0
    %840 = vmatprep.subr.mxu0 0.0
    %841 = vmatpush2.msra.mxu0 0.0
    %842 = vmatprep.subr.mxu0 0.0
    %843 = vmatpush2.msra.mxu0 0.0
    %844 = vmatprep.subr.mxu0 0.0
    %845 = vmatpush2.msra.mxu0 0.0
    %846 = vmatprep.subr.mxu0 0.0
    %847 = vmatpush2.msra.mxu0 0.0
    %848 = vmatprep.subr.mxu0 0.0
    %849 = vmatpush2.msra.mxu0 0.0
    %850 = vmatprep.subr.mxu0 0.0
    %851 = vmatpush2.msra.mxu0 0.0
    %852 = vmatprep.subr.mxu0 0.0
    %853 = vmatpush2.msra.mxu0 0.0
    %854 = vmatprep.subr.mxu0 0.0
    %855 = vmatpush2.msra.mxu0 0.0
    %856 = vmatprep.mubr.f32.mxu0 0.0
    %857 = vmatmul.mubr.f32.gmra.mxu0 %v692
    %v858 = vpop.f32.mrf.mxu0
    %v859 = vadd.f32 %v687, %v858
    %v860 = vpop.f32.mrf.mxu0
    %861 = vmatprep.mubr.f32.mxu0 0.0
    %862 = vmatmul.mubr.f32.gmra.mxu0 %v695
    %v863 = vpop.f32.mrf.mxu0
    %v864 = vadd.f32 %v687, %v863
    %v865 = vpop.f32.mrf.mxu0
    %866 = vmatprep.mubr.f32.mxu0 0.0
    %867 = vmatmul.mubr.f32.gmra.mxu0 %v698
    %v868 = vpop.f32.mrf.mxu0
    %v869 = vadd.f32 %v687, %v868
    %v870 = vpop.f32.mrf.mxu0
    %871 = vmatprep.mubr.f32.mxu0 0.0
    %872 = vmatmul.mubr.f32.gmra.mxu0 %v701
    %v873 = vpop.f32.mrf.mxu0
    %v874 = vadd.f32 %v687, %v873
    %v875 = vpop.f32.mrf.mxu0
    %876 = vdwg.mxu0
    %877 = vmatprep.subr.mxu0 0.0
    %878 = vmatpush1.xpose.msra.mxu0 0.0
    %879 = vmatprep.subr.mxu0 0.0
    %880 = vmatpush1.xpose.msra.mxu0 0.0
    %881 = vmatprep.subr.mxu0 0.0
    %882 = vmatpush1.xpose.msra.mxu0 0.0
    %883 = vmatprep.subr.mxu0 0.0
    %884 = vmatpush1.xpose.msra.mxu0 0.0
    %885 = vmatprep.subr.mxu0 0.0
    %886 = vmatpush1.xpose.msra.mxu0 0.0
    %887 = vmatprep.subr.mxu0 0.0
    %888 = vmatpush1.xpose.msra.mxu0 0.0
    %889 = vmatprep.subr.mxu0 0.0
    %890 = vmatpush1.xpose.msra.mxu0 0.0
    %891 = vmatprep.subr.mxu0 0.0
    %892 = vmatpush1.xpose.msra.mxu0 0.0
    %893 = vmatprep.subr.mxu0 0.0
    %894 = vmatpush1.xpose.msra.mxu0 0.0
    %895 = vmatprep.subr.mxu0 0.0
    %896 = vmatpush1.xpose.msra.mxu0 0.0
    %897 = vmatprep.subr.mxu0 0.0
    %898 = vmatpush1.xpose.msra.mxu0 0.0
    %899 = vmatprep.subr.mxu0 0.0
    %900 = vmatpush1.xpose.msra.mxu0 0.0
    %901 = vmatprep.subr.mxu0 %v790
    %902 = vmatpush1.xpose.msra.mxu0 %v788
    %903 = vmatprep.subr.mxu0 %v784
    %904 = vmatpush1.xpose.msra.mxu0 %v782
    %905 = vmatprep.subr.mxu0 %v778
    %906 = vmatpush1.xpose.msra.mxu0 %v776
    %907 = vmatprep.subr.mxu0 %v772
    %908 = vmatpush1.xpose.msra.mxu0 %v770
    %909 = vmatprep.subr.mxu0 0.0
    %910 = vmatpush2.xpose.msra.mxu0 0.0
    %911 = vmatprep.subr.mxu0 0.0
    %912 = vmatpush2.xpose.msra.mxu0 0.0
    %913 = vmatprep.subr.mxu0 0.0
    %914 = vmatpush2.xpose.msra.mxu0 0.0
    %915 = vmatprep.subr.mxu0 0.0
    %916 = vmatpush2.xpose.msra.mxu0 0.0
    %917 = vmatprep.subr.mxu0 0.0
    %918 = vmatpush2.xpose.msra.mxu0 0.0
    %919 = vmatprep.subr.mxu0 0.0
    %920 = vmatpush2.xpose.msra.mxu0 0.0
    %921 = vmatprep.subr.mxu0 0.0
    %922 = vmatpush2.xpose.msra.mxu0 0.0
    %923 = vmatprep.subr.mxu0 0.0
    %924 = vmatpush2.xpose.msra.mxu0 0.0
    %925 = vmatprep.subr.mxu0 0.0
    %926 = vmatpush2.xpose.msra.mxu0 0.0
    %927 = vmatprep.subr.mxu0 0.0
    %928 = vmatpush2.xpose.msra.mxu0 0.0
    %929 = vmatprep.subr.mxu0 0.0
    %930 = vmatpush2.xpose.msra.mxu0 0.0
    %931 = vmatprep.subr.mxu0 0.0
    %932 = vmatpush2.xpose.msra.mxu0 0.0
    %933 = vmatprep.subr.mxu0 0.0
    %934 = vmatpush2.xpose.msra.mxu0 0.0
    %935 = vmatprep.subr.mxu0 0.0
    %936 = vmatpush2.xpose.msra.mxu0 0.0
    %937 = vmatprep.subr.mxu0 0.0
    %938 = vmatpush2.xpose.msra.mxu0 0.0
    %939 = vmatprep.subr.mxu0 0.0
    %940 = vmatpush2.xpose.msra.mxu0 0.0
    %941 = vmatprep.mubr.f32.mxu0 %v772
    %942 = vmatmul.mubr.f32.gmra.mxu0 %v770
    %v943 = vpop.f32.mrf.mxu0
    %v944 = vadd.f32 0.0, %v943
    %v945 = vpop.f32.mrf.mxu0
    %946 = vmatprep.mubr.f32.mxu0 %v778
    %947 = vmatmul.mubr.f32.gmra.mxu0 %v776
    %v948 = vpop.f32.mrf.mxu0
    %v949 = vadd.f32 0.0, %v948
    %v950 = vpop.f32.mrf.mxu0
    %951 = vmatprep.mubr.f32.mxu0 %v784
    %952 = vmatmul.mubr.f32.gmra.mxu0 %v782
    %v953 = vpop.f32.mrf.mxu0
    %v954 = vadd.f32 0.0, %v953
    %v955 = vpop.f32.mrf.mxu0
    %956 = vmatprep.mubr.f32.mxu0 %v790
    %957 = vmatmul.mubr.f32.gmra.mxu0 %v788
    %v958 = vpop.f32.mrf.mxu0
    %v959 = vadd.f32 0.0, %v958
    %v960 = vpop.f32.mrf.mxu0
    %961 = vdwg.mxu0
    %v962 = vxor.u32 %v944, 2147483648
    %v963 = vxor.u32 %v949, 2147483648
    %v964 = vxor.u32 %v954, 2147483648
    %v965 = vxor.u32 %v959, 2147483648
    %v966 = vmul.f32 %v962, 1.442695
    %v967 = vpow.pop %v966
    %v968 = vmul.f32 %v963, 1.442695
    %v969 = vpow.pop %v968
    %v970 = vmul.f32 %v964, 1.442695
    %v971 = vpow.pop %v970
    %v972 = vmul.f32 %v965, 1.442695
    %v973 = vpow.pop %v972
    %v974 = vadd.f32 %v967, 1.0
    %v975 = vadd.f32 %v969, 1.0
    %v976 = vadd.f32 %v971, 1.0
    %v977 = vadd.f32 %v973, 1.0
    %v978 = vrcp.pop %v974
    %v979 = vmul.f32 1.0, %v978
    %v980 = vrcp.pop %v975
    %v981 = vmul.f32 1.0, %v980
    %v982 = vrcp.pop %v976
    %v983 = vmul.f32 1.0, %v982
    %v984 = vrcp.pop %v977
    %v985 = vmul.f32 1.0, %v984
    %v986 = vmax.f32 %v979, 0.03
    %v987 = vmax.f32 %v981, 0.03
    %v988 = vmax.f32 %v983, 0.03
    %v989 = vmax.f32 %v985, 0.03
    %v990 = vmul.f32 %v986, %v598
    %v991 = vmul.f32 %v987, %v599
    %v992 = vmul.f32 %v988, %v600
    %v993 = vmul.f32 %v989, %v601
    %v994 = vadd.f32 %v990, %v602
    %v995 = vadd.f32 %v991, %v603
    %v996 = vadd.f32 %v992, %v604
    %v997 = vadd.f32 %v993, %v605
    %vm998 = vcmask 261120
    %v999 = vsel %vm998, %v994, 0.0
    %1000 = vadd.xlane.f32.xlu0 %v999
    %v1001 = vpop.xlane.xlu0 %1000
    %v1002 = vsel %vm998, %v995, 0.0
    %1003 = vadd.xlane.f32.xlu0 %v1002
    %v1004 = vpop.xlane.xlu0 %1003
    %v1005 = vsel %vm998, %v996, 0.0
    %1006 = vadd.xlane.f32.xlu0 %v1005
    %v1007 = vpop.xlane.xlu0 %1006
    %v1008 = vsel %vm998, %v997, 0.0
    %1009 = vadd.xlane.f32.xlu0 %v1008
    %v1010 = vpop.xlane.xlu0 %1009
    %v1011 = vrsqrt.pop %v1001
    %v1012 = vrsqrt.pop %v1004
    %v1013 = vrsqrt.pop %v1007
    %v1014 = vrsqrt.pop %v1010
    %v1015 = vmul.f32 %v1011, %v859
    %v1016 = vmul.f32 %v1012, %v864
    %v1017 = vmul.f32 %v1013, %v869
    %v1018 = vmul.f32 %v1014, %v874
    %v1020 = vsel %vm998, %v994, 0
    %v1023 = vsel %vm998, %v995, 0
    %v1026 = vsel %vm998, %v996, 0
    %v1029 = vsel %vm998, %v997, 0
    %1031 = vmatprep.subr.mxu0 0.0
    %1032 = vmatpush1.msra.mxu0 0.0
    %1033 = vmatprep.subr.mxu0 0.0
    %1034 = vmatpush1.msra.mxu0 0.0
    %1035 = vmatprep.subr.mxu0 0.0
    %1036 = vmatpush1.msra.mxu0 0.0
    %1037 = vmatprep.subr.mxu0 0.0
    %1038 = vmatpush1.msra.mxu0 0.0
    %1039 = vmatprep.subr.mxu0 0.0
    %1040 = vmatpush1.msra.mxu0 0.0
    %1041 = vmatprep.subr.mxu0 0.0
    %1042 = vmatpush1.msra.mxu0 0.0
    %1043 = vmatprep.subr.mxu0 0.0
    %1044 = vmatpush1.msra.mxu0 0.0
    %1045 = vmatprep.subr.mxu0 0.0
    %1046 = vmatpush1.msra.mxu0 0.0
    %1047 = vmatprep.subr.mxu0 0.0
    %1048 = vmatpush1.msra.mxu0 0.0
    %1049 = vmatprep.subr.mxu0 0.0
    %1050 = vmatpush1.msra.mxu0 0.0
    %1051 = vmatprep.subr.mxu0 0.0
    %1052 = vmatpush1.msra.mxu0 0.0
    %1053 = vmatprep.subr.mxu0 0.0
    %1054 = vmatpush1.msra.mxu0 0.0
    %1055 = vmatprep.subr.mxu0 0.0
    %1056 = vmatpush1.msra.mxu0 %v1018
    %1057 = vmatprep.subr.mxu0 0.0
    %1058 = vmatpush1.msra.mxu0 %v1017
    %1059 = vmatprep.subr.mxu0 0.0
    %1060 = vmatpush1.msra.mxu0 %v1016
    %1061 = vmatprep.subr.mxu0 0.0
    %1062 = vmatpush1.msra.mxu0 %v1015
    %1063 = vmatprep.subr.mxu0 0.0
    %1064 = vmatpush2.msra.mxu0 0.0
    %1065 = vmatprep.subr.mxu0 0.0
    %1066 = vmatpush2.msra.mxu0 0.0
    %1067 = vmatprep.subr.mxu0 0.0
    %1068 = vmatpush2.msra.mxu0 0.0
    %1069 = vmatprep.subr.mxu0 0.0
    %1070 = vmatpush2.msra.mxu0 0.0
    %1071 = vmatprep.subr.mxu0 0.0
    %1072 = vmatpush2.msra.mxu0 0.0
    %1073 = vmatprep.subr.mxu0 0.0
    %1074 = vmatpush2.msra.mxu0 0.0
    %1075 = vmatprep.subr.mxu0 0.0
    %1076 = vmatpush2.msra.mxu0 0.0
    %1077 = vmatprep.subr.mxu0 0.0
    %1078 = vmatpush2.msra.mxu0 0.0
    %1079 = vmatprep.subr.mxu0 0.0
    %1080 = vmatpush2.msra.mxu0 0.0
    %1081 = vmatprep.subr.mxu0 0.0
    %1082 = vmatpush2.msra.mxu0 0.0
    %1083 = vmatprep.subr.mxu0 0.0
    %1084 = vmatpush2.msra.mxu0 0.0
    %1085 = vmatprep.subr.mxu0 0.0
    %1086 = vmatpush2.msra.mxu0 0.0
    %1087 = vmatprep.subr.mxu0 0.0
    %1088 = vmatpush2.msra.mxu0 0.0
    %1089 = vmatprep.subr.mxu0 0.0
    %1090 = vmatpush2.msra.mxu0 0.0
    %1091 = vmatprep.subr.mxu0 0.0
    %1092 = vmatpush2.msra.mxu0 0.0
    %1093 = vmatprep.subr.mxu0 0.0
    %1094 = vmatpush2.msra.mxu0 0.0
    %1095 = vmatprep.mubr.f32.mxu0 0.0
    %1096 = vmatmul.mubr.f32.gmra.mxu0 %v1020
    %v1097 = vpop.f32.mrf.mxu0
    %v1098 = vadd.f32 0.0, %v1097
    %v1099 = vpop.f32.mrf.mxu0
    %1100 = vmatprep.mubr.f32.mxu0 0.0
    %1101 = vmatmul.mubr.f32.gmra.mxu0 %v1023
    %v1102 = vpop.f32.mrf.mxu0
    %v1103 = vadd.f32 0.0, %v1102
    %v1104 = vpop.f32.mrf.mxu0
    %1105 = vmatprep.mubr.f32.mxu0 0.0
    %1106 = vmatmul.mubr.f32.gmra.mxu0 %v1026
    %v1107 = vpop.f32.mrf.mxu0
    %v1108 = vadd.f32 0.0, %v1107
    %v1109 = vpop.f32.mrf.mxu0
    %1110 = vmatprep.mubr.f32.mxu0 0.0
    %1111 = vmatmul.mubr.f32.gmra.mxu0 %v1029
    %v1112 = vpop.f32.mrf.mxu0
    %v1113 = vadd.f32 0.0, %v1112
    %v1114 = vpop.f32.mrf.mxu0
    %1115 = vdwg.mxu0
    %v1116 = vmul.f32 %v1011, %v1098
    %v1117 = vmul.f32 %v1012, %v1103
    %v1118 = vmul.f32 %v1013, %v1108
    %v1119 = vmul.f32 %v1014, %v1113
    %vm1120 = vcmp.gt.f32.partialorder %v1116, 0.0
    %vm1121 = vcmp.gt.f32.partialorder %v1117, 0.0
    %vm1122 = vcmp.gt.f32.partialorder %v1118, 0.0
    %vm1123 = vcmp.gt.f32.partialorder %v1119, 0.0
    %v1124 = vmul.f32 %v1116, 0.01
    %v1125 = vmul.f32 %v1117, 0.01
    %v1126 = vmul.f32 %v1118, 0.01
    %v1127 = vmul.f32 %v1119, 0.01
    %v1128 = vsel %vm1120, %v1116, %v1124
    %v1129 = vsel %vm1121, %v1117, %v1125
    %v1130 = vsel %vm1122, %v1118, %v1126
    %v1131 = vsel %vm1123, %v1119, %v1127
    %v1132 = vld [vmem:[%s11] sm:$0x1]
    %v1133 = vld [vmem:[%s12] sm:$0x1]
    %v1134 = vld [vmem:[%s13] sm:$0xff]
    %v1135 = vld [vmem:[%s13 + $0x8] sm:$0xff]
    %v1136 = vld [vmem:[%s13 + $0x10] sm:$0xff]
    %v1137 = vld [vmem:[%s13 + $0x18] sm:$0xff]
    %v1138 = vld [vmem:[%s13 + $0x20] sm:$0xff]
    %v1139 = vld [vmem:[%s13 + $0x28] sm:$0xff]
    %v1140 = vld [vmem:[%s13 + $0x30] sm:$0xff]
    %v1141 = vld [vmem:[%s13 + $0x38] sm:$0xff]
    %v1142 = vld [vmem:[%s13 + $0x40] sm:$0xff]
    %v1143 = vld [vmem:[%s13 + $0x48] sm:$0xff]
    %v1144 = vld [vmem:[%s13 + $0x50] sm:$0xff]
    %v1145 = vld [vmem:[%s13 + $0x58] sm:$0xff]
    %v1146 = vld [vmem:[%s13 + $0x60] sm:$0xff]
    %v1147 = vld [vmem:[%s13 + $0x68] sm:$0xff]
    %v1148 = vld [vmem:[%s13 + $0x70] sm:$0xff]
    %v1149 = vld [vmem:[%s13 + $0x78] sm:$0xff]
    %v1150 = vld [vmem:[%s13 + $0x80] sm:$0xff]
    %v1151 = vld [vmem:[%s13 + $0x88] sm:$0xff]
    %v1152 = vld [vmem:[%s13 + $0x90] sm:$0xff]
    %v1153 = vld [vmem:[%s13 + $0x98] sm:$0xff]
    %v1154 = vld [vmem:[%s13 + $0xa0] sm:$0xff]
    %v1155 = vld [vmem:[%s13 + $0xa8] sm:$0xff]
    %v1156 = vld [vmem:[%s13 + $0xb0] sm:$0xff]
    %v1157 = vld [vmem:[%s13 + $0xb8] sm:$0xff]
    %v1158 = vld [vmem:[%s13 + $0xc0] sm:$0xff]
    %v1159 = vld [vmem:[%s13 + $0xc8] sm:$0xff]
    %v1160 = vld [vmem:[%s13 + $0xd0] sm:$0xff]
    %v1161 = vld [vmem:[%s13 + $0xd8] sm:$0xff]
    %v1162 = vld [vmem:[%s13 + $0xe0] sm:$0xff]
    %v1163 = vld [vmem:[%s13 + $0xe8] sm:$0xff]
    %v1164 = vld [vmem:[%s13 + $0xf0] sm:$0xff]
    %v1165 = vld [vmem:[%s13 + $0xf8] sm:$0xff]
    %v1166 = vld [vmem:[%s13 + $0x100] sm:$0xff]
    %v1167 = vld [vmem:[%s13 + $0x108] sm:$0xff]
    %v1168 = vld [vmem:[%s13 + $0x110] sm:$0xff]
    %v1169 = vld [vmem:[%s13 + $0x118] sm:$0xff]
    %v1170 = vld [vmem:[%s13 + $0x120] sm:$0xff]
    %v1171 = vld [vmem:[%s13 + $0x128] sm:$0xff]
    %v1172 = vld [vmem:[%s13 + $0x130] sm:$0xff]
    %v1173 = vld [vmem:[%s13 + $0x138] sm:$0xff]
    %v1174 = vld [vmem:[%s13 + $0x140] sm:$0xff]
    %v1175 = vld [vmem:[%s13 + $0x148] sm:$0xff]
    %v1176 = vld [vmem:[%s13 + $0x150] sm:$0xff]
    %v1177 = vld [vmem:[%s13 + $0x158] sm:$0xff]
    %v1178 = vld [vmem:[%s13 + $0x160] sm:$0xff]
    %v1179 = vld [vmem:[%s13 + $0x168] sm:$0xff]
    %v1180 = vld [vmem:[%s13 + $0x170] sm:$0xff]
    %v1181 = vld [vmem:[%s13 + $0x178] sm:$0xff]
    %v1182 = vld [vmem:[%s14] sm:$0x7]
    %v1183 = vadd.f32 %v1128, %v1129
    %v1184 = vadd.f32 %v1183, %v1130
    %v1185 = vadd.f32 %v1184, %v1131
    %v1186 = vrot.slane %v1185, 4
    %v1187 = vadd.f32 %v1185, %v1186
    %v1188 = vrot.slane %v1187, 2
    %v1189 = vadd.f32 %v1187, %v1188
    %v1190 = vrot.slane %v1189, 1
    %v1191 = vadd.f32 %v1189, %v1190
    %v1192 = vmul.f32 %v1191, %v625
    %v1193 = vsub.f32 %v1128, %v1192
    %v1194 = vsub.f32 %v1129, %v1192
    %v1195 = vsub.f32 %v1130, %v1192
    %v1196 = vsub.f32 %v1131, %v1192
    %v1197 = vmul.f32 %v1193, %v1193
    %v1198 = vmul.f32 %v1194, %v1194
    %v1199 = vmul.f32 %v1195, %v1195
    %v1200 = vmul.f32 %v1196, %v1196
    %v1201 = vadd.f32 %v1197, %v1198
    %v1202 = vadd.f32 %v1201, %v1199
    %v1203 = vadd.f32 %v1202, %v1200
    %v1204 = vrot.slane %v1203, 4
    %v1205 = vadd.f32 %v1203, %v1204
    %v1206 = vrot.slane %v1205, 2
    %v1207 = vadd.f32 %v1205, %v1206
    %v1208 = vrot.slane %v1207, 1
    %v1209 = vadd.f32 %v1207, %v1208
    %v1210 = vmul.f32 %v1209, %v625
    %v1211 = vadd.f32 %v1210, 1e-05
    %v1212 = vrsqrt.pop %v1211
    %v1213 = vmul.f32 %v1193, %v1212
    %v1214 = vmul.f32 %v1194, %v1212
    %v1215 = vmul.f32 %v1195, %v1212
    %v1216 = vmul.f32 %v1196, %v1212
    %v1218 = vlaneseq
    %v1219 = vshrl.u32 %v1218, 7
    %v1220 = vsub.s32 0, %v1219
    %v1221 = vrot.slane %v1132, %v1220
    %v1223 = vmul.f32 %v1213, %v1221
    %v1224 = vmul.f32 %v1214, %v1221
    %v1225 = vmul.f32 %v1215, %v1221
    %v1226 = vmul.f32 %v1216, %v1221
    %v1228 = vlaneseq
    %v1229 = vshrl.u32 %v1228, 7
    %v1230 = vsub.s32 0, %v1229
    %v1231 = vrot.slane %v1133, %v1230
    %v1233 = vadd.f32 %v1223, %v1231
    %v1234 = vadd.f32 %v1224, %v1231
    %v1235 = vadd.f32 %v1225, %v1231
    %v1236 = vadd.f32 %v1226, %v1231
    %v1238 = vlaneseq
    %v1239 = vshrl.u32 %v1238, 7
    %v1240 = vsub.s32 0, %v1239
    %v1241 = vrot.slane %v1182, %v1240
    %v1242 = vlaneseq
    %v1243 = vshrl.u32 %v1242, 7
    %v1244 = vsub.s32 1, %v1243
    %v1245 = vrot.slane %v1182, %v1244
    %v1246 = vlaneseq
    %v1247 = vshrl.u32 %v1246, 7
    %v1248 = vsub.s32 2, %v1247
    %v1249 = vrot.slane %v1182, %v1248
    %1253 = vmatprep.subr.mxu0 %v1180
    %1254 = vmatpush1.msra.mxu0 %v1179
    %1255 = vmatprep.subr.mxu0 %v1177
    %1256 = vmatpush1.msra.mxu0 %v1176
    %1257 = vmatprep.subr.mxu0 %v1174
    %1258 = vmatpush1.msra.mxu0 %v1173
    %1259 = vmatprep.subr.mxu0 %v1171
    %1260 = vmatpush1.msra.mxu0 %v1170
    %1261 = vmatprep.subr.mxu0 %v1168
    %1262 = vmatpush1.msra.mxu0 %v1167
    %1263 = vmatprep.subr.mxu0 %v1165
    %1264 = vmatpush1.msra.mxu0 %v1164
    %1265 = vmatprep.subr.mxu0 %v1162
    %1266 = vmatpush1.msra.mxu0 %v1161
    %1267 = vmatprep.subr.mxu0 %v1159
    %1268 = vmatpush1.msra.mxu0 %v1158
    %1269 = vmatprep.subr.mxu0 %v1156
    %1270 = vmatpush1.msra.mxu0 %v1155
    %1271 = vmatprep.subr.mxu0 %v1153
    %1272 = vmatpush1.msra.mxu0 %v1152
    %1273 = vmatprep.subr.mxu0 %v1150
    %1274 = vmatpush1.msra.mxu0 %v1149
    %1275 = vmatprep.subr.mxu0 %v1147
    %1276 = vmatpush1.msra.mxu0 %v1146
    %1277 = vmatprep.subr.mxu0 %v1144
    %1278 = vmatpush1.msra.mxu0 %v1143
    %1279 = vmatprep.subr.mxu0 %v1141
    %1280 = vmatpush1.msra.mxu0 %v1140
    %1281 = vmatprep.subr.mxu0 %v1138
    %1282 = vmatpush1.msra.mxu0 %v1137
    %1283 = vmatprep.subr.mxu0 %v1135
    %1284 = vmatpush1.msra.mxu0 %v1134
    %1285 = vmatprep.subr.mxu0 0.0
    %1286 = vmatpush2.msra.mxu0 0.0
    %1287 = vmatprep.subr.mxu0 0.0
    %1288 = vmatpush2.msra.mxu0 0.0
    %1289 = vmatprep.subr.mxu0 0.0
    %1290 = vmatpush2.msra.mxu0 0.0
    %1291 = vmatprep.subr.mxu0 0.0
    %1292 = vmatpush2.msra.mxu0 0.0
    %1293 = vmatprep.subr.mxu0 0.0
    %1294 = vmatpush2.msra.mxu0 0.0
    %1295 = vmatprep.subr.mxu0 0.0
    %1296 = vmatpush2.msra.mxu0 0.0
    %1297 = vmatprep.subr.mxu0 0.0
    %1298 = vmatpush2.msra.mxu0 0.0
    %1299 = vmatprep.subr.mxu0 0.0
    %1300 = vmatpush2.msra.mxu0 0.0
    %1301 = vmatprep.subr.mxu0 0.0
    %1302 = vmatpush2.msra.mxu0 0.0
    %1303 = vmatprep.subr.mxu0 0.0
    %1304 = vmatpush2.msra.mxu0 0.0
    %1305 = vmatprep.subr.mxu0 0.0
    %1306 = vmatpush2.msra.mxu0 0.0
    %1307 = vmatprep.subr.mxu0 0.0
    %1308 = vmatpush2.msra.mxu0 0.0
    %1309 = vmatprep.subr.mxu0 0.0
    %1310 = vmatpush2.msra.mxu0 0.0
    %1311 = vmatprep.subr.mxu0 0.0
    %1312 = vmatpush2.msra.mxu0 0.0
    %1313 = vmatprep.subr.mxu0 0.0
    %1314 = vmatpush2.msra.mxu0 0.0
    %1315 = vmatprep.subr.mxu0 0.0
    %1316 = vmatpush2.msra.mxu0 0.0
    %1317 = vmatprep.mubr.f32.mxu0 0.0
    %1318 = vmatmul.mubr.f32.gmra.mxu0 %v1233
    %v1319 = vpop.f32.mrf.mxu0
    %v1320 = vadd.f32 %v1241, %v1319
    %v1321 = vpop.f32.mrf.mxu0
    %v1322 = vadd.f32 %v1245, %v1321
    %1323 = vmatprep.mubr.f32.mxu0 0.0
    %1324 = vmatmul.mubr.f32.gmra.mxu0 %v1234
    %v1325 = vpop.f32.mrf.mxu0
    %v1326 = vadd.f32 %v1241, %v1325
    %v1327 = vpop.f32.mrf.mxu0
    %v1328 = vadd.f32 %v1245, %v1327
    %1329 = vmatprep.mubr.f32.mxu0 0.0
    %1330 = vmatmul.mubr.f32.gmra.mxu0 %v1235
    %v1331 = vpop.f32.mrf.mxu0
    %v1332 = vadd.f32 %v1241, %v1331
    %v1333 = vpop.f32.mrf.mxu0
    %v1334 = vadd.f32 %v1245, %v1333
    %1335 = vmatprep.mubr.f32.mxu0 0.0
    %1336 = vmatmul.mubr.f32.gmra.mxu0 %v1236
    %v1337 = vpop.f32.mrf.mxu0
    %v1338 = vadd.f32 %v1241, %v1337
    %v1339 = vpop.f32.mrf.mxu0
    %v1340 = vadd.f32 %v1245, %v1339
    %1341 = vdwg.mxu0
    %1342 = vmatprep.subr.mxu0 0.0
    %1343 = vmatpush1.msra.mxu0 %v1181
    %1344 = vmatprep.subr.mxu0 0.0
    %1345 = vmatpush1.msra.mxu0 %v1178
    %1346 = vmatprep.subr.mxu0 0.0
    %1347 = vmatpush1.msra.mxu0 %v1175
    %1348 = vmatprep.subr.mxu0 0.0
    %1349 = vmatpush1.msra.mxu0 %v1172
    %1350 = vmatprep.subr.mxu0 0.0
    %1351 = vmatpush1.msra.mxu0 %v1169
    %1352 = vmatprep.subr.mxu0 0.0
    %1353 = vmatpush1.msra.mxu0 %v1166
    %1354 = vmatprep.subr.mxu0 0.0
    %1355 = vmatpush1.msra.mxu0 %v1163
    %1356 = vmatprep.subr.mxu0 0.0
    %1357 = vmatpush1.msra.mxu0 %v1160
    %1358 = vmatprep.subr.mxu0 0.0
    %1359 = vmatpush1.msra.mxu0 %v1157
    %1360 = vmatprep.subr.mxu0 0.0
    %1361 = vmatpush1.msra.mxu0 %v1154
    %1362 = vmatprep.subr.mxu0 0.0
    %1363 = vmatpush1.msra.mxu0 %v1151
    %1364 = vmatprep.subr.mxu0 0.0
    %1365 = vmatpush1.msra.mxu0 %v1148
    %1366 = vmatprep.subr.mxu0 0.0
    %1367 = vmatpush1.msra.mxu0 %v1145
    %1368 = vmatprep.subr.mxu0 0.0
    %1369 = vmatpush1.msra.mxu0 %v1142
    %1370 = vmatprep.subr.mxu0 0.0
    %1371 = vmatpush1.msra.mxu0 %v1139
    %1372 = vmatprep.subr.mxu0 0.0
    %1373 = vmatpush1.msra.mxu0 %v1136
    %1374 = vmatprep.subr.mxu0 0.0
    %1375 = vmatpush2.msra.mxu0 0.0
    %1376 = vmatprep.subr.mxu0 0.0
    %1377 = vmatpush2.msra.mxu0 0.0
    %1378 = vmatprep.subr.mxu0 0.0
    %1379 = vmatpush2.msra.mxu0 0.0
    %1380 = vmatprep.subr.mxu0 0.0
    %1381 = vmatpush2.msra.mxu0 0.0
    %1382 = vmatprep.subr.mxu0 0.0
    %1383 = vmatpush2.msra.mxu0 0.0
    %1384 = vmatprep.subr.mxu0 0.0
    %1385 = vmatpush2.msra.mxu0 0.0
    %1386 = vmatprep.subr.mxu0 0.0
    %1387 = vmatpush2.msra.mxu0 0.0
    %1388 = vmatprep.subr.mxu0 0.0
    %1389 = vmatpush2.msra.mxu0 0.0
    %1390 = vmatprep.subr.mxu0 0.0
    %1391 = vmatpush2.msra.mxu0 0.0
    %1392 = vmatprep.subr.mxu0 0.0
    %1393 = vmatpush2.msra.mxu0 0.0
    %1394 = vmatprep.subr.mxu0 0.0
    %1395 = vmatpush2.msra.mxu0 0.0
    %1396 = vmatprep.subr.mxu0 0.0
    %1397 = vmatpush2.msra.mxu0 0.0
    %1398 = vmatprep.subr.mxu0 0.0
    %1399 = vmatpush2.msra.mxu0 0.0
    %1400 = vmatprep.subr.mxu0 0.0
    %1401 = vmatpush2.msra.mxu0 0.0
    %1402 = vmatprep.subr.mxu0 0.0
    %1403 = vmatpush2.msra.mxu0 0.0
    %1404 = vmatprep.subr.mxu0 0.0
    %1405 = vmatpush2.msra.mxu0 0.0
    %1406 = vmatprep.mubr.f32.mxu0 0.0
    %1407 = vmatmul.mubr.f32.gmra.mxu0 %v1233
    %v1408 = vpop.f32.mrf.mxu0
    %v1409 = vadd.f32 %v1249, %v1408
    %v1410 = vpop.f32.mrf.mxu0
    %1411 = vmatprep.mubr.f32.mxu0 0.0
    %1412 = vmatmul.mubr.f32.gmra.mxu0 %v1234
    %v1413 = vpop.f32.mrf.mxu0
    %v1414 = vadd.f32 %v1249, %v1413
    %v1415 = vpop.f32.mrf.mxu0
    %1416 = vmatprep.mubr.f32.mxu0 0.0
    %1417 = vmatmul.mubr.f32.gmra.mxu0 %v1235
    %v1418 = vpop.f32.mrf.mxu0
    %v1419 = vadd.f32 %v1249, %v1418
    %v1420 = vpop.f32.mrf.mxu0
    %1421 = vmatprep.mubr.f32.mxu0 0.0
    %1422 = vmatmul.mubr.f32.gmra.mxu0 %v1236
    %v1423 = vpop.f32.mrf.mxu0
    %v1424 = vadd.f32 %v1249, %v1423
    %v1425 = vpop.f32.mrf.mxu0
    %1426 = vdwg.mxu0
    %1427 = vmatprep.subr.mxu0 0.0
    %1428 = vmatpush1.xpose.msra.mxu0 0.0
    %1429 = vmatprep.subr.mxu0 0.0
    %1430 = vmatpush1.xpose.msra.mxu0 0.0
    %1431 = vmatprep.subr.mxu0 0.0
    %1432 = vmatpush1.xpose.msra.mxu0 0.0
    %1433 = vmatprep.subr.mxu0 0.0
    %1434 = vmatpush1.xpose.msra.mxu0 0.0
    %1435 = vmatprep.subr.mxu0 0.0
    %1436 = vmatpush1.xpose.msra.mxu0 0.0
    %1437 = vmatprep.subr.mxu0 0.0
    %1438 = vmatpush1.xpose.msra.mxu0 0.0
    %1439 = vmatprep.subr.mxu0 0.0
    %1440 = vmatpush1.xpose.msra.mxu0 0.0
    %1441 = vmatprep.subr.mxu0 0.0
    %1442 = vmatpush1.xpose.msra.mxu0 0.0
    %1443 = vmatprep.subr.mxu0 0.0
    %1444 = vmatpush1.xpose.msra.mxu0 0.0
    %1445 = vmatprep.subr.mxu0 0.0
    %1446 = vmatpush1.xpose.msra.mxu0 0.0
    %1447 = vmatprep.subr.mxu0 0.0
    %1448 = vmatpush1.xpose.msra.mxu0 0.0
    %1449 = vmatprep.subr.mxu0 0.0
    %1450 = vmatpush1.xpose.msra.mxu0 0.0
    %1451 = vmatprep.subr.mxu0 %v1340
    %1452 = vmatpush1.xpose.msra.mxu0 %v1338
    %1453 = vmatprep.subr.mxu0 %v1334
    %1454 = vmatpush1.xpose.msra.mxu0 %v1332
    %1455 = vmatprep.subr.mxu0 %v1328
    %1456 = vmatpush1.xpose.msra.mxu0 %v1326
    %1457 = vmatprep.subr.mxu0 %v1322
    %1458 = vmatpush1.xpose.msra.mxu0 %v1320
    %1459 = vmatprep.subr.mxu0 0.0
    %1460 = vmatpush2.xpose.msra.mxu0 0.0
    %1461 = vmatprep.subr.mxu0 0.0
    %1462 = vmatpush2.xpose.msra.mxu0 0.0
    %1463 = vmatprep.subr.mxu0 0.0
    %1464 = vmatpush2.xpose.msra.mxu0 0.0
    %1465 = vmatprep.subr.mxu0 0.0
    %1466 = vmatpush2.xpose.msra.mxu0 0.0
    %1467 = vmatprep.subr.mxu0 0.0
    %1468 = vmatpush2.xpose.msra.mxu0 0.0
    %1469 = vmatprep.subr.mxu0 0.0
    %1470 = vmatpush2.xpose.msra.mxu0 0.0
    %1471 = vmatprep.subr.mxu0 0.0
    %1472 = vmatpush2.xpose.msra.mxu0 0.0
    %1473 = vmatprep.subr.mxu0 0.0
    %1474 = vmatpush2.xpose.msra.mxu0 0.0
    %1475 = vmatprep.subr.mxu0 0.0
    %1476 = vmatpush2.xpose.msra.mxu0 0.0
    %1477 = vmatprep.subr.mxu0 0.0
    %1478 = vmatpush2.xpose.msra.mxu0 0.0
    %1479 = vmatprep.subr.mxu0 0.0
    %1480 = vmatpush2.xpose.msra.mxu0 0.0
    %1481 = vmatprep.subr.mxu0 0.0
    %1482 = vmatpush2.xpose.msra.mxu0 0.0
    %1483 = vmatprep.subr.mxu0 0.0
    %1484 = vmatpush2.xpose.msra.mxu0 0.0
    %1485 = vmatprep.subr.mxu0 0.0
    %1486 = vmatpush2.xpose.msra.mxu0 0.0
    %1487 = vmatprep.subr.mxu0 0.0
    %1488 = vmatpush2.xpose.msra.mxu0 0.0
    %1489 = vmatprep.subr.mxu0 0.0
    %1490 = vmatpush2.xpose.msra.mxu0 0.0
    %1491 = vmatprep.mubr.f32.mxu0 %v1322
    %1492 = vmatmul.mubr.f32.gmra.mxu0 %v1320
    %v1493 = vpop.f32.mrf.mxu0
    %v1494 = vadd.f32 0.0, %v1493
    %v1495 = vpop.f32.mrf.mxu0
    %1496 = vmatprep.mubr.f32.mxu0 %v1328
    %1497 = vmatmul.mubr.f32.gmra.mxu0 %v1326
    %v1498 = vpop.f32.mrf.mxu0
    %v1499 = vadd.f32 0.0, %v1498
    %v1500 = vpop.f32.mrf.mxu0
    %1501 = vmatprep.mubr.f32.mxu0 %v1334
    %1502 = vmatmul.mubr.f32.gmra.mxu0 %v1332
    %v1503 = vpop.f32.mrf.mxu0
    %v1504 = vadd.f32 0.0, %v1503
    %v1505 = vpop.f32.mrf.mxu0
    %1506 = vmatprep.mubr.f32.mxu0 %v1340
    %1507 = vmatmul.mubr.f32.gmra.mxu0 %v1338
    %v1508 = vpop.f32.mrf.mxu0
    %v1509 = vadd.f32 0.0, %v1508
    %v1510 = vpop.f32.mrf.mxu0
    %1511 = vdwg.mxu0
    %v1512 = vxor.u32 %v1494, 2147483648
    %v1513 = vxor.u32 %v1499, 2147483648
    %v1514 = vxor.u32 %v1504, 2147483648
    %v1515 = vxor.u32 %v1509, 2147483648
    %v1516 = vmul.f32 %v1512, 1.442695
    %v1517 = vpow.pop %v1516
    %v1518 = vmul.f32 %v1513, 1.442695
    %v1519 = vpow.pop %v1518
    %v1520 = vmul.f32 %v1514, 1.442695
    %v1521 = vpow.pop %v1520
    %v1522 = vmul.f32 %v1515, 1.442695
    %v1523 = vpow.pop %v1522
    %v1524 = vadd.f32 %v1517, 1.0
    %v1525 = vadd.f32 %v1519, 1.0
    %v1526 = vadd.f32 %v1521, 1.0
    %v1527 = vadd.f32 %v1523, 1.0
    %v1528 = vrcp.pop %v1524
    %v1529 = vmul.f32 1.0, %v1528
    %v1530 = vrcp.pop %v1525
    %v1531 = vmul.f32 1.0, %v1530
    %v1532 = vrcp.pop %v1526
    %v1533 = vmul.f32 1.0, %v1532
    %v1534 = vrcp.pop %v1527
    %v1535 = vmul.f32 1.0, %v1534
    %v1536 = vmax.f32 %v1529, 0.03
    %v1537 = vmax.f32 %v1531, 0.03
    %v1538 = vmax.f32 %v1533, 0.03
    %v1539 = vmax.f32 %v1535, 0.03
    %v1540 = vmul.f32 %v1536, %v598
    %v1541 = vmul.f32 %v1537, %v599
    %v1542 = vmul.f32 %v1538, %v600
    %v1543 = vmul.f32 %v1539, %v601
    %v1544 = vadd.f32 %v1540, %v602
    %v1545 = vadd.f32 %v1541, %v603
    %v1546 = vadd.f32 %v1542, %v604
    %v1547 = vadd.f32 %v1543, %v605
    %v1548 = vsel %vm998, %v1544, 0.0
    %1549 = vadd.xlane.f32.xlu0 %v1548
    %v1550 = vpop.xlane.xlu0 %1549
    %v1551 = vsel %vm998, %v1545, 0.0
    %1552 = vadd.xlane.f32.xlu0 %v1551
    %v1553 = vpop.xlane.xlu0 %1552
    %v1554 = vsel %vm998, %v1546, 0.0
    %1555 = vadd.xlane.f32.xlu0 %v1554
    %v1556 = vpop.xlane.xlu0 %1555
    %v1557 = vsel %vm998, %v1547, 0.0
    %1558 = vadd.xlane.f32.xlu0 %v1557
    %v1559 = vpop.xlane.xlu0 %1558
    %v1560 = vrsqrt.pop %v1550
    %v1561 = vrsqrt.pop %v1553
    %v1562 = vrsqrt.pop %v1556
    %v1563 = vrsqrt.pop %v1559
    %v1564 = vmul.f32 %v1560, %v1409
    %v1565 = vmul.f32 %v1561, %v1414
    %v1566 = vmul.f32 %v1562, %v1419
    %v1567 = vmul.f32 %v1563, %v1424
    %v1569 = vsel %vm998, %v1544, 0
    %v1572 = vsel %vm998, %v1545, 0
    %v1575 = vsel %vm998, %v1546, 0
    %v1578 = vsel %vm998, %v1547, 0
    %1580 = vmatprep.subr.mxu0 0.0
    %1581 = vmatpush1.msra.mxu0 0.0
    %1582 = vmatprep.subr.mxu0 0.0
    %1583 = vmatpush1.msra.mxu0 0.0
    %1584 = vmatprep.subr.mxu0 0.0
    %1585 = vmatpush1.msra.mxu0 0.0
    %1586 = vmatprep.subr.mxu0 0.0
    %1587 = vmatpush1.msra.mxu0 0.0
    %1588 = vmatprep.subr.mxu0 0.0
    %1589 = vmatpush1.msra.mxu0 0.0
    %1590 = vmatprep.subr.mxu0 0.0
    %1591 = vmatpush1.msra.mxu0 0.0
    %1592 = vmatprep.subr.mxu0 0.0
    %1593 = vmatpush1.msra.mxu0 0.0
    %1594 = vmatprep.subr.mxu0 0.0
    %1595 = vmatpush1.msra.mxu0 0.0
    %1596 = vmatprep.subr.mxu0 0.0
    %1597 = vmatpush1.msra.mxu0 0.0
    %1598 = vmatprep.subr.mxu0 0.0
    %1599 = vmatpush1.msra.mxu0 0.0
    %1600 = vmatprep.subr.mxu0 0.0
    %1601 = vmatpush1.msra.mxu0 0.0
    %1602 = vmatprep.subr.mxu0 0.0
    %1603 = vmatpush1.msra.mxu0 0.0
    %1604 = vmatprep.subr.mxu0 0.0
    %1605 = vmatpush1.msra.mxu0 %v1567
    %1606 = vmatprep.subr.mxu0 0.0
    %1607 = vmatpush1.msra.mxu0 %v1566
    %1608 = vmatprep.subr.mxu0 0.0
    %1609 = vmatpush1.msra.mxu0 %v1565
    %1610 = vmatprep.subr.mxu0 0.0
    %1611 = vmatpush1.msra.mxu0 %v1564
    %1612 = vmatprep.subr.mxu0 0.0
    %1613 = vmatpush2.msra.mxu0 0.0
    %1614 = vmatprep.subr.mxu0 0.0
    %1615 = vmatpush2.msra.mxu0 0.0
    %1616 = vmatprep.subr.mxu0 0.0
    %1617 = vmatpush2.msra.mxu0 0.0
    %1618 = vmatprep.subr.mxu0 0.0
    %1619 = vmatpush2.msra.mxu0 0.0
    %1620 = vmatprep.subr.mxu0 0.0
    %1621 = vmatpush2.msra.mxu0 0.0
    %1622 = vmatprep.subr.mxu0 0.0
    %1623 = vmatpush2.msra.mxu0 0.0
    %1624 = vmatprep.subr.mxu0 0.0
    %1625 = vmatpush2.msra.mxu0 0.0
    %1626 = vmatprep.subr.mxu0 0.0
    %1627 = vmatpush2.msra.mxu0 0.0
    %1628 = vmatprep.subr.mxu0 0.0
    %1629 = vmatpush2.msra.mxu0 0.0
    %1630 = vmatprep.subr.mxu0 0.0
    %1631 = vmatpush2.msra.mxu0 0.0
    %1632 = vmatprep.subr.mxu0 0.0
    %1633 = vmatpush2.msra.mxu0 0.0
    %1634 = vmatprep.subr.mxu0 0.0
    %1635 = vmatpush2.msra.mxu0 0.0
    %1636 = vmatprep.subr.mxu0 0.0
    %1637 = vmatpush2.msra.mxu0 0.0
    %1638 = vmatprep.subr.mxu0 0.0
    %1639 = vmatpush2.msra.mxu0 0.0
    %1640 = vmatprep.subr.mxu0 0.0
    %1641 = vmatpush2.msra.mxu0 0.0
    %1642 = vmatprep.subr.mxu0 0.0
    %1643 = vmatpush2.msra.mxu0 0.0
    %1644 = vmatprep.mubr.f32.mxu0 0.0
    %1645 = vmatmul.mubr.f32.gmra.mxu0 %v1569
    %v1646 = vpop.f32.mrf.mxu0
    %v1647 = vadd.f32 0.0, %v1646
    %v1648 = vpop.f32.mrf.mxu0
    %1649 = vmatprep.mubr.f32.mxu0 0.0
    %1650 = vmatmul.mubr.f32.gmra.mxu0 %v1572
    %v1651 = vpop.f32.mrf.mxu0
    %v1652 = vadd.f32 0.0, %v1651
    %v1653 = vpop.f32.mrf.mxu0
    %1654 = vmatprep.mubr.f32.mxu0 0.0
    %1655 = vmatmul.mubr.f32.gmra.mxu0 %v1575
    %v1656 = vpop.f32.mrf.mxu0
    %v1657 = vadd.f32 0.0, %v1656
    %v1658 = vpop.f32.mrf.mxu0
    %1659 = vmatprep.mubr.f32.mxu0 0.0
    %1660 = vmatmul.mubr.f32.gmra.mxu0 %v1578
    %v1661 = vpop.f32.mrf.mxu0
    %v1662 = vadd.f32 0.0, %v1661
    %v1663 = vpop.f32.mrf.mxu0
    %1664 = vdwg.mxu0
    %v1665 = vmul.f32 %v1560, %v1647
    %v1666 = vmul.f32 %v1561, %v1652
    %v1667 = vmul.f32 %v1562, %v1657
    %v1668 = vmul.f32 %v1563, %v1662
    %vm1669 = vcmp.gt.f32.partialorder %v1665, 0.0
    %vm1670 = vcmp.gt.f32.partialorder %v1666, 0.0
    %vm1671 = vcmp.gt.f32.partialorder %v1667, 0.0
    %vm1672 = vcmp.gt.f32.partialorder %v1668, 0.0
    %v1673 = vmul.f32 %v1665, 0.01
    %v1674 = vmul.f32 %v1666, 0.01
    %v1675 = vmul.f32 %v1667, 0.01
    %v1676 = vmul.f32 %v1668, 0.01
    %v1677 = vsel %vm1669, %v1665, %v1673
    %v1678 = vsel %vm1670, %v1666, %v1674
    %v1679 = vsel %vm1671, %v1667, %v1675
    %v1680 = vsel %vm1672, %v1668, %v1676
    %v1681 = vpack.c.bf16 %v1678, %v1677
    %v1682 = vpack.c.bf16 %v1680, %v1679
    %v1685 = vunpack.c.l.b16 %v1681
    %v1686 = vunpack.c.h.b16 %v1681
    %v1687 = vunpack.c.l.b16 %v1682
    %v1688 = vunpack.c.h.b16 %v1682
    %v1689 = vpack.c.b16 %v1685, %v1685
    %v1690 = vpack.c.b16 %v1686, %v1686
    %v1691 = vpack.c.b16 %v1687, %v1687
    %v1692 = vpack.c.b16 %v1688, %v1688
    %vm1697 = vcmask 519168
    %1698 = vst.msk [vmem:[%s23] sm:$0xf] %vm1697, %v1689
    %1699 = vst.msk [vmem:[%s23 + $0x4] sm:$0xf] %vm1697, %v1690
    %1700 = vst.msk [vmem:[%s23 + $0x8] sm:$0xf] %vm1697, %v1691
    %1701 = vst.msk [vmem:[%s23 + $0xc] sm:$0xf] %vm1697, %v1692
    %v1702 = vld [vmem:[%s4] sm:$0xff]
    %v1703 = vld [vmem:[%s4 + $0x8] sm:$0xff]
    %v1704 = vld [vmem:[%s6] sm:$0xff]
    %v1705 = vld [vmem:[%s6 + $0x8] sm:$0xff]
    %v1706 = vld [vmem:[%s15] sm:$0x1]
    %v1707 = vld [vmem:[%s16] sm:$0x1]
    %v1708 = vld [vmem:[%s17] sm:$0xff]
    %v1709 = vld [vmem:[%s17 + $0x8] sm:$0xff]
    %v1710 = vld [vmem:[%s17 + $0x10] sm:$0xff]
    %v1711 = vld [vmem:[%s18] sm:$0x7]
    %v1712 = vsel %vm206, %v595, 0.0
    %v1713 = vsel %vm206, %v597, 0.0
    %v1714 = vadd.f32 %v1712, %v1713
    %v1715 = vrot.slane %v1714, 4
    %v1716 = vadd.f32 %v1714, %v1715
    %v1717 = vrot.slane %v1716, 2
    %v1718 = vadd.f32 %v1716, %v1717
    %v1719 = vrot.slane %v1718, 1
    %v1720 = vadd.f32 %v1718, %v1719
    %v1721 = vrcp.pop 16.0
    %v1722 = vmul.f32 %v1720, %v1721
    %v1723 = vsub.f32 %v595, %v1722
    %v1724 = vsub.f32 %v597, %v1722
    %v1725 = vmul.f32 %v1723, %v1723
    %v1726 = vmul.f32 %v1724, %v1724
    %v1727 = vsel %vm206, %v1725, 0.0
    %v1728 = vsel %vm206, %v1726, 0.0
    %v1729 = vadd.f32 %v1727, %v1728
    %v1730 = vrot.slane %v1729, 4
    %v1731 = vadd.f32 %v1729, %v1730
    %v1732 = vrot.slane %v1731, 2
    %v1733 = vadd.f32 %v1731, %v1732
    %v1734 = vrot.slane %v1733, 1
    %v1735 = vadd.f32 %v1733, %v1734
    %v1736 = vmul.f32 %v1735, %v1721
    %v1737 = vadd.f32 %v1736, 1e-05
    %v1738 = vrsqrt.pop %v1737
    %v1739 = vmul.f32 %v1723, %v1738
    %v1740 = vmul.f32 %v1724, %v1738
    %v1742 = vlaneseq
    %v1743 = vshrl.u32 %v1742, 7
    %v1744 = vsub.s32 0, %v1743
    %v1745 = vrot.slane %v1706, %v1744
    %v1747 = vmul.f32 %v1739, %v1745
    %v1748 = vmul.f32 %v1740, %v1745
    %v1750 = vlaneseq
    %v1751 = vshrl.u32 %v1750, 7
    %v1752 = vsub.s32 0, %v1751
    %v1753 = vrot.slane %v1707, %v1752
    %v1755 = vadd.f32 %v1747, %v1753
    %v1756 = vadd.f32 %v1748, %v1753
    %v1758 = vlaneseq
    %v1759 = vshrl.u32 %v1758, 7
    %v1760 = vsub.s32 0, %v1759
    %v1761 = vrot.slane %v1711, %v1760
    %v1762 = vlaneseq
    %v1763 = vshrl.u32 %v1762, 7
    %v1764 = vsub.s32 1, %v1763
    %v1765 = vrot.slane %v1711, %v1764
    %v1766 = vlaneseq
    %v1767 = vshrl.u32 %v1766, 7
    %v1768 = vsub.s32 2, %v1767
    %v1769 = vrot.slane %v1711, %v1768
    %v1774 = vsel %vm206, %v1755, 0
    %v1777 = vsel %vm206, %v1756, 0
    %1779 = vmatprep.subr.mxu0 0.0
    %1780 = vmatpush1.msra.mxu0 0.0
    %1781 = vmatprep.subr.mxu0 0.0
    %1782 = vmatpush1.msra.mxu0 0.0
    %1783 = vmatprep.subr.mxu0 0.0
    %1784 = vmatpush1.msra.mxu0 0.0
    %1785 = vmatprep.subr.mxu0 0.0
    %1786 = vmatpush1.msra.mxu0 0.0
    %1787 = vmatprep.subr.mxu0 0.0
    %1788 = vmatpush1.msra.mxu0 0.0
    %1789 = vmatprep.subr.mxu0 0.0
    %1790 = vmatpush1.msra.mxu0 0.0
    %1791 = vmatprep.subr.mxu0 0.0
    %1792 = vmatpush1.msra.mxu0 0.0
    %1793 = vmatprep.subr.mxu0 0.0
    %1794 = vmatpush1.msra.mxu0 0.0
    %1795 = vmatprep.subr.mxu0 0.0
    %1796 = vmatpush1.msra.mxu0 0.0
    %1797 = vmatprep.subr.mxu0 0.0
    %1798 = vmatpush1.msra.mxu0 0.0
    %1799 = vmatprep.subr.mxu0 0.0
    %1800 = vmatpush1.msra.mxu0 0.0
    %1801 = vmatprep.subr.mxu0 0.0
    %1802 = vmatpush1.msra.mxu0 0.0
    %1803 = vmatprep.subr.mxu0 0.0
    %1804 = vmatpush1.msra.mxu0 0.0
    %1805 = vmatprep.subr.mxu0 0.0
    %1806 = vmatpush1.msra.mxu0 0.0
    %1807 = vmatprep.subr.mxu0 0.0
    %1808 = vmatpush1.msra.mxu0 0.0
    %1809 = vmatprep.subr.mxu0 %v1709
    %1810 = vmatpush1.msra.mxu0 %v1708
    %1811 = vmatprep.subr.mxu0 0.0
    %1812 = vmatpush2.msra.mxu0 0.0
    %1813 = vmatprep.subr.mxu0 0.0
    %1814 = vmatpush2.msra.mxu0 0.0
    %1815 = vmatprep.subr.mxu0 0.0
    %1816 = vmatpush2.msra.mxu0 0.0
    %1817 = vmatprep.subr.mxu0 0.0
    %1818 = vmatpush2.msra.mxu0 0.0
    %1819 = vmatprep.subr.mxu0 0.0
    %1820 = vmatpush2.msra.mxu0 0.0
    %1821 = vmatprep.subr.mxu0 0.0
    %1822 = vmatpush2.msra.mxu0 0.0
    %1823 = vmatprep.subr.mxu0 0.0
    %1824 = vmatpush2.msra.mxu0 0.0
    %1825 = vmatprep.subr.mxu0 0.0
    %1826 = vmatpush2.msra.mxu0 0.0
    %1827 = vmatprep.subr.mxu0 0.0
    %1828 = vmatpush2.msra.mxu0 0.0
    %1829 = vmatprep.subr.mxu0 0.0
    %1830 = vmatpush2.msra.mxu0 0.0
    %1831 = vmatprep.subr.mxu0 0.0
    %1832 = vmatpush2.msra.mxu0 0.0
    %1833 = vmatprep.subr.mxu0 0.0
    %1834 = vmatpush2.msra.mxu0 0.0
    %1835 = vmatprep.subr.mxu0 0.0
    %1836 = vmatpush2.msra.mxu0 0.0
    %1837 = vmatprep.subr.mxu0 0.0
    %1838 = vmatpush2.msra.mxu0 0.0
    %1839 = vmatprep.subr.mxu0 0.0
    %1840 = vmatpush2.msra.mxu0 0.0
    %1841 = vmatprep.subr.mxu0 0.0
    %1842 = vmatpush2.msra.mxu0 0.0
    %1843 = vmatprep.mubr.f32.mxu0 0.0
    %1844 = vmatmul.mubr.f32.gmra.mxu0 %v1774
    %v1845 = vpop.f32.mrf.mxu0
    %v1846 = vadd.f32 %v1761, %v1845
    %v1847 = vpop.f32.mrf.mxu0
    %v1848 = vadd.f32 %v1765, %v1847
    %1849 = vmatprep.mubr.f32.mxu0 0.0
    %1850 = vmatmul.mubr.f32.gmra.mxu0 %v1777
    %v1851 = vpop.f32.mrf.mxu0
    %v1852 = vadd.f32 %v1761, %v1851
    %v1853 = vpop.f32.mrf.mxu0
    %v1854 = vadd.f32 %v1765, %v1853
    %1855 = vdwg.mxu0
    %1856 = vmatprep.subr.mxu0 0.0
    %1857 = vmatpush1.msra.mxu0 0.0
    %1858 = vmatprep.subr.mxu0 0.0
    %1859 = vmatpush1.msra.mxu0 0.0
    %1860 = vmatprep.subr.mxu0 0.0
    %1861 = vmatpush1.msra.mxu0 0.0
    %1862 = vmatprep.subr.mxu0 0.0
    %1863 = vmatpush1.msra.mxu0 0.0
    %1864 = vmatprep.subr.mxu0 0.0
    %1865 = vmatpush1.msra.mxu0 0.0
    %1866 = vmatprep.subr.mxu0 0.0
    %1867 = vmatpush1.msra.mxu0 0.0
    %1868 = vmatprep.subr.mxu0 0.0
    %1869 = vmatpush1.msra.mxu0 0.0
    %1870 = vmatprep.subr.mxu0 0.0
    %1871 = vmatpush1.msra.mxu0 0.0
    %1872 = vmatprep.subr.mxu0 0.0
    %1873 = vmatpush1.msra.mxu0 0.0
    %1874 = vmatprep.subr.mxu0 0.0
    %1875 = vmatpush1.msra.mxu0 0.0
    %1876 = vmatprep.subr.mxu0 0.0
    %1877 = vmatpush1.msra.mxu0 0.0
    %1878 = vmatprep.subr.mxu0 0.0
    %1879 = vmatpush1.msra.mxu0 0.0
    %1880 = vmatprep.subr.mxu0 0.0
    %1881 = vmatpush1.msra.mxu0 0.0
    %1882 = vmatprep.subr.mxu0 0.0
    %1883 = vmatpush1.msra.mxu0 0.0
    %1884 = vmatprep.subr.mxu0 0.0
    %1885 = vmatpush1.msra.mxu0 0.0
    %1886 = vmatprep.subr.mxu0 0.0
    %1887 = vmatpush1.msra.mxu0 %v1710
    %1888 = vmatprep.subr.mxu0 0.0
    %1889 = vmatpush2.msra.mxu0 0.0
    %1890 = vmatprep.subr.mxu0 0.0
    %1891 = vmatpush2.msra.mxu0 0.0
    %1892 = vmatprep.subr.mxu0 0.0
    %1893 = vmatpush2.msra.mxu0 0.0
    %1894 = vmatprep.subr.mxu0 0.0
    %1895 = vmatpush2.msra.mxu0 0.0
    %1896 = vmatprep.subr.mxu0 0.0
    %1897 = vmatpush2.msra.mxu0 0.0
    %1898 = vmatprep.subr.mxu0 0.0
    %1899 = vmatpush2.msra.mxu0 0.0
    %1900 = vmatprep.subr.mxu0 0.0
    %1901 = vmatpush2.msra.mxu0 0.0
    %1902 = vmatprep.subr.mxu0 0.0
    %1903 = vmatpush2.msra.mxu0 0.0
    %1904 = vmatprep.subr.mxu0 0.0
    %1905 = vmatpush2.msra.mxu0 0.0
    %1906 = vmatprep.subr.mxu0 0.0
    %1907 = vmatpush2.msra.mxu0 0.0
    %1908 = vmatprep.subr.mxu0 0.0
    %1909 = vmatpush2.msra.mxu0 0.0
    %1910 = vmatprep.subr.mxu0 0.0
    %1911 = vmatpush2.msra.mxu0 0.0
    %1912 = vmatprep.subr.mxu0 0.0
    %1913 = vmatpush2.msra.mxu0 0.0
    %1914 = vmatprep.subr.mxu0 0.0
    %1915 = vmatpush2.msra.mxu0 0.0
    %1916 = vmatprep.subr.mxu0 0.0
    %1917 = vmatpush2.msra.mxu0 0.0
    %1918 = vmatprep.subr.mxu0 0.0
    %1919 = vmatpush2.msra.mxu0 0.0
    %1920 = vmatprep.mubr.f32.mxu0 0.0
    %1921 = vmatmul.mubr.f32.gmra.mxu0 %v1774
    %v1922 = vpop.f32.mrf.mxu0
    %v1923 = vadd.f32 %v1769, %v1922
    %v1924 = vpop.f32.mrf.mxu0
    %1925 = vmatprep.mubr.f32.mxu0 0.0
    %1926 = vmatmul.mubr.f32.gmra.mxu0 %v1777
    %v1927 = vpop.f32.mrf.mxu0
    %v1928 = vadd.f32 %v1769, %v1927
    %v1929 = vpop.f32.mrf.mxu0
    %1930 = vdwg.mxu0
    %1931 = vmatprep.subr.mxu0 0.0
    %1932 = vmatpush1.xpose.msra.mxu0 0.0
    %1933 = vmatprep.subr.mxu0 0.0
    %1934 = vmatpush1.xpose.msra.mxu0 0.0
    %1935 = vmatprep.subr.mxu0 0.0
    %1936 = vmatpush1.xpose.msra.mxu0 0.0
    %1937 = vmatprep.subr.mxu0 0.0
    %1938 = vmatpush1.xpose.msra.mxu0 0.0
    %1939 = vmatprep.subr.mxu0 0.0
    %1940 = vmatpush1.xpose.msra.mxu0 0.0
    %1941 = vmatprep.subr.mxu0 0.0
    %1942 = vmatpush1.xpose.msra.mxu0 0.0
    %1943 = vmatprep.subr.mxu0 0.0
    %1944 = vmatpush1.xpose.msra.mxu0 0.0
    %1945 = vmatprep.subr.mxu0 0.0
    %1946 = vmatpush1.xpose.msra.mxu0 0.0
    %1947 = vmatprep.subr.mxu0 0.0
    %1948 = vmatpush1.xpose.msra.mxu0 0.0
    %1949 = vmatprep.subr.mxu0 0.0
    %1950 = vmatpush1.xpose.msra.mxu0 0.0
    %1951 = vmatprep.subr.mxu0 0.0
    %1952 = vmatpush1.xpose.msra.mxu0 0.0
    %1953 = vmatprep.subr.mxu0 0.0
    %1954 = vmatpush1.xpose.msra.mxu0 0.0
    %1955 = vmatprep.subr.mxu0 0.0
    %1956 = vmatpush1.xpose.msra.mxu0 0.0
    %1957 = vmatprep.subr.mxu0 0.0
    %1958 = vmatpush1.xpose.msra.mxu0 0.0
    %1959 = vmatprep.subr.mxu0 %v1854
    %1960 = vmatpush1.xpose.msra.mxu0 %v1852
    %1961 = vmatprep.subr.mxu0 %v1848
    %1962 = vmatpush1.xpose.msra.mxu0 %v1846
    %1963 = vmatprep.subr.mxu0 0.0
    %1964 = vmatpush2.xpose.msra.mxu0 0.0
    %1965 = vmatprep.subr.mxu0 0.0
    %1966 = vmatpush2.xpose.msra.mxu0 0.0
    %1967 = vmatprep.subr.mxu0 0.0
    %1968 = vmatpush2.xpose.msra.mxu0 0.0
    %1969 = vmatprep.subr.mxu0 0.0
    %1970 = vmatpush2.xpose.msra.mxu0 0.0
    %1971 = vmatprep.subr.mxu0 0.0
    %1972 = vmatpush2.xpose.msra.mxu0 0.0
    %1973 = vmatprep.subr.mxu0 0.0
    %1974 = vmatpush2.xpose.msra.mxu0 0.0
    %1975 = vmatprep.subr.mxu0 0.0
    %1976 = vmatpush2.xpose.msra.mxu0 0.0
    %1977 = vmatprep.subr.mxu0 0.0
    %1978 = vmatpush2.xpose.msra.mxu0 0.0
    %1979 = vmatprep.subr.mxu0 0.0
    %1980 = vmatpush2.xpose.msra.mxu0 0.0
    %1981 = vmatprep.subr.mxu0 0.0
    %1982 = vmatpush2.xpose.msra.mxu0 0.0
    %1983 = vmatprep.subr.mxu0 0.0
    %1984 = vmatpush2.xpose.msra.mxu0 0.0
    %1985 = vmatprep.subr.mxu0 0.0
    %1986 = vmatpush2.xpose.msra.mxu0 0.0
    %1987 = vmatprep.subr.mxu0 0.0
    %1988 = vmatpush2.xpose.msra.mxu0 0.0
    %1989 = vmatprep.subr.mxu0 0.0
    %1990 = vmatpush2.xpose.msra.mxu0 0.0
    %1991 = vmatprep.subr.mxu0 0.0
    %1992 = vmatpush2.xpose.msra.mxu0 0.0
    %1993 = vmatprep.subr.mxu0 0.0
    %1994 = vmatpush2.xpose.msra.mxu0 0.0
    %1995 = vmatprep.mubr.f32.mxu0 %v1848
    %1996 = vmatmul.mubr.f32.gmra.mxu0 %v1846
    %v1997 = vpop.f32.mrf.mxu0
    %v1998 = vadd.f32 0.0, %v1997
    %v1999 = vpop.f32.mrf.mxu0
    %2000 = vmatprep.mubr.f32.mxu0 %v1854
    %2001 = vmatmul.mubr.f32.gmra.mxu0 %v1852
    %v2002 = vpop.f32.mrf.mxu0
    %v2003 = vadd.f32 0.0, %v2002
    %v2004 = vpop.f32.mrf.mxu0
    %2005 = vdwg.mxu0
    %v2006 = vxor.u32 %v1998, 2147483648
    %v2007 = vxor.u32 %v2003, 2147483648
    %v2008 = vmul.f32 %v2006, 1.442695
    %v2009 = vpow.pop %v2008
    %v2010 = vmul.f32 %v2007, 1.442695
    %v2011 = vpow.pop %v2010
    %v2012 = vadd.f32 %v2009, 1.0
    %v2013 = vadd.f32 %v2011, 1.0
    %v2014 = vrcp.pop %v2012
    %v2015 = vmul.f32 1.0, %v2014
    %v2016 = vrcp.pop %v2013
    %v2017 = vmul.f32 1.0, %v2016
    %v2018 = vmul.f32 %v2015, %v1702
    %v2019 = vmul.f32 %v2017, %v1703
    %v2020 = vadd.f32 %v2018, %v1704
    %v2021 = vadd.f32 %v2019, %v1705
    %vm2022 = vcmask 130048
    %v2023 = vsel %vm2022, %v2020, 0.0
    %2024 = vadd.xlane.f32.xlu0 %v2023
    %v2025 = vpop.xlane.xlu0 %2024
    %v2026 = vsel %vm2022, %v2021, 0.0
    %2027 = vadd.xlane.f32.xlu0 %v2026
    %v2028 = vpop.xlane.xlu0 %2027
    %v2029 = vrsqrt.pop %v2025
    %v2030 = vrsqrt.pop %v2028
    %v2031 = vmul.f32 %v2029, %v1923
    %v2032 = vmul.f32 %v2030, %v1928
    %v2034 = vsel %vm2022, %v2020, 0
    %v2037 = vsel %vm2022, %v2021, 0
    %2039 = vmatprep.subr.mxu0 0.0
    %2040 = vmatpush1.msra.mxu0 0.0
    %2041 = vmatprep.subr.mxu0 0.0
    %2042 = vmatpush1.msra.mxu0 0.0
    %2043 = vmatprep.subr.mxu0 0.0
    %2044 = vmatpush1.msra.mxu0 0.0
    %2045 = vmatprep.subr.mxu0 0.0
    %2046 = vmatpush1.msra.mxu0 0.0
    %2047 = vmatprep.subr.mxu0 0.0
    %2048 = vmatpush1.msra.mxu0 0.0
    %2049 = vmatprep.subr.mxu0 0.0
    %2050 = vmatpush1.msra.mxu0 0.0
    %2051 = vmatprep.subr.mxu0 0.0
    %2052 = vmatpush1.msra.mxu0 0.0
    %2053 = vmatprep.subr.mxu0 0.0
    %2054 = vmatpush1.msra.mxu0 0.0
    %2055 = vmatprep.subr.mxu0 0.0
    %2056 = vmatpush1.msra.mxu0 0.0
    %2057 = vmatprep.subr.mxu0 0.0
    %2058 = vmatpush1.msra.mxu0 0.0
    %2059 = vmatprep.subr.mxu0 0.0
    %2060 = vmatpush1.msra.mxu0 0.0
    %2061 = vmatprep.subr.mxu0 0.0
    %2062 = vmatpush1.msra.mxu0 0.0
    %2063 = vmatprep.subr.mxu0 0.0
    %2064 = vmatpush1.msra.mxu0 0.0
    %2065 = vmatprep.subr.mxu0 0.0
    %2066 = vmatpush1.msra.mxu0 0.0
    %2067 = vmatprep.subr.mxu0 0.0
    %2068 = vmatpush1.msra.mxu0 %v2032
    %2069 = vmatprep.subr.mxu0 0.0
    %2070 = vmatpush1.msra.mxu0 %v2031
    %2071 = vmatprep.subr.mxu0 0.0
    %2072 = vmatpush2.msra.mxu0 0.0
    %2073 = vmatprep.subr.mxu0 0.0
    %2074 = vmatpush2.msra.mxu0 0.0
    %2075 = vmatprep.subr.mxu0 0.0
    %2076 = vmatpush2.msra.mxu0 0.0
    %2077 = vmatprep.subr.mxu0 0.0
    %2078 = vmatpush2.msra.mxu0 0.0
    %2079 = vmatprep.subr.mxu0 0.0
    %2080 = vmatpush2.msra.mxu0 0.0
    %2081 = vmatprep.subr.mxu0 0.0
    %2082 = vmatpush2.msra.mxu0 0.0
    %2083 = vmatprep.subr.mxu0 0.0
    %2084 = vmatpush2.msra.mxu0 0.0
    %2085 = vmatprep.subr.mxu0 0.0
    %2086 = vmatpush2.msra.mxu0 0.0
    %2087 = vmatprep.subr.mxu0 0.0
    %2088 = vmatpush2.msra.mxu0 0.0
    %2089 = vmatprep.subr.mxu0 0.0
    %2090 = vmatpush2.msra.mxu0 0.0
    %2091 = vmatprep.subr.mxu0 0.0
    %2092 = vmatpush2.msra.mxu0 0.0
    %2093 = vmatprep.subr.mxu0 0.0
    %2094 = vmatpush2.msra.mxu0 0.0
    %2095 = vmatprep.subr.mxu0 0.0
    %2096 = vmatpush2.msra.mxu0 0.0
    %2097 = vmatprep.subr.mxu0 0.0
    %2098 = vmatpush2.msra.mxu0 0.0
    %2099 = vmatprep.subr.mxu0 0.0
    %2100 = vmatpush2.msra.mxu0 0.0
    %2101 = vmatprep.subr.mxu0 0.0
    %2102 = vmatpush2.msra.mxu0 0.0
    %2103 = vmatprep.mubr.f32.mxu0 0.0
    %2104 = vmatmul.mubr.f32.gmra.mxu0 %v2034
    %v2105 = vpop.f32.mrf.mxu0
    %v2106 = vadd.f32 0.0, %v2105
    %v2107 = vpop.f32.mrf.mxu0
    %2108 = vmatprep.mubr.f32.mxu0 0.0
    %2109 = vmatmul.mubr.f32.gmra.mxu0 %v2037
    %v2110 = vpop.f32.mrf.mxu0
    %v2111 = vadd.f32 0.0, %v2110
    %v2112 = vpop.f32.mrf.mxu0
    %2113 = vdwg.mxu0
    %v2114 = vmul.f32 %v2029, %v2106
    %v2115 = vmul.f32 %v2030, %v2111
    %vm2116 = vcmp.gt.f32.partialorder %v2114, 0.0
    %vm2117 = vcmp.gt.f32.partialorder %v2115, 0.0
    %v2118 = vmul.f32 %v2114, 0.01
    %v2119 = vmul.f32 %v2115, 0.01
    %v2120 = vsel %vm2116, %v2114, %v2118
    %v2121 = vsel %vm2117, %v2115, %v2119
    %v2122 = vld [vmem:[%s19] sm:$0x1]
    %v2123 = vld [vmem:[%s20] sm:$0x1]
    %v2124 = vld [vmem:[%s21] sm:$0xff]
    %v2125 = vld [vmem:[%s21 + $0x8] sm:$0xff]
    %v2126 = vld [vmem:[%s21 + $0x10] sm:$0xff]
    %v2127 = vld [vmem:[%s21 + $0x18] sm:$0xff]
    %v2128 = vld [vmem:[%s21 + $0x20] sm:$0xff]
    %v2129 = vld [vmem:[%s21 + $0x28] sm:$0xff]
    %v2130 = vld [vmem:[%s21 + $0x30] sm:$0xff]
    %v2131 = vld [vmem:[%s21 + $0x38] sm:$0xff]
    %v2132 = vld [vmem:[%s21 + $0x40] sm:$0xff]
    %v2133 = vld [vmem:[%s21 + $0x48] sm:$0xff]
    %v2134 = vld [vmem:[%s21 + $0x50] sm:$0xff]
    %v2135 = vld [vmem:[%s21 + $0x58] sm:$0xff]
    %v2136 = vld [vmem:[%s21 + $0x60] sm:$0xff]
    %v2137 = vld [vmem:[%s21 + $0x68] sm:$0xff]
    %v2138 = vld [vmem:[%s21 + $0x70] sm:$0xff]
    %v2139 = vld [vmem:[%s21 + $0x78] sm:$0xff]
    %v2140 = vld [vmem:[%s21 + $0x80] sm:$0xff]
    %v2141 = vld [vmem:[%s21 + $0x88] sm:$0xff]
    %v2142 = vld [vmem:[%s21 + $0x90] sm:$0xff]
    %v2143 = vld [vmem:[%s21 + $0x98] sm:$0xff]
    %v2144 = vld [vmem:[%s21 + $0xa0] sm:$0xff]
    %v2145 = vld [vmem:[%s21 + $0xa8] sm:$0xff]
    %v2146 = vld [vmem:[%s21 + $0xb0] sm:$0xff]
    %v2147 = vld [vmem:[%s21 + $0xb8] sm:$0xff]
    %v2148 = vld [vmem:[%s21 + $0xc0] sm:$0xff]
    %v2149 = vld [vmem:[%s21 + $0xc8] sm:$0xff]
    %v2150 = vld [vmem:[%s21 + $0xd0] sm:$0xff]
    %v2151 = vld [vmem:[%s21 + $0xd8] sm:$0xff]
    %v2152 = vld [vmem:[%s21 + $0xe0] sm:$0xff]
    %v2153 = vld [vmem:[%s21 + $0xe8] sm:$0xff]
    %v2154 = vld [vmem:[%s21 + $0xf0] sm:$0xff]
    %v2155 = vld [vmem:[%s21 + $0xf8] sm:$0xff]
    %v2156 = vld [vmem:[%s21 + $0x100] sm:$0xff]
    %v2157 = vld [vmem:[%s21 + $0x108] sm:$0xff]
    %v2158 = vld [vmem:[%s21 + $0x110] sm:$0xff]
    %v2159 = vld [vmem:[%s21 + $0x118] sm:$0xff]
    %v2160 = vld [vmem:[%s21 + $0x120] sm:$0xff]
    %v2161 = vld [vmem:[%s21 + $0x128] sm:$0xff]
    %v2162 = vld [vmem:[%s21 + $0x130] sm:$0xff]
    %v2163 = vld [vmem:[%s21 + $0x138] sm:$0xff]
    %v2164 = vld [vmem:[%s21 + $0x140] sm:$0xff]
    %v2165 = vld [vmem:[%s21 + $0x148] sm:$0xff]
    %v2166 = vld [vmem:[%s21 + $0x150] sm:$0xff]
    %v2167 = vld [vmem:[%s21 + $0x158] sm:$0xff]
    %v2168 = vld [vmem:[%s21 + $0x160] sm:$0xff]
    %v2169 = vld [vmem:[%s21 + $0x168] sm:$0xff]
    %v2170 = vld [vmem:[%s21 + $0x170] sm:$0xff]
    %v2171 = vld [vmem:[%s21 + $0x178] sm:$0xff]
    %v2172 = vld [vmem:[%s22] sm:$0x7]
    %v2173 = vadd.f32 %v2120, %v2121
    %v2174 = vrot.slane %v2173, 4
    %v2175 = vadd.f32 %v2173, %v2174
    %v2176 = vrot.slane %v2175, 2
    %v2177 = vadd.f32 %v2175, %v2176
    %v2178 = vrot.slane %v2177, 1
    %v2179 = vadd.f32 %v2177, %v2178
    %v2180 = vmul.f32 %v2179, %v1721
    %v2181 = vsub.f32 %v2120, %v2180
    %v2182 = vsub.f32 %v2121, %v2180
    %v2183 = vmul.f32 %v2181, %v2181
    %v2184 = vmul.f32 %v2182, %v2182
    %v2185 = vadd.f32 %v2183, %v2184
    %v2186 = vrot.slane %v2185, 4
    %v2187 = vadd.f32 %v2185, %v2186
    %v2188 = vrot.slane %v2187, 2
    %v2189 = vadd.f32 %v2187, %v2188
    %v2190 = vrot.slane %v2189, 1
    %v2191 = vadd.f32 %v2189, %v2190
    %v2192 = vmul.f32 %v2191, %v1721
    %v2193 = vadd.f32 %v2192, 1e-05
    %v2194 = vrsqrt.pop %v2193
    %v2195 = vmul.f32 %v2181, %v2194
    %v2196 = vmul.f32 %v2182, %v2194
    %v2198 = vlaneseq
    %v2199 = vshrl.u32 %v2198, 7
    %v2200 = vsub.s32 0, %v2199
    %v2201 = vrot.slane %v2122, %v2200
    %v2203 = vmul.f32 %v2195, %v2201
    %v2204 = vmul.f32 %v2196, %v2201
    %v2206 = vlaneseq
    %v2207 = vshrl.u32 %v2206, 7
    %v2208 = vsub.s32 0, %v2207
    %v2209 = vrot.slane %v2123, %v2208
    %v2211 = vadd.f32 %v2203, %v2209
    %v2212 = vadd.f32 %v2204, %v2209
    %v2214 = vlaneseq
    %v2215 = vshrl.u32 %v2214, 7
    %v2216 = vsub.s32 0, %v2215
    %v2217 = vrot.slane %v2172, %v2216
    %v2218 = vlaneseq
    %v2219 = vshrl.u32 %v2218, 7
    %v2220 = vsub.s32 1, %v2219
    %v2221 = vrot.slane %v2172, %v2220
    %v2222 = vlaneseq
    %v2223 = vshrl.u32 %v2222, 7
    %v2224 = vsub.s32 2, %v2223
    %v2225 = vrot.slane %v2172, %v2224
    %2229 = vmatprep.subr.mxu0 %v2170
    %2230 = vmatpush1.msra.mxu0 %v2169
    %2231 = vmatprep.subr.mxu0 %v2167
    %2232 = vmatpush1.msra.mxu0 %v2166
    %2233 = vmatprep.subr.mxu0 %v2164
    %2234 = vmatpush1.msra.mxu0 %v2163
    %2235 = vmatprep.subr.mxu0 %v2161
    %2236 = vmatpush1.msra.mxu0 %v2160
    %2237 = vmatprep.subr.mxu0 %v2158
    %2238 = vmatpush1.msra.mxu0 %v2157
    %2239 = vmatprep.subr.mxu0 %v2155
    %2240 = vmatpush1.msra.mxu0 %v2154
    %2241 = vmatprep.subr.mxu0 %v2152
    %2242 = vmatpush1.msra.mxu0 %v2151
    %2243 = vmatprep.subr.mxu0 %v2149
    %2244 = vmatpush1.msra.mxu0 %v2148
    %2245 = vmatprep.subr.mxu0 %v2146
    %2246 = vmatpush1.msra.mxu0 %v2145
    %2247 = vmatprep.subr.mxu0 %v2143
    %2248 = vmatpush1.msra.mxu0 %v2142
    %2249 = vmatprep.subr.mxu0 %v2140
    %2250 = vmatpush1.msra.mxu0 %v2139
    %2251 = vmatprep.subr.mxu0 %v2137
    %2252 = vmatpush1.msra.mxu0 %v2136
    %2253 = vmatprep.subr.mxu0 %v2134
    %2254 = vmatpush1.msra.mxu0 %v2133
    %2255 = vmatprep.subr.mxu0 %v2131
    %2256 = vmatpush1.msra.mxu0 %v2130
    %2257 = vmatprep.subr.mxu0 %v2128
    %2258 = vmatpush1.msra.mxu0 %v2127
    %2259 = vmatprep.subr.mxu0 %v2125
    %2260 = vmatpush1.msra.mxu0 %v2124
    %2261 = vmatprep.subr.mxu0 0.0
    %2262 = vmatpush2.msra.mxu0 0.0
    %2263 = vmatprep.subr.mxu0 0.0
    %2264 = vmatpush2.msra.mxu0 0.0
    %2265 = vmatprep.subr.mxu0 0.0
    %2266 = vmatpush2.msra.mxu0 0.0
    %2267 = vmatprep.subr.mxu0 0.0
    %2268 = vmatpush2.msra.mxu0 0.0
    %2269 = vmatprep.subr.mxu0 0.0
    %2270 = vmatpush2.msra.mxu0 0.0
    %2271 = vmatprep.subr.mxu0 0.0
    %2272 = vmatpush2.msra.mxu0 0.0
    %2273 = vmatprep.subr.mxu0 0.0
    %2274 = vmatpush2.msra.mxu0 0.0
    %2275 = vmatprep.subr.mxu0 0.0
    %2276 = vmatpush2.msra.mxu0 0.0
    %2277 = vmatprep.subr.mxu0 0.0
    %2278 = vmatpush2.msra.mxu0 0.0
    %2279 = vmatprep.subr.mxu0 0.0
    %2280 = vmatpush2.msra.mxu0 0.0
    %2281 = vmatprep.subr.mxu0 0.0
    %2282 = vmatpush2.msra.mxu0 0.0
    %2283 = vmatprep.subr.mxu0 0.0
    %2284 = vmatpush2.msra.mxu0 0.0
    %2285 = vmatprep.subr.mxu0 0.0
    %2286 = vmatpush2.msra.mxu0 0.0
    %2287 = vmatprep.subr.mxu0 0.0
    %2288 = vmatpush2.msra.mxu0 0.0
    %2289 = vmatprep.subr.mxu0 0.0
    %2290 = vmatpush2.msra.mxu0 0.0
    %2291 = vmatprep.subr.mxu0 0.0
    %2292 = vmatpush2.msra.mxu0 0.0
    %2293 = vmatprep.mubr.f32.mxu0 0.0
    %2294 = vmatmul.mubr.f32.gmra.mxu0 %v2211
    %v2295 = vpop.f32.mrf.mxu0
    %v2296 = vadd.f32 %v2217, %v2295
    %v2297 = vpop.f32.mrf.mxu0
    %v2298 = vadd.f32 %v2221, %v2297
    %2299 = vmatprep.mubr.f32.mxu0 0.0
    %2300 = vmatmul.mubr.f32.gmra.mxu0 %v2212
    %v2301 = vpop.f32.mrf.mxu0
    %v2302 = vadd.f32 %v2217, %v2301
    %v2303 = vpop.f32.mrf.mxu0
    %v2304 = vadd.f32 %v2221, %v2303
    %2305 = vdwg.mxu0
    %2306 = vmatprep.subr.mxu0 0.0
    %2307 = vmatpush1.msra.mxu0 %v2171
    %2308 = vmatprep.subr.mxu0 0.0
    %2309 = vmatpush1.msra.mxu0 %v2168
    %2310 = vmatprep.subr.mxu0 0.0
    %2311 = vmatpush1.msra.mxu0 %v2165
    %2312 = vmatprep.subr.mxu0 0.0
    %2313 = vmatpush1.msra.mxu0 %v2162
    %2314 = vmatprep.subr.mxu0 0.0
    %2315 = vmatpush1.msra.mxu0 %v2159
    %2316 = vmatprep.subr.mxu0 0.0
    %2317 = vmatpush1.msra.mxu0 %v2156
    %2318 = vmatprep.subr.mxu0 0.0
    %2319 = vmatpush1.msra.mxu0 %v2153
    %2320 = vmatprep.subr.mxu0 0.0
    %2321 = vmatpush1.msra.mxu0 %v2150
    %2322 = vmatprep.subr.mxu0 0.0
    %2323 = vmatpush1.msra.mxu0 %v2147
    %2324 = vmatprep.subr.mxu0 0.0
    %2325 = vmatpush1.msra.mxu0 %v2144
    %2326 = vmatprep.subr.mxu0 0.0
    %2327 = vmatpush1.msra.mxu0 %v2141
    %2328 = vmatprep.subr.mxu0 0.0
    %2329 = vmatpush1.msra.mxu0 %v2138
    %2330 = vmatprep.subr.mxu0 0.0
    %2331 = vmatpush1.msra.mxu0 %v2135
    %2332 = vmatprep.subr.mxu0 0.0
    %2333 = vmatpush1.msra.mxu0 %v2132
    %2334 = vmatprep.subr.mxu0 0.0
    %2335 = vmatpush1.msra.mxu0 %v2129
    %2336 = vmatprep.subr.mxu0 0.0
    %2337 = vmatpush1.msra.mxu0 %v2126
    %2338 = vmatprep.subr.mxu0 0.0
    %2339 = vmatpush2.msra.mxu0 0.0
    %2340 = vmatprep.subr.mxu0 0.0
    %2341 = vmatpush2.msra.mxu0 0.0
    %2342 = vmatprep.subr.mxu0 0.0
    %2343 = vmatpush2.msra.mxu0 0.0
    %2344 = vmatprep.subr.mxu0 0.0
    %2345 = vmatpush2.msra.mxu0 0.0
    %2346 = vmatprep.subr.mxu0 0.0
    %2347 = vmatpush2.msra.mxu0 0.0
    %2348 = vmatprep.subr.mxu0 0.0
    %2349 = vmatpush2.msra.mxu0 0.0
    %2350 = vmatprep.subr.mxu0 0.0
    %2351 = vmatpush2.msra.mxu0 0.0
    %2352 = vmatprep.subr.mxu0 0.0
    %2353 = vmatpush2.msra.mxu0 0.0
    %2354 = vmatprep.subr.mxu0 0.0
    %2355 = vmatpush2.msra.mxu0 0.0
    %2356 = vmatprep.subr.mxu0 0.0
    %2357 = vmatpush2.msra.mxu0 0.0
    %2358 = vmatprep.subr.mxu0 0.0
    %2359 = vmatpush2.msra.mxu0 0.0
    %2360 = vmatprep.subr.mxu0 0.0
    %2361 = vmatpush2.msra.mxu0 0.0
    %2362 = vmatprep.subr.mxu0 0.0
    %2363 = vmatpush2.msra.mxu0 0.0
    %2364 = vmatprep.subr.mxu0 0.0
    %2365 = vmatpush2.msra.mxu0 0.0
    %2366 = vmatprep.subr.mxu0 0.0
    %2367 = vmatpush2.msra.mxu0 0.0
    %2368 = vmatprep.subr.mxu0 0.0
    %2369 = vmatpush2.msra.mxu0 0.0
    %2370 = vmatprep.mubr.f32.mxu0 0.0
    %2371 = vmatmul.mubr.f32.gmra.mxu0 %v2211
    %v2372 = vpop.f32.mrf.mxu0
    %v2373 = vadd.f32 %v2225, %v2372
    %v2374 = vpop.f32.mrf.mxu0
    %2375 = vmatprep.mubr.f32.mxu0 0.0
    %2376 = vmatmul.mubr.f32.gmra.mxu0 %v2212
    %v2377 = vpop.f32.mrf.mxu0
    %v2378 = vadd.f32 %v2225, %v2377
    %v2379 = vpop.f32.mrf.mxu0
    %2380 = vdwg.mxu0
    %2381 = vmatprep.subr.mxu0 0.0
    %2382 = vmatpush1.xpose.msra.mxu0 0.0
    %2383 = vmatprep.subr.mxu0 0.0
    %2384 = vmatpush1.xpose.msra.mxu0 0.0
    %2385 = vmatprep.subr.mxu0 0.0
    %2386 = vmatpush1.xpose.msra.mxu0 0.0
    %2387 = vmatprep.subr.mxu0 0.0
    %2388 = vmatpush1.xpose.msra.mxu0 0.0
    %2389 = vmatprep.subr.mxu0 0.0
    %2390 = vmatpush1.xpose.msra.mxu0 0.0
    %2391 = vmatprep.subr.mxu0 0.0
    %2392 = vmatpush1.xpose.msra.mxu0 0.0
    %2393 = vmatprep.subr.mxu0 0.0
    %2394 = vmatpush1.xpose.msra.mxu0 0.0
    %2395 = vmatprep.subr.mxu0 0.0
    %2396 = vmatpush1.xpose.msra.mxu0 0.0
    %2397 = vmatprep.subr.mxu0 0.0
    %2398 = vmatpush1.xpose.msra.mxu0 0.0
    %2399 = vmatprep.subr.mxu0 0.0
    %2400 = vmatpush1.xpose.msra.mxu0 0.0
    %2401 = vmatprep.subr.mxu0 0.0
    %2402 = vmatpush1.xpose.msra.mxu0 0.0
    %2403 = vmatprep.subr.mxu0 0.0
    %2404 = vmatpush1.xpose.msra.mxu0 0.0
    %2405 = vmatprep.subr.mxu0 0.0
    %2406 = vmatpush1.xpose.msra.mxu0 0.0
    %2407 = vmatprep.subr.mxu0 0.0
    %2408 = vmatpush1.xpose.msra.mxu0 0.0
    %2409 = vmatprep.subr.mxu0 %v2304
    %2410 = vmatpush1.xpose.msra.mxu0 %v2302
    %2411 = vmatprep.subr.mxu0 %v2298
    %2412 = vmatpush1.xpose.msra.mxu0 %v2296
    %2413 = vmatprep.subr.mxu0 0.0
    %2414 = vmatpush2.xpose.msra.mxu0 0.0
    %2415 = vmatprep.subr.mxu0 0.0
    %2416 = vmatpush2.xpose.msra.mxu0 0.0
    %2417 = vmatprep.subr.mxu0 0.0
    %2418 = vmatpush2.xpose.msra.mxu0 0.0
    %2419 = vmatprep.subr.mxu0 0.0
    %2420 = vmatpush2.xpose.msra.mxu0 0.0
    %2421 = vmatprep.subr.mxu0 0.0
    %2422 = vmatpush2.xpose.msra.mxu0 0.0
    %2423 = vmatprep.subr.mxu0 0.0
    %2424 = vmatpush2.xpose.msra.mxu0 0.0
    %2425 = vmatprep.subr.mxu0 0.0
    %2426 = vmatpush2.xpose.msra.mxu0 0.0
    %2427 = vmatprep.subr.mxu0 0.0
    %2428 = vmatpush2.xpose.msra.mxu0 0.0
    %2429 = vmatprep.subr.mxu0 0.0
    %2430 = vmatpush2.xpose.msra.mxu0 0.0
    %2431 = vmatprep.subr.mxu0 0.0
    %2432 = vmatpush2.xpose.msra.mxu0 0.0
    %2433 = vmatprep.subr.mxu0 0.0
    %2434 = vmatpush2.xpose.msra.mxu0 0.0
    %2435 = vmatprep.subr.mxu0 0.0
    %2436 = vmatpush2.xpose.msra.mxu0 0.0
    %2437 = vmatprep.subr.mxu0 0.0
    %2438 = vmatpush2.xpose.msra.mxu0 0.0
    %2439 = vmatprep.subr.mxu0 0.0
    %2440 = vmatpush2.xpose.msra.mxu0 0.0
    %2441 = vmatprep.subr.mxu0 0.0
    %2442 = vmatpush2.xpose.msra.mxu0 0.0
    %2443 = vmatprep.subr.mxu0 0.0
    %2444 = vmatpush2.xpose.msra.mxu0 0.0
    %2445 = vmatprep.mubr.f32.mxu0 %v2298
    %2446 = vmatmul.mubr.f32.gmra.mxu0 %v2296
    %v2447 = vpop.f32.mrf.mxu0
    %v2448 = vadd.f32 0.0, %v2447
    %v2449 = vpop.f32.mrf.mxu0
    %2450 = vmatprep.mubr.f32.mxu0 %v2304
    %2451 = vmatmul.mubr.f32.gmra.mxu0 %v2302
    %v2452 = vpop.f32.mrf.mxu0
    %v2453 = vadd.f32 0.0, %v2452
    %v2454 = vpop.f32.mrf.mxu0
    %2455 = vdwg.mxu0
    %v2456 = vxor.u32 %v2448, 2147483648
    %v2457 = vxor.u32 %v2453, 2147483648
    %v2458 = vmul.f32 %v2456, 1.442695
    %v2459 = vpow.pop %v2458
    %v2460 = vmul.f32 %v2457, 1.442695
    %v2461 = vpow.pop %v2460
    %v2462 = vadd.f32 %v2459, 1.0
    %v2463 = vadd.f32 %v2461, 1.0
    %v2464 = vrcp.pop %v2462
    %v2465 = vmul.f32 1.0, %v2464
    %v2466 = vrcp.pop %v2463
    %v2467 = vmul.f32 1.0, %v2466
    %v2468 = vmul.f32 %v2465, %v1702
    %v2469 = vmul.f32 %v2467, %v1703
    %v2470 = vadd.f32 %v2468, %v1704
    %v2471 = vadd.f32 %v2469, %v1705
    %v2472 = vsel %vm2022, %v2470, 0.0
    %2473 = vadd.xlane.f32.xlu0 %v2472
    %v2474 = vpop.xlane.xlu0 %2473
    %v2475 = vsel %vm2022, %v2471, 0.0
    %2476 = vadd.xlane.f32.xlu0 %v2475
    %v2477 = vpop.xlane.xlu0 %2476
    %v2478 = vrsqrt.pop %v2474
    %v2479 = vrsqrt.pop %v2477
    %v2480 = vmul.f32 %v2478, %v2373
    %v2481 = vmul.f32 %v2479, %v2378
    %v2483 = vsel %vm2022, %v2470, 0
    %v2486 = vsel %vm2022, %v2471, 0
    %2488 = vmatprep.subr.mxu0 0.0
    %2489 = vmatpush1.msra.mxu0 0.0
    %2490 = vmatprep.subr.mxu0 0.0
    %2491 = vmatpush1.msra.mxu0 0.0
    %2492 = vmatprep.subr.mxu0 0.0
    %2493 = vmatpush1.msra.mxu0 0.0
    %2494 = vmatprep.subr.mxu0 0.0
    %2495 = vmatpush1.msra.mxu0 0.0
    %2496 = vmatprep.subr.mxu0 0.0
    %2497 = vmatpush1.msra.mxu0 0.0
    %2498 = vmatprep.subr.mxu0 0.0
    %2499 = vmatpush1.msra.mxu0 0.0
    %2500 = vmatprep.subr.mxu0 0.0
    %2501 = vmatpush1.msra.mxu0 0.0
    %2502 = vmatprep.subr.mxu0 0.0
    %2503 = vmatpush1.msra.mxu0 0.0
    %2504 = vmatprep.subr.mxu0 0.0
    %2505 = vmatpush1.msra.mxu0 0.0
    %2506 = vmatprep.subr.mxu0 0.0
    %2507 = vmatpush1.msra.mxu0 0.0
    %2508 = vmatprep.subr.mxu0 0.0
    %2509 = vmatpush1.msra.mxu0 0.0
    %2510 = vmatprep.subr.mxu0 0.0
    %2511 = vmatpush1.msra.mxu0 0.0
    %2512 = vmatprep.subr.mxu0 0.0
    %2513 = vmatpush1.msra.mxu0 0.0
    %2514 = vmatprep.subr.mxu0 0.0
    %2515 = vmatpush1.msra.mxu0 0.0
    %2516 = vmatprep.subr.mxu0 0.0
    %2517 = vmatpush1.msra.mxu0 %v2481
    %2518 = vmatprep.subr.mxu0 0.0
    %2519 = vmatpush1.msra.mxu0 %v2480
    %2520 = vmatprep.subr.mxu0 0.0
    %2521 = vmatpush2.msra.mxu0 0.0
    %2522 = vmatprep.subr.mxu0 0.0
    %2523 = vmatpush2.msra.mxu0 0.0
    %2524 = vmatprep.subr.mxu0 0.0
    %2525 = vmatpush2.msra.mxu0 0.0
    %2526 = vmatprep.subr.mxu0 0.0
    %2527 = vmatpush2.msra.mxu0 0.0
    %2528 = vmatprep.subr.mxu0 0.0
    %2529 = vmatpush2.msra.mxu0 0.0
    %2530 = vmatprep.subr.mxu0 0.0
    %2531 = vmatpush2.msra.mxu0 0.0
    %2532 = vmatprep.subr.mxu0 0.0
    %2533 = vmatpush2.msra.mxu0 0.0
    %2534 = vmatprep.subr.mxu0 0.0
    %2535 = vmatpush2.msra.mxu0 0.0
    %2536 = vmatprep.subr.mxu0 0.0
    %2537 = vmatpush2.msra.mxu0 0.0
    %2538 = vmatprep.subr.mxu0 0.0
    %2539 = vmatpush2.msra.mxu0 0.0
    %2540 = vmatprep.subr.mxu0 0.0
    %2541 = vmatpush2.msra.mxu0 0.0
    %2542 = vmatprep.subr.mxu0 0.0
    %2543 = vmatpush2.msra.mxu0 0.0
    %2544 = vmatprep.subr.mxu0 0.0
    %2545 = vmatpush2.msra.mxu0 0.0
    %2546 = vmatprep.subr.mxu0 0.0
    %2547 = vmatpush2.msra.mxu0 0.0
    %2548 = vmatprep.subr.mxu0 0.0
    %2549 = vmatpush2.msra.mxu0 0.0
    %2550 = vmatprep.subr.mxu0 0.0
    %2551 = vmatpush2.msra.mxu0 0.0
    %2552 = vmatprep.mubr.f32.mxu0 0.0
    %2553 = vmatmul.mubr.f32.gmra.mxu0 %v2483
    %v2554 = vpop.f32.mrf.mxu0
    %v2555 = vadd.f32 0.0, %v2554
    %v2556 = vpop.f32.mrf.mxu0
    %2557 = vmatprep.mubr.f32.mxu0 0.0
    %2558 = vmatmul.mubr.f32.gmra.mxu0 %v2486
    %v2559 = vpop.f32.mrf.mxu0
    %v2560 = vadd.f32 0.0, %v2559
    %v2561 = vpop.f32.mrf.mxu0
    %2562 = vdwg.mxu0
    %v2563 = vmul.f32 %v2478, %v2555
    %v2564 = vmul.f32 %v2479, %v2560
    %vm2565 = vcmp.gt.f32.partialorder %v2563, 0.0
    %vm2566 = vcmp.gt.f32.partialorder %v2564, 0.0
    %v2567 = vmul.f32 %v2563, 0.01
    %v2568 = vmul.f32 %v2564, 0.01
    %v2569 = vsel %vm2565, %v2563, %v2567
    %v2570 = vsel %vm2566, %v2564, %v2568
    %v2571 = vpack.c.bf16 %v2570, %v2569
    %v2573 = vunpack.c.l.b16 %v2571
    %v2574 = vunpack.c.h.b16 %v2571
    %v2575 = vpack.c.b16 %v2573, %v2573
    %v2576 = vpack.c.b16 %v2574, %v2574
    %2579 = vst.msk [vmem:[%s24] sm:$0xf] %vm1697, %v2575
    %2580 = vst.msk [vmem:[%s24 + $0x4] sm:$0xf] %vm1697, %v2576
  $region101: #{dsr_gcn_forward.2} parent=0 // pred_fallthru
    _
  // Predicated region
  $region102: #{dsr_gcn_forward.2} parent=0 // pred_check
    _
  $region103: #{dsr_gcn_forward.2} parent=0 // pred_check_branch
    %2582 = sbr.rel (0) target = $region105
  $region104: #{dsr_gcn_forward.2} parent=0 // pred_region
    _
  $region105: #{dsr_gcn_forward.2} parent=0 // pred_fallthru
    _
  // Predicated region
  $region106: #{dsr_gcn_forward.2} parent=0 // pred_check
    _
  $region107: #{dsr_gcn_forward.2} parent=0 // pred_check_branch
    %2584 = sbr.rel (0) target = $region109
  $region108: #{dsr_gcn_forward.2} parent=0 // pred_region
    _
  $region109: #{dsr_gcn_forward.2} parent=0 // pred_fallthru
    _
  // Predicated region
  $region110: #{dsr_gcn_forward.2} parent=0 // pred_check
    _
  $region111: #{dsr_gcn_forward.2} parent=0 // pred_check_branch
    %2586 = sbr.rel (0) target = $region113
  $region112: #{dsr_gcn_forward.2} parent=0 // pred_region
    _
  $region113: #{dsr_gcn_forward.2} parent=0 // pred_fallthru
    _
  // Predicated region
  $region114: #{dsr_gcn_forward.2} parent=0 // pred_check
    _
  $region115: #{dsr_gcn_forward.2} parent=0 // pred_check_branch
    %2588 = sbr.rel (0) target = $region117
  $region116: #{dsr_gcn_forward.2} parent=0 // pred_region
    _
  $region117: #{dsr_gcn_forward.2} parent=0 // pred_fallthru
    _

</llo_original>
